<compile_context>
chip_gen: v7x
topology: tpu7x:2x2x1
jax: 0.10.0
libtpu: 0.0.40
codegen_flags: <defaults>
</compile_context>

<pallas_src>
import functools

import jax
import jax.numpy as jnp
from jax import lax
from jax.experimental import pallas as pl
from jax.experimental.pallas import tpu as pltpu


def _attention_kernel(x_ref, g_ref, wq_ref, wk_ref, wv_ref, wo_ref,
                      cos_ref, sin_ref, o_ref, *,
                      bt, n, dim, heads, dim_head, rms_eps, attn_scale,
                      q_tile, kv_tile):
    in_dtype = x_ref.dtype
    inner = heads * dim_head
    half = dim_head // 2
    rows = bt * n
    bh = bt * heads

    # ---- RMSNorm (f32 vector math; EUP reciprocal instead of a divide) ----
    x = x_ref[...].reshape(rows, dim).astype(jnp.float32)
    norm = jnp.sqrt(jnp.sum(x * x, axis=-1, keepdims=True)) * (dim ** -0.5)
    xn = (x * pl.reciprocal(jnp.maximum(norm, rms_eps))
          * g_ref[...].astype(jnp.float32)).astype(in_dtype)

    # ---- lane-dense q/k/v projections over ALL heads at once (MXU) ----
    q = jnp.dot(xn, wq_ref[...], preferred_element_type=jnp.float32)
    k = jnp.dot(xn, wk_ref[...], preferred_element_type=jnp.float32)
    v = jnp.dot(xn, wv_ref[...], preferred_element_type=jnp.float32)

    # ---- head-major (bt*heads, n, dim_head): one transpose per tensor ----
    def to_head_major(t):
        t = t.reshape(bt, n, heads, dim_head)
        return jnp.transpose(t, (0, 2, 1, 3)).reshape(bh, n, dim_head)

    q = to_head_major(q)
    k = to_head_major(k)
    v = to_head_major(v).astype(in_dtype)

    # ---- rotary embedding; cos/sin are (n, dim_head) and broadcast across
    # (bt*heads) -> no per-head slicing, no head-tiled operands ----
    cos = cos_ref[...].astype(jnp.float32)[None]        # (1, n, dh)
    sin = sin_ref[...].astype(jnp.float32)[None]

    def rope(t):
        t1 = t[..., :half]
        t2 = t[..., half:]
        rot = jnp.concatenate([-t2, t1], axis=-1)
        return t * cos + rot * sin

    # fold the attention scale into q once (not into every score tile)
    q = (rope(q) * attn_scale).astype(in_dtype)
    k = rope(k).astype(in_dtype)

    # ---- flash-style tiled causal attention (online softmax, static tiles) --
    neg_big = jnp.float32(-1e30)
    n_q = n // q_tile
    n_kv = n // kv_tile

    for qi in range(n_q):
        q_lo = qi * q_tile
        q_hi = q_lo + q_tile
        q_blk = q[:, q_lo:q_hi, :]                                  # (bh, tq, dh)
        m_i = jnp.full((bh, q_tile, 1), -jnp.inf, jnp.float32)
        l_i = jnp.zeros((bh, q_tile, 1), jnp.float32)
        acc = jnp.zeros((bh, q_tile, dim_head), jnp.float32)

        for ki in range(n_kv):
            k_lo = ki * kv_tile
            if k_lo > q_hi - 1:                 # causal block skip (static)
                continue
            k_blk = k[:, k_lo:k_lo + kv_tile, :]
            v_blk = v[:, k_lo:k_lo + kv_tile, :]
            # batched QK^T contracting last dims (no explicit transpose)
            s = jnp.einsum('bqd,bkd->bqk', q_blk, k_blk,
                           preferred_element_type=jnp.float32)
            if k_lo + kv_tile - 1 > q_lo:       # tile straddles the diagonal
                row_ids = lax.broadcasted_iota(jnp.int32,
                                               (q_tile, kv_tile), 0) + q_lo
                col_ids = lax.broadcasted_iota(jnp.int32,
                                               (q_tile, kv_tile), 1) + k_lo
                s = jnp.where((col_ids <= row_ids)[None], s, neg_big)
            m_new = jnp.maximum(m_i, jnp.max(s, axis=-1, keepdims=True))
            alpha = jnp.exp(m_i - m_new)
            p = jnp.exp(s - m_new)
            l_i = alpha * l_i + jnp.sum(p, axis=-1, keepdims=True)
            acc = alpha * acc + jnp.einsum('bqk,bkd->bqd',
                                           p.astype(in_dtype), v_blk,
                                           preferred_element_type=jnp.float32)
            m_i = m_new

        out_blk = acc * pl.reciprocal(l_i, approx=True)             # (bh, tq, dh)
        # back to (bt*tq, inner) and project this q-tile's rows directly
        out_blk = out_blk.reshape(bt, heads, q_tile, dim_head)
        out_blk = jnp.transpose(out_blk, (0, 2, 1, 3)).reshape(bt * q_tile, inner)
        o_rows = jnp.dot(out_blk.astype(in_dtype), wo_ref[...],
                         preferred_element_type=jnp.float32)
        o_ref[:, q_lo:q_hi, :] = (
            o_rows.reshape(bt, q_tile, dim).astype(o_ref.dtype))


def _largest_tile(n, cap=128):
    t = min(n, cap)
    while n % t:
        t -= 1
    return max(t, 1)


def _pick_batch_block(batch, n, dim, itemsize, target_rows=256,
                      max_block_bytes=4 * 1024 * 1024):
    """Smallest divisor of `batch` giving >= target_rows MXU rows (else all)."""
    bt = batch
    for cand in range(1, batch + 1):
        if batch % cand == 0 and cand * n >= target_rows:
            bt = cand
            break
    while bt > 1 and bt * n * dim * itemsize > max_block_bytes:
        bt -= 1
        while batch % bt:
            bt -= 1
    return bt


def attention_pallas(x, g, wq, wkv, wo, rotary_pos, *, heads, dim_head,
                     rms_eps=1e-8):
    """x: (B, N, dim); wq: (dim, H*dh); wkv: (dim, 2*H*dh); wo: (H*dh, dim)."""
    B, N, dim = x.shape
    inner = heads * dim_head
    in_dtype = x.dtype
    itemsize = jnp.dtype(in_dtype).itemsize

    wq_s = wq.astype(in_dtype)
    wk_s = wkv[:, :inner].astype(in_dtype)
    wv_s = wkv[:, inner:].astype(in_dtype)
    wo_s = wo.astype(in_dtype)
    cos = jnp.cos(rotary_pos).astype(in_dtype)          # (N, dim_head)
    sin = jnp.sin(rotary_pos).astype(in_dtype)
    g2 = g.reshape(1, dim).astype(in_dtype)

    bt = _pick_batch_block(B, N, dim, itemsize)
    tile = _largest_tile(N, 128)

    kernel = functools.partial(
        _attention_kernel, bt=bt, n=N, dim=dim, heads=heads,
        dim_head=dim_head, rms_eps=rms_eps, attn_scale=dim_head ** -0.5,
        q_tile=tile, kv_tile=tile)

    # Advisory cost estimate (causal attention ~halves the N^2 terms).
    flops = (2 * B * N * dim * 3 * inner
             + 2 * B * heads * N * N * dim_head
             + 2 * B * N * inner * dim)
    transcendentals = B * heads * N * N // 2 + 2 * B * N
    bytes_accessed = itemsize * (2 * B * N * dim + 4 * dim * inner
                                 + 2 * N * dim_head + dim)

    # Per-step VMEM working set: double-buffered x/out blocks, single-buffered
    # invariant weights, plus live f32 intermediates (xn, q/k/v slabs, one
    # (tq, tk) score tile per batched head, online-softmax state).
    bh = bt * heads
    rows = bt * N
    est_vmem = (4 * itemsize * bt * N * dim
                + itemsize * (4 * dim * inner + 2 * N * dim_head + dim)
                + 4 * (rows * dim + 6 * rows * inner
                       + 2 * bh * tile * tile + 3 * bh * tile * dim_head))
    try:
        vmem_cap = int(pltpu.get_tpu_info().vmem_capacity_bytes)
    except Exception:
        vmem_cap = 64 * 1024 * 1024            # conservative: valid on every gen
    vmem_limit = int(min(max(vmem_cap - 16 * 1024 * 1024, 16 * 1024 * 1024),
                         max(2 * est_vmem, 32 * 1024 * 1024)))

    def build(single_buffer_invariants):
        def inv_spec(shape):
            imap = lambda b: (0,) * len(shape)
            if single_buffer_invariants:
                return pl.BlockSpec(shape, imap, pipeline_mode=pl.Buffered(1))
            return pl.BlockSpec(shape, imap)

        return pl.pallas_call(
            kernel,
            out_shape=jax.ShapeDtypeStruct((B, N, dim), x.dtype),
            grid_spec=pltpu.PrefetchScalarGridSpec(
                num_scalar_prefetch=0,
                grid=(B // bt,),
                in_specs=[
                    pl.BlockSpec((bt, N, dim), lambda b: (b, 0, 0)),   # x
                    inv_spec((1, dim)),                                # g
                    inv_spec((dim, inner)),                            # Wq
                    inv_spec((dim, inner)),                            # Wk
                    inv_spec((dim, inner)),                            # Wv
                    inv_spec((inner, dim)),                            # Wo
                    inv_spec((N, dim_head)),                           # cos
                    inv_spec((N, dim_head)),                           # sin
                ],
                out_specs=pl.BlockSpec((bt, N, dim), lambda b: (b, 0, 0)),
            ),
            compiler_params=pltpu.CompilerParams(
                dimension_semantics=("parallel",),
                vmem_limit_bytes=vmem_limit),
            cost_estimate=pl.CostEstimate(flops=flops,
                                          transcendentals=transcendentals,
                                          bytes_accessed=bytes_accessed),
        )

    args = (x, g2, wq_s, wk_s, wv_s, wo_s, cos, sin)
    try:
        return build(True)(*args)
    except Exception:
        # pl.Buffered(1) path unavailable on this jax build: plain double-buffer.
        return build(False)(*args)


def attention_reference(x, g, wq, wkv, wo, rotary_pos, *, heads, dim_head,
                        rms_eps=1e-8):
    """Pure-JAX reference mirroring the PyTorch module."""
    B, N, dim = x.shape
    inner = heads * dim_head
    norm = jnp.linalg.norm(x, axis=-1, keepdims=True) * (dim ** -0.5)
    xn = x / jnp.maximum(norm, rms_eps) * g

    q = xn @ wq
    kv = xn @ wkv
    k, v = kv[..., :inner], kv[..., inner:]

    def split_heads(t):
        return t.reshape(B, N, heads, dim_head).transpose(0, 2, 1, 3)

    q, k, v = map(split_heads, (q, k, v))

    def rope(t):
        cos = jnp.cos(rotary_pos)
        sin = jnp.sin(rotary_pos)
        t1, t2 = jnp.split(t, 2, axis=-1)
        rot = jnp.concatenate([-t2, t1], axis=-1)
        return t * cos + rot * sin

    q, k = rope(q), rope(k)

    s = jnp.einsum("bhid,bhjd->bhij", q, k) * (dim_head ** -0.5)
    mask = jnp.tril(jnp.ones((N, N), dtype=bool))
    s = jnp.where(mask, s, -1e30)
    p = jax.nn.softmax(s, axis=-1)
    out = jnp.einsum("bhij,bhjd->bhid", p, v)
    out = out.transpose(0, 2, 1, 3).reshape(B, N, inner)
    return out @ wo


if __name__ == "__main__":
    B, N, dim = 2, 8, 32
    heads, dim_head = 4, 16
    inner = heads * dim_head

    key = jax.random.PRNGKey(0)
    kx, kq, kkv, ko = jax.random.split(key, 4)

    x = jax.random.normal(kx, (B, N, dim), dtype=jnp.float32)
    g = jnp.ones((dim,), dtype=jnp.float32)                       # RMSNorm gain
    wq = jax.random.normal(kq, (dim, inner), dtype=jnp.float32) * 0.05
    wkv = jax.random.normal(kkv, (dim, 2 * inner), dtype=jnp.float32) * 0.05
    wo = jax.random.normal(ko, (inner, dim), dtype=jnp.float32) * 0.05

    # rotary_emb: (N, dim_head), freqs duplicated along last dim (lucidrains style)
    inv_freq = 1.0 / (10000.0 ** (jnp.arange(0, dim_head, 2, dtype=jnp.float32)
                                  / dim_head))
    t = jnp.arange(N, dtype=jnp.float32)
    freqs = jnp.einsum("i,j->ij", t, inv_freq)
    rotary_pos = jnp.concatenate([freqs, freqs], axis=-1)         # (N, dim_head)

    out = attention_pallas(x, g, wq, wkv, wo, rotary_pos,
                           heads=heads, dim_head=dim_head)
    out = jax.block_until_ready(out)

    ref = attention_reference(x, g, wq, wkv, wo, rotary_pos,
                              heads=heads, dim_head=dim_head)
    assert out.shape == (B, N, dim)
    assert jnp.allclose(out, ref, atol=2e-3, rtol=2e-3), (
        float(jnp.max(jnp.abs(out - ref))))

    print("KERNEL_OK")
</pallas_src>

<mosaic_0001>
module attributes {stable_mosaic.version = 11 : i64} {
  func.func @_attention_kernel(%arg0: i32, %arg1: memref<2x8x32xf32, #tpu.memory_space<vmem>>, %arg2: memref<1x32xf32, #tpu.memory_space<vmem>>, %arg3: memref<32x64xf32, #tpu.memory_space<vmem>>, %arg4: memref<32x64xf32, #tpu.memory_space<vmem>>, %arg5: memref<32x64xf32, #tpu.memory_space<vmem>>, %arg6: memref<64x32xf32, #tpu.memory_space<vmem>>, %arg7: memref<8x16xf32, #tpu.memory_space<vmem>>, %arg8: memref<8x16xf32, #tpu.memory_space<vmem>>, %arg9: memref<2x8x32xf32, #tpu.memory_space<vmem>>) attributes {dimension_semantics = [#tpu.dimension_semantics<parallel>], iteration_bounds = array<i64: 1>, scalar_prefetch = 0 : i64, scratch_operands = 0 : i64, tpu.core_type = #tpu.core_type<tc>, window_params = [{transform_indices = @transform_0, window_bounds = array<i64: 2, 8, 32>}, {pipeline_mode = #tpu.pipeline_mode<synchronous>, transform_indices = @transform_1, window_bounds = array<i64: 1, 32>}, {pipeline_mode = #tpu.pipeline_mode<synchronous>, transform_indices = @transform_2, window_bounds = array<i64: 32, 64>}, {pipeline_mode = #tpu.pipeline_mode<synchronous>, transform_indices = @transform_3, window_bounds = array<i64: 32, 64>}, {pipeline_mode = #tpu.pipeline_mode<synchronous>, transform_indices = @transform_4, window_bounds = array<i64: 32, 64>}, {pipeline_mode = #tpu.pipeline_mode<synchronous>, transform_indices = @transform_5, window_bounds = array<i64: 64, 32>}, {pipeline_mode = #tpu.pipeline_mode<synchronous>, transform_indices = @transform_6, window_bounds = array<i64: 8, 16>}, {pipeline_mode = #tpu.pipeline_mode<synchronous>, transform_indices = @transform_7, window_bounds = array<i64: 8, 16>}, {transform_indices = @transform_8, window_bounds = array<i64: 2, 8, 32>}]} {
    %c0 = arith.constant 0 : index
    %c0_0 = arith.constant 0 : index
    %c0_1 = arith.constant 0 : index
    %0 = vector.load %arg1[%c0, %c0_0, %c0_1] : memref<2x8x32xf32, #tpu.memory_space<vmem>>, vector<2x8x32xf32>
    %1 = vector.shape_cast %0 : vector<2x8x32xf32> to vector<16x32xf32>
    %2 = arith.mulf %1, %1 : vector<16x32xf32>
    %cst = arith.constant dense<0.000000e+00> : vector<16xf32>
    %3 = vector.multi_reduction <add>, %2, %cst [1] : vector<16x32xf32> to vector<16xf32>
    %4 = vector.shape_cast %3 : vector<16xf32> to vector<16x1xf32>
    %5 = math.sqrt %4 : vector<16x1xf32>
    %cst_2 = arith.constant 0.176776692 : f32
    %6 = vector.broadcast %cst_2 : f32 to vector<16x1xf32>
    %7 = arith.mulf %5, %6 : vector<16x1xf32>
    %cst_3 = arith.constant 9.99999993E-9 : f32
    %8 = vector.broadcast %cst_3 : f32 to vector<16x1xf32>
    %9 = arith.maximumf %7, %8 : vector<16x1xf32>
    %10 = tpu.reciprocal %9 : vector<16x1xf32> -> vector<16x1xf32>
    %11 = vector.broadcast %10 : vector<16x1xf32> to vector<16x32xf32>
    %12 = arith.mulf %1, %11 : vector<16x32xf32>
    %c0_4 = arith.constant 0 : index
    %c0_5 = arith.constant 0 : index
    %13 = vector.load %arg2[%c0_4, %c0_5] : memref<1x32xf32, #tpu.memory_space<vmem>>, vector<1x32xf32>
    %14 = vector.broadcast %13 : vector<1x32xf32> to vector<16x32xf32>
    %15 = arith.mulf %12, %14 : vector<16x32xf32>
    %c0_6 = arith.constant 0 : index
    %c0_7 = arith.constant 0 : index
    %16 = vector.load %arg3[%c0_6, %c0_7] : memref<32x64xf32, #tpu.memory_space<vmem>>, vector<32x64xf32>
    %cst_8 = arith.constant dense<0.000000e+00> : vector<16x64xf32>
    %17 = tpu.matmul %15, %16, %cst_8 {dimension_numbers = #tpu.dot_dimension_numbers<[1], [0], [0], [1], [0, 0, 1, 1], [], []>} : vector<16x32xf32>, vector<32x64xf32>, vector<16x64xf32> -> vector<16x64xf32>
    %c0_9 = arith.constant 0 : index
    %c0_10 = arith.constant 0 : index
    %18 = vector.load %arg4[%c0_9, %c0_10] : memref<32x64xf32, #tpu.memory_space<vmem>>, vector<32x64xf32>
    %cst_11 = arith.constant dense<0.000000e+00> : vector<16x64xf32>
    %19 = tpu.matmul %15, %18, %cst_11 {dimension_numbers = #tpu.dot_dimension_numbers<[1], [0], [0], [1], [0, 0, 1, 1], [], []>} : vector<16x32xf32>, vector<32x64xf32>, vector<16x64xf32> -> vector<16x64xf32>
    %c0_12 = arith.constant 0 : index
    %c0_13 = arith.constant 0 : index
    %20 = vector.load %arg5[%c0_12, %c0_13] : memref<32x64xf32, #tpu.memory_space<vmem>>, vector<32x64xf32>
    %cst_14 = arith.constant dense<0.000000e+00> : vector<16x64xf32>
    %21 = tpu.matmul %15, %20, %cst_14 {dimension_numbers = #tpu.dot_dimension_numbers<[1], [0], [0], [1], [0, 0, 1, 1], [], []>} : vector<16x32xf32>, vector<32x64xf32>, vector<16x64xf32> -> vector<16x64xf32>
    %22 = vector.shape_cast %17 : vector<16x64xf32> to vector<2x8x4x16xf32>
    %23 = tpu.transpose %22, [0, 2, 1, 3] : vector<2x8x4x16xf32> -> vector<2x4x8x16xf32>
    %24 = vector.shape_cast %23 : vector<2x4x8x16xf32> to vector<8x8x16xf32>
    %25 = vector.shape_cast %19 : vector<16x64xf32> to vector<2x8x4x16xf32>
    %26 = tpu.transpose %25, [0, 2, 1, 3] : vector<2x8x4x16xf32> -> vector<2x4x8x16xf32>
    %27 = vector.shape_cast %26 : vector<2x4x8x16xf32> to vector<8x8x16xf32>
    %28 = vector.shape_cast %21 : vector<16x64xf32> to vector<2x8x4x16xf32>
    %29 = tpu.transpose %28, [0, 2, 1, 3] : vector<2x8x4x16xf32> -> vector<2x4x8x16xf32>
    %30 = vector.shape_cast %29 : vector<2x4x8x16xf32> to vector<8x8x16xf32>
    %c0_15 = arith.constant 0 : index
    %c0_16 = arith.constant 0 : index
    %31 = vector.load %arg7[%c0_15, %c0_16] : memref<8x16xf32, #tpu.memory_space<vmem>>, vector<8x16xf32>
    %32 = vector.shape_cast %31 : vector<8x16xf32> to vector<1x8x16xf32>
    %c0_17 = arith.constant 0 : index
    %c0_18 = arith.constant 0 : index
    %33 = vector.load %arg8[%c0_17, %c0_18] : memref<8x16xf32, #tpu.memory_space<vmem>>, vector<8x16xf32>
    %34 = vector.shape_cast %33 : vector<8x16xf32> to vector<1x8x16xf32>
    %35 = vector.extract_strided_slice %24 {offsets = [0, 0, 0], sizes = [8, 8, 8], strides = [1, 1, 1]} : vector<8x8x16xf32> to vector<8x8x8xf32>
    %36 = vector.extract_strided_slice %24 {offsets = [0, 0, 8], sizes = [8, 8, 8], strides = [1, 1, 1]} : vector<8x8x16xf32> to vector<8x8x8xf32>
    %cst_19 = arith.constant 0.000000e+00 : f32
    %37 = vector.broadcast %cst_19 : f32 to vector<8x8x8xf32>
    %38 = arith.subf %37, %36 : vector<8x8x8xf32>
    %39 = tpu.concatenate %38, %35 in 2 : vector<8x8x8xf32>, vector<8x8x8xf32> -> vector<8x8x16xf32>
    %40 = vector.broadcast %32 : vector<1x8x16xf32> to vector<8x8x16xf32>
    %41 = arith.mulf %24, %40 : vector<8x8x16xf32>
    %42 = vector.broadcast %34 : vector<1x8x16xf32> to vector<8x8x16xf32>
    %43 = arith.mulf %39, %42 : vector<8x8x16xf32>
    %44 = arith.addf %41, %43 : vector<8x8x16xf32>
    %cst_20 = arith.constant 2.500000e-01 : f32
    %45 = vector.broadcast %cst_20 : f32 to vector<8x8x16xf32>
    %46 = arith.mulf %44, %45 : vector<8x8x16xf32>
    %47 = vector.extract_strided_slice %27 {offsets = [0, 0, 0], sizes = [8, 8, 8], strides = [1, 1, 1]} : vector<8x8x16xf32> to vector<8x8x8xf32>
    %48 = vector.extract_strided_slice %27 {offsets = [0, 0, 8], sizes = [8, 8, 8], strides = [1, 1, 1]} : vector<8x8x16xf32> to vector<8x8x8xf32>
    %cst_21 = arith.constant 0.000000e+00 : f32
    %49 = vector.broadcast %cst_21 : f32 to vector<8x8x8xf32>
    %50 = arith.subf %49, %48 : vector<8x8x8xf32>
    %51 = tpu.concatenate %50, %47 in 2 : vector<8x8x8xf32>, vector<8x8x8xf32> -> vector<8x8x16xf32>
    %52 = vector.broadcast %32 : vector<1x8x16xf32> to vector<8x8x16xf32>
    %53 = arith.mulf %27, %52 : vector<8x8x16xf32>
    %54 = vector.broadcast %34 : vector<1x8x16xf32> to vector<8x8x16xf32>
    %55 = arith.mulf %51, %54 : vector<8x8x16xf32>
    %56 = arith.addf %53, %55 : vector<8x8x16xf32>
    %cst_22 = arith.constant 0xFF800000 : f32
    %57 = vector.broadcast %cst_22 : f32 to vector<8x8x1xf32>
    %cst_23 = arith.constant 0.000000e+00 : f32
    %58 = vector.broadcast %cst_23 : f32 to vector<8x8x1xf32>
    %cst_24 = arith.constant 0.000000e+00 : f32
    %59 = vector.broadcast %cst_24 : f32 to vector<8x8x16xf32>
    "tpu.trace_start"() <{level = 10 : i32, message = "bqd,bkd->bqk"}> : () -> ()
    %cst_25 = arith.constant dense<0.000000e+00> : vector<8x8x8xf32>
    %60 = tpu.matmul %46, %56, %cst_25 {dimension_numbers = #tpu.dot_dimension_numbers<[2], [2], [1], [1], [0, 0, 0, 1, 1, 1], [0], [0]>} : vector<8x8x16xf32>, vector<8x8x16xf32>, vector<8x8x8xf32> -> vector<8x8x8xf32>
    "tpu.trace_stop"() : () -> ()
    %61 = tpu.iota {dimensions = array<i32: 0>} : vector<8x8xi32>
    %c0_i32 = arith.constant 0 : i32
    %62 = vector.broadcast %c0_i32 : i32 to vector<8x8xi32>
    %63 = arith.addi %61, %62 : vector<8x8xi32>
    %64 = tpu.iota {dimensions = array<i32: 1>} : vector<8x8xi32>
    %c0_i32_26 = arith.constant 0 : i32
    %65 = vector.broadcast %c0_i32_26 : i32 to vector<8x8xi32>
    %66 = arith.addi %64, %65 : vector<8x8xi32>
    %67 = arith.cmpi sle, %66, %63 : vector<8x8xi32>
    %68 = vector.shape_cast %67 : vector<8x8xi1> to vector<1x8x8xi1>
    %cst_27 = arith.constant -1.000000e+30 : f32
    %69 = vector.shape_cast %68 : vector<1x8x8xi1> to vector<1x8x8xi1>
    %70 = vector.broadcast %69 : vector<1x8x8xi1> to vector<8x8x8xi1>
    %71 = vector.broadcast %cst_27 : f32 to vector<8x8x8xf32>
    %72 = arith.select %70, %60, %71 : vector<8x8x8xi1>, vector<8x8x8xf32>
    %cst_28 = arith.constant dense<0xFF800000> : vector<8x8xf32>
    %73 = vector.multi_reduction <maximumf>, %72, %cst_28 [2] : vector<8x8x8xf32> to vector<8x8xf32>
    %74 = vector.shape_cast %73 : vector<8x8xf32> to vector<8x8x1xf32>
    %75 = arith.maximumf %57, %74 : vector<8x8x1xf32>
    %76 = arith.subf %57, %75 : vector<8x8x1xf32>
    %77 = math.exp %76 : vector<8x8x1xf32>
    %78 = vector.broadcast %75 : vector<8x8x1xf32> to vector<8x8x8xf32>
    %79 = arith.subf %72, %78 : vector<8x8x8xf32>
    %80 = math.exp %79 : vector<8x8x8xf32>
    %81 = arith.mulf %77, %58 : vector<8x8x1xf32>
    %cst_29 = arith.constant dense<0.000000e+00> : vector<8x8xf32>
    %82 = vector.multi_reduction <add>, %80, %cst_29 [2] : vector<8x8x8xf32> to vector<8x8xf32>
    %83 = vector.shape_cast %82 : vector<8x8xf32> to vector<8x8x1xf32>
    %84 = arith.addf %81, %83 : vector<8x8x1xf32>
    %85 = vector.broadcast %77 : vector<8x8x1xf32> to vector<8x8x16xf32>
    %86 = arith.mulf %85, %59 : vector<8x8x16xf32>
    "tpu.trace_start"() <{level = 10 : i32, message = "bqk,bkd->bqd"}> : () -> ()
    %cst_30 = arith.constant dense<0.000000e+00> : vector<8x8x16xf32>
    %87 = tpu.matmul %80, %30, %cst_30 {dimension_numbers = #tpu.dot_dimension_numbers<[2], [1], [1], [2], [0, 0, 0, 1, 1, 2], [0], [0]>} : vector<8x8x8xf32>, vector<8x8x16xf32>, vector<8x8x16xf32> -> vector<8x8x16xf32>
    "tpu.trace_stop"() : () -> ()
    %88 = arith.addf %86, %87 : vector<8x8x16xf32>
    %89 = tpu.reciprocal %84 {approx = true} : vector<8x8x1xf32> -> vector<8x8x1xf32>
    %90 = vector.broadcast %89 : vector<8x8x1xf32> to vector<8x8x16xf32>
    %91 = arith.mulf %88, %90 : vector<8x8x16xf32>
    %92 = vector.shape_cast %91 : vector<8x8x16xf32> to vector<2x4x8x16xf32>
    %93 = tpu.transpose %92, [0, 2, 1, 3] : vector<2x4x8x16xf32> -> vector<2x8x4x16xf32>
    %94 = vector.shape_cast %93 : vector<2x8x4x16xf32> to vector<16x64xf32>
    %c0_31 = arith.constant 0 : index
    %c0_32 = arith.constant 0 : index
    %95 = vector.load %arg6[%c0_31, %c0_32] : memref<64x32xf32, #tpu.memory_space<vmem>>, vector<64x32xf32>
    %cst_33 = arith.constant dense<0.000000e+00> : vector<16x32xf32>
    %96 = tpu.matmul %94, %95, %cst_33 {dimension_numbers = #tpu.dot_dimension_numbers<[1], [0], [0], [1], [0, 0, 1, 1], [], []>} : vector<16x64xf32>, vector<64x32xf32>, vector<16x32xf32> -> vector<16x32xf32>
    %97 = vector.shape_cast %96 : vector<16x32xf32> to vector<2x8x32xf32>
    %c0_34 = arith.constant 0 : index
    %c0_35 = arith.constant 0 : index
    %c0_36 = arith.constant 0 : index
    %98 = vector.load %arg9[%c0_34, %c0_35, %c0_36] : memref<2x8x32xf32, #tpu.memory_space<vmem>>, vector<2x8x32xf32>
    tpu.vector_store %arg9[%c0_34, %c0_35, %c0_36], %97 {strides = array<i32>} : memref<2x8x32xf32, #tpu.memory_space<vmem>>, vector<2x8x32xf32>,
    return
  }
  func.func @transform_0(%arg0: i32) -> (i32, i32, i32) {
    %c0_i32 = arith.constant 0 : i32
    %c0_i32_0 = arith.constant 0 : i32
    %c0_i32_1 = arith.constant 0 : i32
    return %arg0, %c0_i32, %c0_i32_0 : i32, i32, i32
  }
  func.func @transform_1(%arg0: i32) -> (i32, i32) {
    %c0_i32 = arith.constant 0 : i32
    %c0_i32_0 = arith.constant 0 : i32
    %c0_i32_1 = arith.constant 0 : i32
    return %c0_i32, %c0_i32_0 : i32, i32
  }
  func.func @transform_2(%arg0: i32) -> (i32, i32) {
    %c0_i32 = arith.constant 0 : i32
    %c0_i32_0 = arith.constant 0 : i32
    %c0_i32_1 = arith.constant 0 : i32
    return %c0_i32, %c0_i32_0 : i32, i32
  }
  func.func @transform_3(%arg0: i32) -> (i32, i32) {
    %c0_i32 = arith.constant 0 : i32
    %c0_i32_0 = arith.constant 0 : i32
    %c0_i32_1 = arith.constant 0 : i32
    return %c0_i32, %c0_i32_0 : i32, i32
  }
  func.func @transform_4(%arg0: i32) -> (i32, i32) {
    %c0_i32 = arith.constant 0 : i32
    %c0_i32_0 = arith.constant 0 : i32
    %c0_i32_1 = arith.constant 0 : i32
    return %c0_i32, %c0_i32_0 : i32, i32
  }
  func.func @transform_5(%arg0: i32) -> (i32, i32) {
    %c0_i32 = arith.constant 0 : i32
    %c0_i32_0 = arith.constant 0 : i32
    %c0_i32_1 = arith.constant 0 : i32
    return %c0_i32, %c0_i32_0 : i32, i32
  }
  func.func @transform_6(%arg0: i32) -> (i32, i32) {
    %c0_i32 = arith.constant 0 : i32
    %c0_i32_0 = arith.constant 0 : i32
    %c0_i32_1 = arith.constant 0 : i32
    return %c0_i32, %c0_i32_0 : i32, i32
  }
  func.func @transform_7(%arg0: i32) -> (i32, i32) {
    %c0_i32 = arith.constant 0 : i32
    %c0_i32_0 = arith.constant 0 : i32
    %c0_i32_1 = arith.constant 0 : i32
    return %c0_i32, %c0_i32_0 : i32, i32
  }
  func.func @transform_8(%arg0: i32) -> (i32, i32, i32) {
    %c0_i32 = arith.constant 0 : i32
    %c0_i32_0 = arith.constant 0 : i32
    %c0_i32_1 = arith.constant 0 : i32
    return %arg0, %c0_i32, %c0_i32_0 : i32, i32, i32
  }
}

module attributes {stable_mosaic.version = 11 : i64} {
  func.func @_attention_kernel(%arg0: i32, %arg1: memref<2x8x32xf32, #tpu.memory_space<vmem>>, %arg2: memref<1x32xf32, #tpu.memory_space<vmem>>, %arg3: memref<32x64xf32, #tpu.memory_space<vmem>>, %arg4: memref<32x64xf32, #tpu.memory_space<vmem>>, %arg5: memref<32x64xf32, #tpu.memory_space<vmem>>, %arg6: memref<64x32xf32, #tpu.memory_space<vmem>>, %arg7: memref<8x16xf32, #tpu.memory_space<vmem>>, %arg8: memref<8x16xf32, #tpu.memory_space<vmem>>, %arg9: memref<2x8x32xf32, #tpu.memory_space<vmem>>) attributes {dimension_semantics = [#tpu.dimension_semantics<parallel>], iteration_bounds = array<i64: 1>, scalar_prefetch = 0 : i64, scratch_operands = 0 : i64, tpu.core_type = #tpu.core_type<tc>, window_params = [{transform_indices = @transform_0, window_bounds = array<i64: 2, 8, 32>}, {pipeline_mode = #tpu.pipeline_mode<synchronous>, transform_indices = @transform_1, window_bounds = array<i64: 1, 32>}, {pipeline_mode = #tpu.pipeline_mode<synchronous>, transform_indices = @transform_2, window_bounds = array<i64: 32, 64>}, {pipeline_mode = #tpu.pipeline_mode<synchronous>, transform_indices = @transform_3, window_bounds = array<i64: 32, 64>}, {pipeline_mode = #tpu.pipeline_mode<synchronous>, transform_indices = @transform_4, window_bounds = array<i64: 32, 64>}, {pipeline_mode = #tpu.pipeline_mode<synchronous>, transform_indices = @transform_5, window_bounds = array<i64: 64, 32>}, {pipeline_mode = #tpu.pipeline_mode<synchronous>, transform_indices = @transform_6, window_bounds = array<i64: 8, 16>}, {pipeline_mode = #tpu.pipeline_mode<synchronous>, transform_indices = @transform_7, window_bounds = array<i64: 8, 16>}, {transform_indices = @transform_8, window_bounds = array<i64: 2, 8, 32>}]} {
    %c0 = arith.constant 0 : index
    %c0_0 = arith.constant 0 : index
    %c0_1 = arith.constant 0 : index
    %0 = vector.load %arg1[%c0, %c0_0, %c0_1] : memref<2x8x32xf32, #tpu.memory_space<vmem>>, vector<2x8x32xf32>
    %1 = vector.shape_cast %0 : vector<2x8x32xf32> to vector<16x32xf32>
    %2 = arith.mulf %1, %1 : vector<16x32xf32>
    %cst = arith.constant dense<0.000000e+00> : vector<16xf32>
    %3 = vector.multi_reduction <add>, %2, %cst [1] : vector<16x32xf32> to vector<16xf32>
    %4 = vector.shape_cast %3 : vector<16xf32> to vector<16x1xf32>
    %5 = math.sqrt %4 : vector<16x1xf32>
    %cst_2 = arith.constant 0.176776692 : f32
    %6 = vector.broadcast %cst_2 : f32 to vector<16x1xf32>
    %7 = arith.mulf %5, %6 : vector<16x1xf32>
    %cst_3 = arith.constant 9.99999993E-9 : f32
    %8 = vector.broadcast %cst_3 : f32 to vector<16x1xf32>
    %9 = arith.maximumf %7, %8 : vector<16x1xf32>
    %10 = tpu.reciprocal %9 : vector<16x1xf32> -> vector<16x1xf32>
    %11 = vector.broadcast %10 : vector<16x1xf32> to vector<16x32xf32>
    %12 = arith.mulf %1, %11 : vector<16x32xf32>
    %c0_4 = arith.constant 0 : index
    %c0_5 = arith.constant 0 : index
    %13 = vector.load %arg2[%c0_4, %c0_5] : memref<1x32xf32, #tpu.memory_space<vmem>>, vector<1x32xf32>
    %14 = vector.broadcast %13 : vector<1x32xf32> to vector<16x32xf32>
    %15 = arith.mulf %12, %14 : vector<16x32xf32>
    %c0_6 = arith.constant 0 : index
    %c0_7 = arith.constant 0 : index
    %16 = vector.load %arg3[%c0_6, %c0_7] : memref<32x64xf32, #tpu.memory_space<vmem>>, vector<32x64xf32>
    %cst_8 = arith.constant dense<0.000000e+00> : vector<16x64xf32>
    %17 = tpu.matmul %15, %16, %cst_8 {dimension_numbers = #tpu.dot_dimension_numbers<[1], [0], [0], [1], [0, 0, 1, 1], [], []>} : vector<16x32xf32>, vector<32x64xf32>, vector<16x64xf32> -> vector<16x64xf32>
    %c0_9 = arith.constant 0 : index
    %c0_10 = arith.constant 0 : index
    %18 = vector.load %arg4[%c0_9, %c0_10] : memref<32x64xf32, #tpu.memory_space<vmem>>, vector<32x64xf32>
    %cst_11 = arith.constant dense<0.000000e+00> : vector<16x64xf32>
    %19 = tpu.matmul %15, %18, %cst_11 {dimension_numbers = #tpu.dot_dimension_numbers<[1], [0], [0], [1], [0, 0, 1, 1], [], []>} : vector<16x32xf32>, vector<32x64xf32>, vector<16x64xf32> -> vector<16x64xf32>
    %c0_12 = arith.constant 0 : index
    %c0_13 = arith.constant 0 : index
    %20 = vector.load %arg5[%c0_12, %c0_13] : memref<32x64xf32, #tpu.memory_space<vmem>>, vector<32x64xf32>
    %cst_14 = arith.constant dense<0.000000e+00> : vector<16x64xf32>
    %21 = tpu.matmul %15, %20, %cst_14 {dimension_numbers = #tpu.dot_dimension_numbers<[1], [0], [0], [1], [0, 0, 1, 1], [], []>} : vector<16x32xf32>, vector<32x64xf32>, vector<16x64xf32> -> vector<16x64xf32>
    %22 = vector.shape_cast %17 : vector<16x64xf32> to vector<2x8x4x16xf32>
    %23 = tpu.transpose %22, [0, 2, 1, 3] : vector<2x8x4x16xf32> -> vector<2x4x8x16xf32>
    %24 = vector.shape_cast %23 : vector<2x4x8x16xf32> to vector<8x8x16xf32>
    %25 = vector.shape_cast %19 : vector<16x64xf32> to vector<2x8x4x16xf32>
    %26 = tpu.transpose %25, [0, 2, 1, 3] : vector<2x8x4x16xf32> -> vector<2x4x8x16xf32>
    %27 = vector.shape_cast %26 : vector<2x4x8x16xf32> to vector<8x8x16xf32>
    %28 = vector.shape_cast %21 : vector<16x64xf32> to vector<2x8x4x16xf32>
    %29 = tpu.transpose %28, [0, 2, 1, 3] : vector<2x8x4x16xf32> -> vector<2x4x8x16xf32>
    %30 = vector.shape_cast %29 : vector<2x4x8x16xf32> to vector<8x8x16xf32>
    %c0_15 = arith.constant 0 : index
    %c0_16 = arith.constant 0 : index
    %31 = vector.load %arg7[%c0_15, %c0_16] : memref<8x16xf32, #tpu.memory_space<vmem>>, vector<8x16xf32>
    %32 = vector.shape_cast %31 : vector<8x16xf32> to vector<1x8x16xf32>
    %c0_17 = arith.constant 0 : index
    %c0_18 = arith.constant 0 : index
    %33 = vector.load %arg8[%c0_17, %c0_18] : memref<8x16xf32, #tpu.memory_space<vmem>>, vector<8x16xf32>
    %34 = vector.shape_cast %33 : vector<8x16xf32> to vector<1x8x16xf32>
    %35 = vector.extract_strided_slice %24 {offsets = [0, 0, 0], sizes = [8, 8, 8], strides = [1, 1, 1]} : vector<8x8x16xf32> to vector<8x8x8xf32>
    %36 = vector.extract_strided_slice %24 {offsets = [0, 0, 8], sizes = [8, 8, 8], strides = [1, 1, 1]} : vector<8x8x16xf32> to vector<8x8x8xf32>
    %cst_19 = arith.constant 0.000000e+00 : f32
    %37 = vector.broadcast %cst_19 : f32 to vector<8x8x8xf32>
    %38 = arith.subf %37, %36 : vector<8x8x8xf32>
    %39 = tpu.concatenate %38, %35 in 2 : vector<8x8x8xf32>, vector<8x8x8xf32> -> vector<8x8x16xf32>
    %40 = vector.broadcast %32 : vector<1x8x16xf32> to vector<8x8x16xf32>
    %41 = arith.mulf %24, %40 : vector<8x8x16xf32>
    %42 = vector.broadcast %34 : vector<1x8x16xf32> to vector<8x8x16xf32>
    %43 = arith.mulf %39, %42 : vector<8x8x16xf32>
    %44 = arith.addf %41, %43 : vector<8x8x16xf32>
    %cst_20 = arith.constant 2.500000e-01 : f32
    %45 = vector.broadcast %cst_20 : f32 to vector<8x8x16xf32>
    %46 = arith.mulf %44, %45 : vector<8x8x16xf32>
    %47 = vector.extract_strided_slice %27 {offsets = [0, 0, 0], sizes = [8, 8, 8], strides = [1, 1, 1]} : vector<8x8x16xf32> to vector<8x8x8xf32>
    %48 = vector.extract_strided_slice %27 {offsets = [0, 0, 8], sizes = [8, 8, 8], strides = [1, 1, 1]} : vector<8x8x16xf32> to vector<8x8x8xf32>
    %cst_21 = arith.constant 0.000000e+00 : f32
    %49 = vector.broadcast %cst_21 : f32 to vector<8x8x8xf32>
    %50 = arith.subf %49, %48 : vector<8x8x8xf32>
    %51 = tpu.concatenate %50, %47 in 2 : vector<8x8x8xf32>, vector<8x8x8xf32> -> vector<8x8x16xf32>
    %52 = vector.broadcast %32 : vector<1x8x16xf32> to vector<8x8x16xf32>
    %53 = arith.mulf %27, %52 : vector<8x8x16xf32>
    %54 = vector.broadcast %34 : vector<1x8x16xf32> to vector<8x8x16xf32>
    %55 = arith.mulf %51, %54 : vector<8x8x16xf32>
    %56 = arith.addf %53, %55 : vector<8x8x16xf32>
    %cst_22 = arith.constant 0xFF800000 : f32
    %57 = vector.broadcast %cst_22 : f32 to vector<8x8x1xf32>
    %cst_23 = arith.constant 0.000000e+00 : f32
    %58 = vector.broadcast %cst_23 : f32 to vector<8x8x1xf32>
    %cst_24 = arith.constant 0.000000e+00 : f32
    %59 = vector.broadcast %cst_24 : f32 to vector<8x8x16xf32>
    "tpu.trace_start"() <{level = 10 : i32, message = "bqd,bkd->bqk"}> : () -> ()
    %cst_25 = arith.constant dense<0.000000e+00> : vector<8x8x8xf32>
    %60 = tpu.matmul %46, %56, %cst_25 {dimension_numbers = #tpu.dot_dimension_numbers<[2], [2], [1], [1], [0, 0, 0, 1, 1, 1], [0], [0]>} : vector<8x8x16xf32>, vector<8x8x16xf32>, vector<8x8x8xf32> -> vector<8x8x8xf32>
    "tpu.trace_stop"() : () -> ()
    %61 = tpu.iota {dimensions = array<i32: 0>} : vector<8x8xi32>
    %c0_i32 = arith.constant 0 : i32
    %62 = vector.broadcast %c0_i32 : i32 to vector<8x8xi32>
    %63 = arith.addi %61, %62 : vector<8x8xi32>
    %64 = tpu.iota {dimensions = array<i32: 1>} : vector<8x8xi32>
    %c0_i32_26 = arith.constant 0 : i32
    %65 = vector.broadcast %c0_i32_26 : i32 to vector<8x8xi32>
    %66 = arith.addi %64, %65 : vector<8x8xi32>
    %67 = arith.cmpi sle, %66, %63 : vector<8x8xi32>
    %68 = vector.shape_cast %67 : vector<8x8xi1> to vector<1x8x8xi1>
    %cst_27 = arith.constant -1.000000e+30 : f32
    %69 = vector.shape_cast %68 : vector<1x8x8xi1> to vector<1x8x8xi1>
    %70 = vector.broadcast %69 : vector<1x8x8xi1> to vector<8x8x8xi1>
    %71 = vector.broadcast %cst_27 : f32 to vector<8x8x8xf32>
    %72 = arith.select %70, %60, %71 : vector<8x8x8xi1>, vector<8x8x8xf32>
    %cst_28 = arith.constant dense<0xFF800000> : vector<8x8xf32>
    %73 = vector.multi_reduction <maximumf>, %72, %cst_28 [2] : vector<8x8x8xf32> to vector<8x8xf32>
    %74 = vector.shape_cast %73 : vector<8x8xf32> to vector<8x8x1xf32>
    %75 = arith.maximumf %57, %74 : vector<8x8x1xf32>
    %76 = arith.subf %57, %75 : vector<8x8x1xf32>
    %77 = math.exp %76 : vector<8x8x1xf32>
    %78 = vector.broadcast %75 : vector<8x8x1xf32> to vector<8x8x8xf32>
    %79 = arith.subf %72, %78 : vector<8x8x8xf32>
    %80 = math.exp %79 : vector<8x8x8xf32>
    %81 = arith.mulf %77, %58 : vector<8x8x1xf32>
    %cst_29 = arith.constant dense<0.000000e+00> : vector<8x8xf32>
    %82 = vector.multi_reduction <add>, %80, %cst_29 [2] : vector<8x8x8xf32> to vector<8x8xf32>
    %83 = vector.shape_cast %82 : vector<8x8xf32> to vector<8x8x1xf32>
    %84 = arith.addf %81, %83 : vector<8x8x1xf32>
    %85 = vector.broadcast %77 : vector<8x8x1xf32> to vector<8x8x16xf32>
    %86 = arith.mulf %85, %59 : vector<8x8x16xf32>
    "tpu.trace_start"() <{level = 10 : i32, message = "bqk,bkd->bqd"}> : () -> ()
    %cst_30 = arith.constant dense<0.000000e+00> : vector<8x8x16xf32>
    %87 = tpu.matmul %80, %30, %cst_30 {dimension_numbers = #tpu.dot_dimension_numbers<[2], [1], [1], [2], [0, 0, 0, 1, 1, 2], [0], [0]>} : vector<8x8x8xf32>, vector<8x8x16xf32>, vector<8x8x16xf32> -> vector<8x8x16xf32>
    "tpu.trace_stop"() : () -> ()
    %88 = arith.addf %86, %87 : vector<8x8x16xf32>
    %89 = tpu.reciprocal %84 {approx = true} : vector<8x8x1xf32> -> vector<8x8x1xf32>
    %90 = vector.broadcast %89 : vector<8x8x1xf32> to vector<8x8x16xf32>
    %91 = arith.mulf %88, %90 : vector<8x8x16xf32>
    %92 = vector.shape_cast %91 : vector<8x8x16xf32> to vector<2x4x8x16xf32>
    %93 = tpu.transpose %92, [0, 2, 1, 3] : vector<2x4x8x16xf32> -> vector<2x8x4x16xf32>
    %94 = vector.shape_cast %93 : vector<2x8x4x16xf32> to vector<16x64xf32>
    %c0_31 = arith.constant 0 : index
    %c0_32 = arith.constant 0 : index
    %95 = vector.load %arg6[%c0_31, %c0_32] : memref<64x32xf32, #tpu.memory_space<vmem>>, vector<64x32xf32>
    %cst_33 = arith.constant dense<0.000000e+00> : vector<16x32xf32>
    %96 = tpu.matmul %94, %95, %cst_33 {dimension_numbers = #tpu.dot_dimension_numbers<[1], [0], [0], [1], [0, 0, 1, 1], [], []>} : vector<16x64xf32>, vector<64x32xf32>, vector<16x32xf32> -> vector<16x32xf32>
    %97 = vector.shape_cast %96 : vector<16x32xf32> to vector<2x8x32xf32>
    %c0_34 = arith.constant 0 : index
    %c0_35 = arith.constant 0 : index
    %c0_36 = arith.constant 0 : index
    %98 = vector.load %arg9[%c0_34, %c0_35, %c0_36] : memref<2x8x32xf32, #tpu.memory_space<vmem>>, vector<2x8x32xf32>
    tpu.vector_store %arg9[%c0_34, %c0_35, %c0_36], %97 {strides = array<i32>} : memref<2x8x32xf32, #tpu.memory_space<vmem>>, vector<2x8x32xf32>,
    return
  }
  func.func @transform_0(%arg0: i32) -> (i32, i32, i32) {
    %c0_i32 = arith.constant 0 : i32
    %c0_i32_0 = arith.constant 0 : i32
    %c0_i32_1 = arith.constant 0 : i32
    return %arg0, %c0_i32, %c0_i32_0 : i32, i32, i32
  }
  func.func @transform_1(%arg0: i32) -> (i32, i32) {
    %c0_i32 = arith.constant 0 : i32
    %c0_i32_0 = arith.constant 0 : i32
    %c0_i32_1 = arith.constant 0 : i32
    return %c0_i32, %c0_i32_0 : i32, i32
  }
  func.func @transform_2(%arg0: i32) -> (i32, i32) {
    %c0_i32 = arith.constant 0 : i32
    %c0_i32_0 = arith.constant 0 : i32
    %c0_i32_1 = arith.constant 0 : i32
    return %c0_i32, %c0_i32_0 : i32, i32
  }
  func.func @transform_3(%arg0: i32) -> (i32, i32) {
    %c0_i32 = arith.constant 0 : i32
    %c0_i32_0 = arith.constant 0 : i32
    %c0_i32_1 = arith.constant 0 : i32
    return %c0_i32, %c0_i32_0 : i32, i32
  }
  func.func @transform_4(%arg0: i32) -> (i32, i32) {
    %c0_i32 = arith.constant 0 : i32
    %c0_i32_0 = arith.constant 0 : i32
    %c0_i32_1 = arith.constant 0 : i32
    return %c0_i32, %c0_i32_0 : i32, i32
  }
  func.func @transform_5(%arg0: i32) -> (i32, i32) {
    %c0_i32 = arith.constant 0 : i32
    %c0_i32_0 = arith.constant 0 : i32
    %c0_i32_1 = arith.constant 0 : i32
    return %c0_i32, %c0_i32_0 : i32, i32
  }
  func.func @transform_6(%arg0: i32) -> (i32, i32) {
    %c0_i32 = arith.constant 0 : i32
    %c0_i32_0 = arith.constant 0 : i32
    %c0_i32_1 = arith.constant 0 : i32
    return %c0_i32, %c0_i32_0 : i32, i32
  }
  func.func @transform_7(%arg0: i32) -> (i32, i32) {
    %c0_i32 = arith.constant 0 : i32
    %c0_i32_0 = arith.constant 0 : i32
    %c0_i32_1 = arith.constant 0 : i32
    return %c0_i32, %c0_i32_0 : i32, i32
  }
  func.func @transform_8(%arg0: i32) -> (i32, i32, i32) {
    %c0_i32 = arith.constant 0 : i32
    %c0_i32_0 = arith.constant 0 : i32
    %c0_i32_1 = arith.constant 0 : i32
    return %arg0, %c0_i32, %c0_i32_0 : i32, i32, i32
  }
}

</mosaic_0001>

<llo_original>
// kernel: tpu_custom_call.1
$region0: #{tpu_custom_call.1}
  #allocation0 [shape = 'u32[]', space=smem, size = 0x4, offset = 0x4, fixed_abs, tag = 'smem constant byte address 0x4 - core index']
  #allocation1 [shape = 'u32[144,128]{1,0:T(1,128)}', space=vmem, size = 0x12000, scoped, tag = 'internal scratch']
  %s0 = inlined_call_operand.hbm [shape: f32[2,8,32], index: 0, kind: input, shape index: {}]
  %s1 = inlined_call_operand.vmem [shape: f32[1,32], index: 1, kind: input, shape index: {}]
  %s2 = inlined_call_operand.vmem [shape: f32[32,64], index: 2, kind: input, shape index: {}]
  %s3 = inlined_call_operand.vmem [shape: f32[32,64], index: 3, kind: input, shape index: {}]
  %s4 = inlined_call_operand.vmem [shape: f32[32,64], index: 4, kind: input, shape index: {}]
  %s5 = inlined_call_operand.vmem [shape: f32[64,32], index: 5, kind: input, shape index: {}]
  %s6 = inlined_call_operand.vmem [shape: f32[8,16], index: 6, kind: input, shape index: {}]
  %s7 = inlined_call_operand.vmem [shape: f32[8,16], index: 7, kind: input, shape index: {}]
  %s8 = inlined_call_operand.hbm [shape: f32[2,8,32], index: 8, kind: output, shape index: {}]
  %s9 = sld [smem:[#allocation0]]
  $region46: #{tpu_custom_call.1} parent=0
    _
  %s11 = ssub.s32 1, %s9
  %s12 = scalar_select 0, %s11, %s9
  $region1: #{tpu_custom_call.1} parent=0
    #allocation2 [shape = 'u8[8192]{0}', space=vmem, size = 0x2000, scoped, tag = 'input window, operand 0, single buffered']
    #allocation3 [shape = 's32[1]{0}', space=sflag, size = 0x4, scoped, tag = 'scoped memory for tpu_custom_call.1']
    #allocation4 [shape = 's32[1]{0}', space=sflag, size = 0x4, scoped, tag = 'scoped memory for tpu_custom_call.1']
    #allocation5 [shape = 'u8[8192]{0}', space=vmem, size = 0x2000, scoped, tag = 'output window, operand 0, single buffered']
    %13 = vsyncpa [#allocation3], 0
    %14 = vsyncpa [#allocation4], 0
    // Predicated region
    $region2: #{tpu_custom_call.1} parent=1 // pred_check
      _
    $region3: #{tpu_custom_call.1} parent=1 // pred_check_branch
      %16 = sbr.rel (0) target = $region5
    $region4: #{tpu_custom_call.1} parent=1 // pred_region
      %s18 = ssub.s32 256, 256
      %19 = vsyncadd [#allocation3], %s18
      %s20 = sshll.u32 [#allocation2], 4
      %s21 = int_to_ptr.vmem [resolvable:$true] %s20
      %26 = dma.hbm_to_vmem [thread:$0]  %s0, 256, %s21, [#allocation3], 128, 128, 8
    $region5: #{tpu_custom_call.1} parent=1 // pred_fallthru
      _
    // Predicated region
    $region6: #{tpu_custom_call.1} parent=1 // pred_check
      _
    $region7: #{tpu_custom_call.1} parent=1 // pred_check_branch
      %28 = sbr.rel (0) target = $region9
    $region8: #{tpu_custom_call.1} parent=1 // pred_region
      _
    $region9: #{tpu_custom_call.1} parent=1 // pred_fallthru
      _
    // Predicated region
    $region10: #{tpu_custom_call.1} parent=1 // pred_check
      _
    $region11: #{tpu_custom_call.1} parent=1 // pred_check_branch
      %30 = sbr.rel (0) target = $region13
    $region12: #{tpu_custom_call.1} parent=1 // pred_region
      _
    $region13: #{tpu_custom_call.1} parent=1 // pred_fallthru
      _
    // Predicated region
    $region14: #{tpu_custom_call.1} parent=1 // pred_check
      _
    $region15: #{tpu_custom_call.1} parent=1 // pred_check_branch
      %32 = sbr.rel (0) target = $region17
    $region16: #{tpu_custom_call.1} parent=1 // pred_region
      _
    $region17: #{tpu_custom_call.1} parent=1 // pred_fallthru
      _
    // Predicated region
    $region18: #{tpu_custom_call.1} parent=1 // pred_check
      _
    $region19: #{tpu_custom_call.1} parent=1 // pred_check_branch
      %34 = sbr.rel (0) target = $region21
    $region20: #{tpu_custom_call.1} parent=1 // pred_region
      _
    $region21: #{tpu_custom_call.1} parent=1 // pred_fallthru
      _
    // Predicated region
    $region22: #{tpu_custom_call.1} parent=1 // pred_check
      _
    $region23: #{tpu_custom_call.1} parent=1 // pred_check_branch
      %36 = sbr.rel (0) target = $region25
    $region24: #{tpu_custom_call.1} parent=1 // pred_region
      _
    $region25: #{tpu_custom_call.1} parent=1 // pred_fallthru
      _
    // Predicated region
    $region26: #{tpu_custom_call.1} parent=1 // pred_check
      _
    $region27: #{tpu_custom_call.1} parent=1 // pred_check_branch
      %38 = sbr.rel (0) target = $region29
    $region28: #{tpu_custom_call.1} parent=1 // pred_region
      _
    $region29: #{tpu_custom_call.1} parent=1 // pred_fallthru
      _
    // Predicated region
    $region30: #{tpu_custom_call.1} parent=1 // pred_check
      _
    $region31: #{tpu_custom_call.1} parent=1 // pred_check_branch
      %40 = sbr.rel (0) target = $region33
    $region32: #{tpu_custom_call.1} parent=1 // pred_region
      _
    $region33: #{tpu_custom_call.1} parent=1 // pred_fallthru
      _
    // Predicated region
    $region34: #{tpu_custom_call.1} parent=1 // pred_check
      _
    $region35: #{tpu_custom_call.1} parent=1 // pred_check_branch
      %42 = sbr.rel (0) target = $region37
    $region36: #{tpu_custom_call.1} parent=1 // pred_region
      %43 = dma.done [#allocation3], 256
    $region37: #{tpu_custom_call.1} parent=1 // pred_fallthru
      _
    %v44 = vld [vmem:[#allocation2] sm:$0xff]
    %v45 = vld [vmem:[#allocation2 + $0x8] sm:$0xff]
    %v46 = vmul.f32 %v44, %v44
    %v47 = vmul.f32 %v45, %v45
    %vm48 = vcmask 261120
    %v49 = vsel %vm48, %v46, 0.0
    %50 = vadd.xlane.f32.xlu0 %v49
    %v51 = vpop.xlane.xlu0 %50
    %v52 = vsel %vm48, %v47, 0.0
    %53 = vadd.xlane.f32.xlu0 %v52
    %v54 = vpop.xlane.xlu0 %53
    %v55 = vrsqrt.pop %v51
    %v56 = vmul.f32 %v51, %v55
    %vm57 = vcmp.eq.f32.partialorder %v51, inf
    %v58 = vsel %vm57, %v51, %v56
    %vm59 = vcmp.eq.f32.partialorder %v51, 0.0
    %v60 = vand.u32 %v51, 2147483648
    %v61 = vsel %vm59, %v60, %v58
    %v62 = vrsqrt.pop %v54
    %v63 = vmul.f32 %v54, %v62
    %vm64 = vcmp.eq.f32.partialorder %v54, inf
    %v65 = vsel %vm64, %v54, %v63
    %vm66 = vcmp.eq.f32.partialorder %v54, 0.0
    %v67 = vand.u32 %v54, 2147483648
    %v68 = vsel %vm66, %v67, %v65
    %v69 = vmul.f32 %v61, 0.17677669
    %v70 = vmul.f32 %v68, 0.17677669
    %v71 = vmax.f32 %v69, 1e-08
    %v72 = vmax.f32 %v70, 1e-08
    %v73 = vrcp.pop %v71
    %v74 = vrcp.pop %v72
    %v75 = vmul.f32 %v44, %v73
    %v76 = vmul.f32 %v45, %v74
    %v77 = vld [vmem:[%s1] sm:$0x1]
    %v79 = vlaneseq
    %v80 = vshrl.u32 %v79, 7
    %v81 = vsub.s32 0, %v80
    %v82 = vrot.slane %v77, %v81
    %v84 = vmul.f32 %v75, %v82
    %v85 = vmul.f32 %v76, %v82
    %v86 = vld [vmem:[%s2] sm:$0xff]
    %v87 = vld [vmem:[%s2 + $0x8] sm:$0xff]
    %v88 = vld [vmem:[%s2 + $0x10] sm:$0xff]
    %v89 = vld [vmem:[%s2 + $0x18] sm:$0xff]
    %v91 = vsel %vm48, %v84, 0
    %v94 = vsel %vm48, %v85, 0
    %96 = vmatprep.subr.mxu0 0.0
    %97 = vmatpush1.msra.mxu0 %v86
    %98 = vmatprep.subr.mxu0 0.0
    %99 = vmatpush1.msra.mxu0 %v87
    %100 = vmatprep.subr.mxu0 0.0
    %101 = vmatpush1.msra.mxu0 %v88
    %102 = vmatprep.subr.mxu0 0.0
    %103 = vmatpush1.msra.mxu0 %v89
    %104 = vmatprep.subr.mxu0 0.0
    %105 = vmatpush1.msra.mxu0 0.0
    %106 = vmatprep.subr.mxu0 0.0
    %107 = vmatpush1.msra.mxu0 0.0
    %108 = vmatprep.subr.mxu0 0.0
    %109 = vmatpush1.msra.mxu0 0.0
    %110 = vmatprep.subr.mxu0 0.0
    %111 = vmatpush1.msra.mxu0 0.0
    %112 = vmatprep.subr.mxu0 0.0
    %113 = vmatpush1.msra.mxu0 0.0
    %114 = vmatprep.subr.mxu0 0.0
    %115 = vmatpush1.msra.mxu0 0.0
    %116 = vmatprep.subr.mxu0 0.0
    %117 = vmatpush1.msra.mxu0 0.0
    %118 = vmatprep.subr.mxu0 0.0
    %119 = vmatpush1.msra.mxu0 0.0
    %120 = vmatprep.subr.mxu0 0.0
    %121 = vmatpush1.msra.mxu0 0.0
    %122 = vmatprep.subr.mxu0 0.0
    %123 = vmatpush1.msra.mxu0 0.0
    %124 = vmatprep.subr.mxu0 0.0
    %125 = vmatpush1.msra.mxu0 0.0
    %126 = vmatprep.subr.mxu0 0.0
    %127 = vmatpush1.msra.mxu0 0.0
    %128 = vmatprep.subr.mxu0 0.0
    %129 = vmatpush1.msra.mxu0 0.0
    %130 = vmatprep.subr.mxu0 0.0
    %131 = vmatpush1.msra.mxu0 0.0
    %132 = vmatprep.subr.mxu0 0.0
    %133 = vmatpush1.msra.mxu0 0.0
    %134 = vmatprep.subr.mxu0 0.0
    %135 = vmatpush1.msra.mxu0 0.0
    %136 = vmatprep.subr.mxu0 0.0
    %137 = vmatpush1.msra.mxu0 0.0
    %138 = vmatprep.subr.mxu0 0.0
    %139 = vmatpush1.msra.mxu0 0.0
    %140 = vmatprep.subr.mxu0 0.0
    %141 = vmatpush1.msra.mxu0 0.0
    %142 = vmatprep.subr.mxu0 0.0
    %143 = vmatpush1.msra.mxu0 0.0
    %144 = vmatprep.subr.mxu0 0.0
    %145 = vmatpush1.msra.mxu0 0.0
    %146 = vmatprep.subr.mxu0 0.0
    %147 = vmatpush1.msra.mxu0 0.0
    %148 = vmatprep.subr.mxu0 0.0
    %149 = vmatpush1.msra.mxu0 0.0
    %150 = vmatprep.subr.mxu0 0.0
    %151 = vmatpush1.msra.mxu0 0.0
    %152 = vmatprep.subr.mxu0 0.0
    %153 = vmatpush1.msra.mxu0 0.0
    %154 = vmatprep.subr.mxu0 0.0
    %155 = vmatpush1.msra.mxu0 0.0
    %156 = vmatprep.subr.mxu0 0.0
    %157 = vmatpush1.msra.mxu0 0.0
    %158 = vmatprep.subr.mxu0 0.0
    %159 = vmatpush1.msra.mxu0 0.0
    %160 = vmatprep.mubr.f32.mxu0 0.0
    %161 = vmatmul.mubr.f32.gmra.mrb[0].mxu0 %v91
    %v162 = vpop.f32.mrb[0].mxu0
    %v163 = vadd.f32 0.0, %v162
    %v164 = vpop.f32.mrb[0].mxu0
    %165 = vmatprep.mubr.f32.mxu0 0.0
    %166 = vmatmul.mubr.f32.gmra.mrb[0].mxu0 %v94
    %v167 = vpop.f32.mrb[0].mxu0
    %v168 = vadd.f32 0.0, %v167
    %v169 = vpop.f32.mrb[0].mxu0
    %170 = vdwg.mxu0
    %v171 = vld [vmem:[%s3] sm:$0xff]
    %v172 = vld [vmem:[%s3 + $0x8] sm:$0xff]
    %v173 = vld [vmem:[%s3 + $0x10] sm:$0xff]
    %v174 = vld [vmem:[%s3 + $0x18] sm:$0xff]
    %175 = vmatprep.subr.mxu0 0.0
    %176 = vmatpush1.msra.mxu0 %v171
    %177 = vmatprep.subr.mxu0 0.0
    %178 = vmatpush1.msra.mxu0 %v172
    %179 = vmatprep.subr.mxu0 0.0
    %180 = vmatpush1.msra.mxu0 %v173
    %181 = vmatprep.subr.mxu0 0.0
    %182 = vmatpush1.msra.mxu0 %v174
    %183 = vmatprep.subr.mxu0 0.0
    %184 = vmatpush1.msra.mxu0 0.0
    %185 = vmatprep.subr.mxu0 0.0
    %186 = vmatpush1.msra.mxu0 0.0
    %187 = vmatprep.subr.mxu0 0.0
    %188 = vmatpush1.msra.mxu0 0.0
    %189 = vmatprep.subr.mxu0 0.0
    %190 = vmatpush1.msra.mxu0 0.0
    %191 = vmatprep.subr.mxu0 0.0
    %192 = vmatpush1.msra.mxu0 0.0
    %193 = vmatprep.subr.mxu0 0.0
    %194 = vmatpush1.msra.mxu0 0.0
    %195 = vmatprep.subr.mxu0 0.0
    %196 = vmatpush1.msra.mxu0 0.0
    %197 = vmatprep.subr.mxu0 0.0
    %198 = vmatpush1.msra.mxu0 0.0
    %199 = vmatprep.subr.mxu0 0.0
    %200 = vmatpush1.msra.mxu0 0.0
    %201 = vmatprep.subr.mxu0 0.0
    %202 = vmatpush1.msra.mxu0 0.0
    %203 = vmatprep.subr.mxu0 0.0
    %204 = vmatpush1.msra.mxu0 0.0
    %205 = vmatprep.subr.mxu0 0.0
    %206 = vmatpush1.msra.mxu0 0.0
    %207 = vmatprep.subr.mxu0 0.0
    %208 = vmatpush1.msra.mxu0 0.0
    %209 = vmatprep.subr.mxu0 0.0
    %210 = vmatpush1.msra.mxu0 0.0
    %211 = vmatprep.subr.mxu0 0.0
    %212 = vmatpush1.msra.mxu0 0.0
    %213 = vmatprep.subr.mxu0 0.0
    %214 = vmatpush1.msra.mxu0 0.0
    %215 = vmatprep.subr.mxu0 0.0
    %216 = vmatpush1.msra.mxu0 0.0
    %217 = vmatprep.subr.mxu0 0.0
    %218 = vmatpush1.msra.mxu0 0.0
    %219 = vmatprep.subr.mxu0 0.0
    %220 = vmatpush1.msra.mxu0 0.0
    %221 = vmatprep.subr.mxu0 0.0
    %222 = vmatpush1.msra.mxu0 0.0
    %223 = vmatprep.subr.mxu0 0.0
    %224 = vmatpush1.msra.mxu0 0.0
    %225 = vmatprep.subr.mxu0 0.0
    %226 = vmatpush1.msra.mxu0 0.0
    %227 = vmatprep.subr.mxu0 0.0
    %228 = vmatpush1.msra.mxu0 0.0
    %229 = vmatprep.subr.mxu0 0.0
    %230 = vmatpush1.msra.mxu0 0.0
    %231 = vmatprep.subr.mxu0 0.0
    %232 = vmatpush1.msra.mxu0 0.0
    %233 = vmatprep.subr.mxu0 0.0
    %234 = vmatpush1.msra.mxu0 0.0
    %235 = vmatprep.subr.mxu0 0.0
    %236 = vmatpush1.msra.mxu0 0.0
    %237 = vmatprep.subr.mxu0 0.0
    %238 = vmatpush1.msra.mxu0 0.0
    %239 = vmatprep.mubr.f32.mxu0 0.0
    %240 = vmatmul.mubr.f32.gmra.mrb[0].mxu0 %v91
    %v241 = vpop.f32.mrb[0].mxu0
    %v242 = vadd.f32 0.0, %v241
    %v243 = vpop.f32.mrb[0].mxu0
    %244 = vmatprep.mubr.f32.mxu0 0.0
    %245 = vmatmul.mubr.f32.gmra.mrb[0].mxu0 %v94
    %v246 = vpop.f32.mrb[0].mxu0
    %v247 = vadd.f32 0.0, %v246
    %v248 = vpop.f32.mrb[0].mxu0
    %249 = vdwg.mxu0
    %v250 = vld [vmem:[%s4] sm:$0xff]
    %v251 = vld [vmem:[%s4 + $0x8] sm:$0xff]
    %v252 = vld [vmem:[%s4 + $0x10] sm:$0xff]
    %v253 = vld [vmem:[%s4 + $0x18] sm:$0xff]
    %254 = vmatprep.subr.mxu0 0.0
    %255 = vmatpush1.msra.mxu0 %v250
    %256 = vmatprep.subr.mxu0 0.0
    %257 = vmatpush1.msra.mxu0 %v251
    %258 = vmatprep.subr.mxu0 0.0
    %259 = vmatpush1.msra.mxu0 %v252
    %260 = vmatprep.subr.mxu0 0.0
    %261 = vmatpush1.msra.mxu0 %v253
    %262 = vmatprep.subr.mxu0 0.0
    %263 = vmatpush1.msra.mxu0 0.0
    %264 = vmatprep.subr.mxu0 0.0
    %265 = vmatpush1.msra.mxu0 0.0
    %266 = vmatprep.subr.mxu0 0.0
    %267 = vmatpush1.msra.mxu0 0.0
    %268 = vmatprep.subr.mxu0 0.0
    %269 = vmatpush1.msra.mxu0 0.0
    %270 = vmatprep.subr.mxu0 0.0
    %271 = vmatpush1.msra.mxu0 0.0
    %272 = vmatprep.subr.mxu0 0.0
    %273 = vmatpush1.msra.mxu0 0.0
    %274 = vmatprep.subr.mxu0 0.0
    %275 = vmatpush1.msra.mxu0 0.0
    %276 = vmatprep.subr.mxu0 0.0
    %277 = vmatpush1.msra.mxu0 0.0
    %278 = vmatprep.subr.mxu0 0.0
    %279 = vmatpush1.msra.mxu0 0.0
    %280 = vmatprep.subr.mxu0 0.0
    %281 = vmatpush1.msra.mxu0 0.0
    %282 = vmatprep.subr.mxu0 0.0
    %283 = vmatpush1.msra.mxu0 0.0
    %284 = vmatprep.subr.mxu0 0.0
    %285 = vmatpush1.msra.mxu0 0.0
    %286 = vmatprep.subr.mxu0 0.0
    %287 = vmatpush1.msra.mxu0 0.0
    %288 = vmatprep.subr.mxu0 0.0
    %289 = vmatpush1.msra.mxu0 0.0
    %290 = vmatprep.subr.mxu0 0.0
    %291 = vmatpush1.msra.mxu0 0.0
    %292 = vmatprep.subr.mxu0 0.0
    %293 = vmatpush1.msra.mxu0 0.0
    %294 = vmatprep.subr.mxu0 0.0
    %295 = vmatpush1.msra.mxu0 0.0
    %296 = vmatprep.subr.mxu0 0.0
    %297 = vmatpush1.msra.mxu0 0.0
    %298 = vmatprep.subr.mxu0 0.0
    %299 = vmatpush1.msra.mxu0 0.0
    %300 = vmatprep.subr.mxu0 0.0
    %301 = vmatpush1.msra.mxu0 0.0
    %302 = vmatprep.subr.mxu0 0.0
    %303 = vmatpush1.msra.mxu0 0.0
    %304 = vmatprep.subr.mxu0 0.0
    %305 = vmatpush1.msra.mxu0 0.0
    %306 = vmatprep.subr.mxu0 0.0
    %307 = vmatpush1.msra.mxu0 0.0
    %308 = vmatprep.subr.mxu0 0.0
    %309 = vmatpush1.msra.mxu0 0.0
    %310 = vmatprep.subr.mxu0 0.0
    %311 = vmatpush1.msra.mxu0 0.0
    %312 = vmatprep.subr.mxu0 0.0
    %313 = vmatpush1.msra.mxu0 0.0
    %314 = vmatprep.subr.mxu0 0.0
    %315 = vmatpush1.msra.mxu0 0.0
    %316 = vmatprep.subr.mxu0 0.0
    %317 = vmatpush1.msra.mxu0 0.0
    %318 = vmatprep.mubr.f32.mxu0 0.0
    %319 = vmatmul.mubr.f32.gmra.mrb[0].mxu0 %v91
    %v320 = vpop.f32.mrb[0].mxu0
    %v321 = vadd.f32 0.0, %v320
    %v322 = vpop.f32.mrb[0].mxu0
    %323 = vmatprep.mubr.f32.mxu0 0.0
    %324 = vmatmul.mubr.f32.gmra.mrb[0].mxu0 %v94
    %v325 = vpop.f32.mrb[0].mxu0
    %v326 = vadd.f32 0.0, %v325
    %v327 = vpop.f32.mrb[0].mxu0
    %328 = vdwg.mxu0
    %331 = vrot.lane.b32.xlu0 %v163, 112
    %v332 = vpop.permute.xlu0 %331
    %333 = vrot.lane.b32.xlu0 %v168, 112
    %v334 = vpop.permute.xlu0 %333
    %337 = vrot.lane.b32.xlu0 %v163, 96
    %v338 = vpop.permute.xlu0 %337
    %339 = vrot.lane.b32.xlu0 %v168, 96
    %v340 = vpop.permute.xlu0 %339
    %343 = vrot.lane.b32.xlu0 %v163, 80
    %v344 = vpop.permute.xlu0 %343
    %345 = vrot.lane.b32.xlu0 %v168, 80
    %v346 = vpop.permute.xlu0 %345
    %v349 = vcombine.low %v163, %v338
    %v350 = vcombine.high %v163, %v338
    %v352 = vunpack.c.l.s4 1983009808
    %v353 = vunpack.c.0.s8 %v352
    %v354 = vlaneseq
    %v355 = vshrl.u32 %v354, 7
    %v356 = vsub.s32 %v353, %v355
    %v357 = vrot.slane %v349, %v356
    %v359 = vunpack.c.l.s4 1983009808
    %v360 = vunpack.c.0.s8 %v359
    %v361 = vlaneseq
    %v362 = vshrl.u32 %v361, 7
    %v363 = vsub.s32 %v360, %v362
    %v364 = vrot.slane %v350, %v363
    %v365 = vcombine.low %v332, %v344
    %v366 = vcombine.high %v332, %v344
    %v368 = vunpack.c.l.s4 1983009808
    %v369 = vunpack.c.0.s8 %v368
    %v370 = vlaneseq
    %v371 = vshrl.u32 %v370, 7
    %v372 = vsub.s32 %v369, %v371
    %v373 = vrot.slane %v365, %v372
    %v375 = vunpack.c.l.s4 1983009808
    %v376 = vunpack.c.0.s8 %v375
    %v377 = vlaneseq
    %v378 = vshrl.u32 %v377, 7
    %v379 = vsub.s32 %v376, %v378
    %v380 = vrot.slane %v366, %v379
    %v381 = vcombine.low %v357, %v373
    %v382 = vcombine.high %v357, %v373
    %v384 = vunpack.c.l.s4 1934713408
    %v385 = vunpack.c.0.s8 %v384
    %v386 = vlaneseq
    %v387 = vshrl.u32 %v386, 7
    %v388 = vsub.s32 %v385, %v387
    %v389 = vrot.slane %v381, %v388
    %v391 = vunpack.c.l.s4 1934713408
    %v392 = vunpack.c.0.s8 %v391
    %v393 = vlaneseq
    %v394 = vshrl.u32 %v393, 7
    %v395 = vsub.s32 %v392, %v394
    %v396 = vrot.slane %v382, %v395
    %v397 = vcombine.low %v364, %v380
    %v398 = vcombine.high %v364, %v380
    %v400 = vunpack.c.l.s4 1934713408
    %v401 = vunpack.c.0.s8 %v400
    %v402 = vlaneseq
    %v403 = vshrl.u32 %v402, 7
    %v404 = vsub.s32 %v401, %v403
    %v405 = vrot.slane %v397, %v404
    %v407 = vunpack.c.l.s4 1934713408
    %v408 = vunpack.c.0.s8 %v407
    %v409 = vlaneseq
    %v410 = vshrl.u32 %v409, 7
    %v411 = vsub.s32 %v408, %v410
    %v412 = vrot.slane %v398, %v411
    %v413 = vcombine.high %v389, 0.0
    %v414 = vcombine.high %v396, 0.0
    %v415 = vcombine.high %v405, 0.0
    %v416 = vcombine.high %v412, 0.0
    %v417 = vcombine.low %v168, %v340
    %v418 = vcombine.high %v168, %v340
    %v420 = vunpack.c.l.s4 1983009808
    %v421 = vunpack.c.0.s8 %v420
    %v422 = vlaneseq
    %v423 = vshrl.u32 %v422, 7
    %v424 = vsub.s32 %v421, %v423
    %v425 = vrot.slane %v417, %v424
    %v427 = vunpack.c.l.s4 1983009808
    %v428 = vunpack.c.0.s8 %v427
    %v429 = vlaneseq
    %v430 = vshrl.u32 %v429, 7
    %v431 = vsub.s32 %v428, %v430
    %v432 = vrot.slane %v418, %v431
    %v433 = vcombine.low %v334, %v346
    %v434 = vcombine.high %v334, %v346
    %v436 = vunpack.c.l.s4 1983009808
    %v437 = vunpack.c.0.s8 %v436
    %v438 = vlaneseq
    %v439 = vshrl.u32 %v438, 7
    %v440 = vsub.s32 %v437, %v439
    %v441 = vrot.slane %v433, %v440
    %v443 = vunpack.c.l.s4 1983009808
    %v444 = vunpack.c.0.s8 %v443
    %v445 = vlaneseq
    %v446 = vshrl.u32 %v445, 7
    %v447 = vsub.s32 %v444, %v446
    %v448 = vrot.slane %v434, %v447
    %v449 = vcombine.low %v425, %v441
    %v450 = vcombine.high %v425, %v441
    %v452 = vunpack.c.l.s4 1934713408
    %v453 = vunpack.c.0.s8 %v452
    %v454 = vlaneseq
    %v455 = vshrl.u32 %v454, 7
    %v456 = vsub.s32 %v453, %v455
    %v457 = vrot.slane %v449, %v456
    %v459 = vunpack.c.l.s4 1934713408
    %v460 = vunpack.c.0.s8 %v459
    %v461 = vlaneseq
    %v462 = vshrl.u32 %v461, 7
    %v463 = vsub.s32 %v460, %v462
    %v464 = vrot.slane %v450, %v463
    %v465 = vcombine.low %v432, %v448
    %v466 = vcombine.high %v432, %v448
    %v468 = vunpack.c.l.s4 1934713408
    %v469 = vunpack.c.0.s8 %v468
    %v470 = vlaneseq
    %v471 = vshrl.u32 %v470, 7
    %v472 = vsub.s32 %v469, %v471
    %v473 = vrot.slane %v465, %v472
    %v475 = vunpack.c.l.s4 1934713408
    %v476 = vunpack.c.0.s8 %v475
    %v477 = vlaneseq
    %v478 = vshrl.u32 %v477, 7
    %v479 = vsub.s32 %v476, %v478
    %v480 = vrot.slane %v466, %v479
    %v481 = vcombine.high %v457, 0.0
    %v482 = vcombine.high %v464, 0.0
    %v483 = vcombine.high %v473, 0.0
    %v484 = vcombine.high %v480, 0.0
    %v485 = vcombine.low %v389, %v396
    %v487 = vunpack.c.l.s4 1983009808
    %v488 = vunpack.c.0.s8 %v487
    %v489 = vlaneseq
    %v490 = vshrl.u32 %v489, 7
    %v491 = vsub.s32 %v488, %v490
    %v492 = vrot.slane %v485, %v491
    %v493 = vcombine.low %v413, %v414
    %v495 = vunpack.c.l.s4 1983009808
    %v496 = vunpack.c.0.s8 %v495
    %v497 = vlaneseq
    %v498 = vshrl.u32 %v497, 7
    %v499 = vsub.s32 %v496, %v498
    %v500 = vrot.slane %v493, %v499
    %v501 = vcombine.low %v405, %v412
    %v503 = vunpack.c.l.s4 1983009808
    %v504 = vunpack.c.0.s8 %v503
    %v505 = vlaneseq
    %v506 = vshrl.u32 %v505, 7
    %v507 = vsub.s32 %v504, %v506
    %v508 = vrot.slane %v501, %v507
    %v509 = vcombine.low %v415, %v416
    %v511 = vunpack.c.l.s4 1983009808
    %v512 = vunpack.c.0.s8 %v511
    %v513 = vlaneseq
    %v514 = vshrl.u32 %v513, 7
    %v515 = vsub.s32 %v512, %v514
    %v516 = vrot.slane %v509, %v515
    %v517 = vcombine.low %v492, %v500
    %v518 = vcombine.high %v492, %v500
    %v520 = vunpack.c.l.s4 1934713408
    %v521 = vunpack.c.0.s8 %v520
    %v522 = vlaneseq
    %v523 = vshrl.u32 %v522, 7
    %v524 = vsub.s32 %v521, %v523
    %v525 = vrot.slane %v517, %v524
    %v527 = vunpack.c.l.s4 1934713408
    %v528 = vunpack.c.0.s8 %v527
    %v529 = vlaneseq
    %v530 = vshrl.u32 %v529, 7
    %v531 = vsub.s32 %v528, %v530
    %v532 = vrot.slane %v518, %v531
    %v533 = vcombine.low %v508, %v516
    %v534 = vcombine.high %v508, %v516
    %v536 = vunpack.c.l.s4 1934713408
    %v537 = vunpack.c.0.s8 %v536
    %v538 = vlaneseq
    %v539 = vshrl.u32 %v538, 7
    %v540 = vsub.s32 %v537, %v539
    %v541 = vrot.slane %v533, %v540
    %v543 = vunpack.c.l.s4 1934713408
    %v544 = vunpack.c.0.s8 %v543
    %v545 = vlaneseq
    %v546 = vshrl.u32 %v545, 7
    %v547 = vsub.s32 %v544, %v546
    %v548 = vrot.slane %v534, %v547
    %v549 = vcombine.low %v525, %v541
    %v550 = vcombine.high %v525, %v541
    %v551 = vcombine.low %v532, %v548
    %v552 = vcombine.high %v532, %v548
    %v553 = vcombine.low %v457, %v464
    %v555 = vunpack.c.l.s4 1983009808
    %v556 = vunpack.c.0.s8 %v555
    %v557 = vlaneseq
    %v558 = vshrl.u32 %v557, 7
    %v559 = vsub.s32 %v556, %v558
    %v560 = vrot.slane %v553, %v559
    %v561 = vcombine.low %v481, %v482
    %v563 = vunpack.c.l.s4 1983009808
    %v564 = vunpack.c.0.s8 %v563
    %v565 = vlaneseq
    %v566 = vshrl.u32 %v565, 7
    %v567 = vsub.s32 %v564, %v566
    %v568 = vrot.slane %v561, %v567
    %v569 = vcombine.low %v473, %v480
    %v571 = vunpack.c.l.s4 1983009808
    %v572 = vunpack.c.0.s8 %v571
    %v573 = vlaneseq
    %v574 = vshrl.u32 %v573, 7
    %v575 = vsub.s32 %v572, %v574
    %v576 = vrot.slane %v569, %v575
    %v577 = vcombine.low %v483, %v484
    %v579 = vunpack.c.l.s4 1983009808
    %v580 = vunpack.c.0.s8 %v579
    %v581 = vlaneseq
    %v582 = vshrl.u32 %v581, 7
    %v583 = vsub.s32 %v580, %v582
    %v584 = vrot.slane %v577, %v583
    %v585 = vcombine.low %v560, %v568
    %v586 = vcombine.high %v560, %v568
    %v588 = vunpack.c.l.s4 1934713408
    %v589 = vunpack.c.0.s8 %v588
    %v590 = vlaneseq
    %v591 = vshrl.u32 %v590, 7
    %v592 = vsub.s32 %v589, %v591
    %v593 = vrot.slane %v585, %v592
    %v595 = vunpack.c.l.s4 1934713408
    %v596 = vunpack.c.0.s8 %v595
    %v597 = vlaneseq
    %v598 = vshrl.u32 %v597, 7
    %v599 = vsub.s32 %v596, %v598
    %v600 = vrot.slane %v586, %v599
    %v601 = vcombine.low %v576, %v584
    %v602 = vcombine.high %v576, %v584
    %v604 = vunpack.c.l.s4 1934713408
    %v605 = vunpack.c.0.s8 %v604
    %v606 = vlaneseq
    %v607 = vshrl.u32 %v606, 7
    %v608 = vsub.s32 %v605, %v607
    %v609 = vrot.slane %v601, %v608
    %v611 = vunpack.c.l.s4 1934713408
    %v612 = vunpack.c.0.s8 %v611
    %v613 = vlaneseq
    %v614 = vshrl.u32 %v613, 7
    %v615 = vsub.s32 %v612, %v614
    %v616 = vrot.slane %v602, %v615
    %v617 = vcombine.low %v593, %v609
    %v618 = vcombine.high %v593, %v609
    %v619 = vcombine.low %v600, %v616
    %v620 = vcombine.high %v600, %v616
    %623 = vrot.lane.b32.xlu0 %v242, 112
    %v624 = vpop.permute.xlu0 %623
    %625 = vrot.lane.b32.xlu0 %v247, 112
    %v626 = vpop.permute.xlu0 %625
    %629 = vrot.lane.b32.xlu0 %v242, 96
    %v630 = vpop.permute.xlu0 %629
    %631 = vrot.lane.b32.xlu0 %v247, 96
    %v632 = vpop.permute.xlu0 %631
    %635 = vrot.lane.b32.xlu0 %v242, 80
    %v636 = vpop.permute.xlu0 %635
    %637 = vrot.lane.b32.xlu0 %v247, 80
    %v638 = vpop.permute.xlu0 %637
    %v641 = vcombine.low %v242, %v630
    %v642 = vcombine.high %v242, %v630
    %v644 = vunpack.c.l.s4 1983009808
    %v645 = vunpack.c.0.s8 %v644
    %v646 = vlaneseq
    %v647 = vshrl.u32 %v646, 7
    %v648 = vsub.s32 %v645, %v647
    %v649 = vrot.slane %v641, %v648
    %v651 = vunpack.c.l.s4 1983009808
    %v652 = vunpack.c.0.s8 %v651
    %v653 = vlaneseq
    %v654 = vshrl.u32 %v653, 7
    %v655 = vsub.s32 %v652, %v654
    %v656 = vrot.slane %v642, %v655
    %v657 = vcombine.low %v624, %v636
    %v658 = vcombine.high %v624, %v636
    %v660 = vunpack.c.l.s4 1983009808
    %v661 = vunpack.c.0.s8 %v660
    %v662 = vlaneseq
    %v663 = vshrl.u32 %v662, 7
    %v664 = vsub.s32 %v661, %v663
    %v665 = vrot.slane %v657, %v664
    %v667 = vunpack.c.l.s4 1983009808
    %v668 = vunpack.c.0.s8 %v667
    %v669 = vlaneseq
    %v670 = vshrl.u32 %v669, 7
    %v671 = vsub.s32 %v668, %v670
    %v672 = vrot.slane %v658, %v671
    %v673 = vcombine.low %v649, %v665
    %v674 = vcombine.high %v649, %v665
    %v676 = vunpack.c.l.s4 1934713408
    %v677 = vunpack.c.0.s8 %v676
    %v678 = vlaneseq
    %v679 = vshrl.u32 %v678, 7
    %v680 = vsub.s32 %v677, %v679
    %v681 = vrot.slane %v673, %v680
    %v683 = vunpack.c.l.s4 1934713408
    %v684 = vunpack.c.0.s8 %v683
    %v685 = vlaneseq
    %v686 = vshrl.u32 %v685, 7
    %v687 = vsub.s32 %v684, %v686
    %v688 = vrot.slane %v674, %v687
    %v689 = vcombine.low %v656, %v672
    %v690 = vcombine.high %v656, %v672
    %v692 = vunpack.c.l.s4 1934713408
    %v693 = vunpack.c.0.s8 %v692
    %v694 = vlaneseq
    %v695 = vshrl.u32 %v694, 7
    %v696 = vsub.s32 %v693, %v695
    %v697 = vrot.slane %v689, %v696
    %v699 = vunpack.c.l.s4 1934713408
    %v700 = vunpack.c.0.s8 %v699
    %v701 = vlaneseq
    %v702 = vshrl.u32 %v701, 7
    %v703 = vsub.s32 %v700, %v702
    %v704 = vrot.slane %v690, %v703
    %v705 = vcombine.high %v681, 0.0
    %v706 = vcombine.high %v688, 0.0
    %v707 = vcombine.high %v697, 0.0
    %v708 = vcombine.high %v704, 0.0
    %v709 = vcombine.low %v247, %v632
    %v710 = vcombine.high %v247, %v632
    %v712 = vunpack.c.l.s4 1983009808
    %v713 = vunpack.c.0.s8 %v712
    %v714 = vlaneseq
    %v715 = vshrl.u32 %v714, 7
    %v716 = vsub.s32 %v713, %v715
    %v717 = vrot.slane %v709, %v716
    %v719 = vunpack.c.l.s4 1983009808
    %v720 = vunpack.c.0.s8 %v719
    %v721 = vlaneseq
    %v722 = vshrl.u32 %v721, 7
    %v723 = vsub.s32 %v720, %v722
    %v724 = vrot.slane %v710, %v723
    %v725 = vcombine.low %v626, %v638
    %v726 = vcombine.high %v626, %v638
    %v728 = vunpack.c.l.s4 1983009808
    %v729 = vunpack.c.0.s8 %v728
    %v730 = vlaneseq
    %v731 = vshrl.u32 %v730, 7
    %v732 = vsub.s32 %v729, %v731
    %v733 = vrot.slane %v725, %v732
    %v735 = vunpack.c.l.s4 1983009808
    %v736 = vunpack.c.0.s8 %v735
    %v737 = vlaneseq
    %v738 = vshrl.u32 %v737, 7
    %v739 = vsub.s32 %v736, %v738
    %v740 = vrot.slane %v726, %v739
    %v741 = vcombine.low %v717, %v733
    %v742 = vcombine.high %v717, %v733
    %v744 = vunpack.c.l.s4 1934713408
    %v745 = vunpack.c.0.s8 %v744
    %v746 = vlaneseq
    %v747 = vshrl.u32 %v746, 7
    %v748 = vsub.s32 %v745, %v747
    %v749 = vrot.slane %v741, %v748
    %v751 = vunpack.c.l.s4 1934713408
    %v752 = vunpack.c.0.s8 %v751
    %v753 = vlaneseq
    %v754 = vshrl.u32 %v753, 7
    %v755 = vsub.s32 %v752, %v754
    %v756 = vrot.slane %v742, %v755
    %v757 = vcombine.low %v724, %v740
    %v758 = vcombine.high %v724, %v740
    %v760 = vunpack.c.l.s4 1934713408
    %v761 = vunpack.c.0.s8 %v760
    %v762 = vlaneseq
    %v763 = vshrl.u32 %v762, 7
    %v764 = vsub.s32 %v761, %v763
    %v765 = vrot.slane %v757, %v764
    %v767 = vunpack.c.l.s4 1934713408
    %v768 = vunpack.c.0.s8 %v767
    %v769 = vlaneseq
    %v770 = vshrl.u32 %v769, 7
    %v771 = vsub.s32 %v768, %v770
    %v772 = vrot.slane %v758, %v771
    %v773 = vcombine.high %v749, 0.0
    %v774 = vcombine.high %v756, 0.0
    %v775 = vcombine.high %v765, 0.0
    %v776 = vcombine.high %v772, 0.0
    %v777 = vcombine.low %v681, %v688
    %v779 = vunpack.c.l.s4 1983009808
    %v780 = vunpack.c.0.s8 %v779
    %v781 = vlaneseq
    %v782 = vshrl.u32 %v781, 7
    %v783 = vsub.s32 %v780, %v782
    %v784 = vrot.slane %v777, %v783
    %v785 = vcombine.low %v705, %v706
    %v787 = vunpack.c.l.s4 1983009808
    %v788 = vunpack.c.0.s8 %v787
    %v789 = vlaneseq
    %v790 = vshrl.u32 %v789, 7
    %v791 = vsub.s32 %v788, %v790
    %v792 = vrot.slane %v785, %v791
    %v793 = vcombine.low %v697, %v704
    %v795 = vunpack.c.l.s4 1983009808
    %v796 = vunpack.c.0.s8 %v795
    %v797 = vlaneseq
    %v798 = vshrl.u32 %v797, 7
    %v799 = vsub.s32 %v796, %v798
    %v800 = vrot.slane %v793, %v799
    %v801 = vcombine.low %v707, %v708
    %v803 = vunpack.c.l.s4 1983009808
    %v804 = vunpack.c.0.s8 %v803
    %v805 = vlaneseq
    %v806 = vshrl.u32 %v805, 7
    %v807 = vsub.s32 %v804, %v806
    %v808 = vrot.slane %v801, %v807
    %v809 = vcombine.low %v784, %v792
    %v810 = vcombine.high %v784, %v792
    %v812 = vunpack.c.l.s4 1934713408
    %v813 = vunpack.c.0.s8 %v812
    %v814 = vlaneseq
    %v815 = vshrl.u32 %v814, 7
    %v816 = vsub.s32 %v813, %v815
    %v817 = vrot.slane %v809, %v816
    %v819 = vunpack.c.l.s4 1934713408
    %v820 = vunpack.c.0.s8 %v819
    %v821 = vlaneseq
    %v822 = vshrl.u32 %v821, 7
    %v823 = vsub.s32 %v820, %v822
    %v824 = vrot.slane %v810, %v823
    %v825 = vcombine.low %v800, %v808
    %v826 = vcombine.high %v800, %v808
    %v828 = vunpack.c.l.s4 1934713408
    %v829 = vunpack.c.0.s8 %v828
    %v830 = vlaneseq
    %v831 = vshrl.u32 %v830, 7
    %v832 = vsub.s32 %v829, %v831
    %v833 = vrot.slane %v825, %v832
    %v835 = vunpack.c.l.s4 1934713408
    %v836 = vunpack.c.0.s8 %v835
    %v837 = vlaneseq
    %v838 = vshrl.u32 %v837, 7
    %v839 = vsub.s32 %v836, %v838
    %v840 = vrot.slane %v826, %v839
    %v841 = vcombine.low %v817, %v833
    %v842 = vcombine.high %v817, %v833
    %v843 = vcombine.low %v824, %v840
    %v844 = vcombine.high %v824, %v840
    %v845 = vcombine.low %v749, %v756
    %v847 = vunpack.c.l.s4 1983009808
    %v848 = vunpack.c.0.s8 %v847
    %v849 = vlaneseq
    %v850 = vshrl.u32 %v849, 7
    %v851 = vsub.s32 %v848, %v850
    %v852 = vrot.slane %v845, %v851
    %v853 = vcombine.low %v773, %v774
    %v855 = vunpack.c.l.s4 1983009808
    %v856 = vunpack.c.0.s8 %v855
    %v857 = vlaneseq
    %v858 = vshrl.u32 %v857, 7
    %v859 = vsub.s32 %v856, %v858
    %v860 = vrot.slane %v853, %v859
    %v861 = vcombine.low %v765, %v772
    %v863 = vunpack.c.l.s4 1983009808
    %v864 = vunpack.c.0.s8 %v863
    %v865 = vlaneseq
    %v866 = vshrl.u32 %v865, 7
    %v867 = vsub.s32 %v864, %v866
    %v868 = vrot.slane %v861, %v867
    %v869 = vcombine.low %v775, %v776
    %v871 = vunpack.c.l.s4 1983009808
    %v872 = vunpack.c.0.s8 %v871
    %v873 = vlaneseq
    %v874 = vshrl.u32 %v873, 7
    %v875 = vsub.s32 %v872, %v874
    %v876 = vrot.slane %v869, %v875
    %v877 = vcombine.low %v852, %v860
    %v878 = vcombine.high %v852, %v860
    %v880 = vunpack.c.l.s4 1934713408
    %v881 = vunpack.c.0.s8 %v880
    %v882 = vlaneseq
    %v883 = vshrl.u32 %v882, 7
    %v884 = vsub.s32 %v881, %v883
    %v885 = vrot.slane %v877, %v884
    %v887 = vunpack.c.l.s4 1934713408
    %v888 = vunpack.c.0.s8 %v887
    %v889 = vlaneseq
    %v890 = vshrl.u32 %v889, 7
    %v891 = vsub.s32 %v888, %v890
    %v892 = vrot.slane %v878, %v891
    %v893 = vcombine.low %v868, %v876
    %v894 = vcombine.high %v868, %v876
    %v896 = vunpack.c.l.s4 1934713408
    %v897 = vunpack.c.0.s8 %v896
    %v898 = vlaneseq
    %v899 = vshrl.u32 %v898, 7
    %v900 = vsub.s32 %v897, %v899
    %v901 = vrot.slane %v893, %v900
    %v903 = vunpack.c.l.s4 1934713408
    %v904 = vunpack.c.0.s8 %v903
    %v905 = vlaneseq
    %v906 = vshrl.u32 %v905, 7
    %v907 = vsub.s32 %v904, %v906
    %v908 = vrot.slane %v894, %v907
    %v909 = vcombine.low %v885, %v901
    %v910 = vcombine.high %v885, %v901
    %v911 = vcombine.low %v892, %v908
    %v912 = vcombine.high %v892, %v908
    %915 = vrot.lane.b32.xlu0 %v321, 112
    %v916 = vpop.permute.xlu0 %915
    %917 = vrot.lane.b32.xlu0 %v326, 112
    %v918 = vpop.permute.xlu0 %917
    %921 = vrot.lane.b32.xlu0 %v321, 96
    %v922 = vpop.permute.xlu0 %921
    %923 = vrot.lane.b32.xlu0 %v326, 96
    %v924 = vpop.permute.xlu0 %923
    %927 = vrot.lane.b32.xlu0 %v321, 80
    %v928 = vpop.permute.xlu0 %927
    %929 = vrot.lane.b32.xlu0 %v326, 80
    %v930 = vpop.permute.xlu0 %929
    %v933 = vcombine.low %v321, %v922
    %v934 = vcombine.high %v321, %v922
    %v936 = vunpack.c.l.s4 1983009808
    %v937 = vunpack.c.0.s8 %v936
    %v938 = vlaneseq
    %v939 = vshrl.u32 %v938, 7
    %v940 = vsub.s32 %v937, %v939
    %v941 = vrot.slane %v933, %v940
    %v943 = vunpack.c.l.s4 1983009808
    %v944 = vunpack.c.0.s8 %v943
    %v945 = vlaneseq
    %v946 = vshrl.u32 %v945, 7
    %v947 = vsub.s32 %v944, %v946
    %v948 = vrot.slane %v934, %v947
    %v949 = vcombine.low %v916, %v928
    %v950 = vcombine.high %v916, %v928
    %v952 = vunpack.c.l.s4 1983009808
    %v953 = vunpack.c.0.s8 %v952
    %v954 = vlaneseq
    %v955 = vshrl.u32 %v954, 7
    %v956 = vsub.s32 %v953, %v955
    %v957 = vrot.slane %v949, %v956
    %v959 = vunpack.c.l.s4 1983009808
    %v960 = vunpack.c.0.s8 %v959
    %v961 = vlaneseq
    %v962 = vshrl.u32 %v961, 7
    %v963 = vsub.s32 %v960, %v962
    %v964 = vrot.slane %v950, %v963
    %v965 = vcombine.low %v941, %v957
    %v966 = vcombine.high %v941, %v957
    %v968 = vunpack.c.l.s4 1934713408
    %v969 = vunpack.c.0.s8 %v968
    %v970 = vlaneseq
    %v971 = vshrl.u32 %v970, 7
    %v972 = vsub.s32 %v969, %v971
    %v973 = vrot.slane %v965, %v972
    %v975 = vunpack.c.l.s4 1934713408
    %v976 = vunpack.c.0.s8 %v975
    %v977 = vlaneseq
    %v978 = vshrl.u32 %v977, 7
    %v979 = vsub.s32 %v976, %v978
    %v980 = vrot.slane %v966, %v979
    %v981 = vcombine.low %v948, %v964
    %v982 = vcombine.high %v948, %v964
    %v984 = vunpack.c.l.s4 1934713408
    %v985 = vunpack.c.0.s8 %v984
    %v986 = vlaneseq
    %v987 = vshrl.u32 %v986, 7
    %v988 = vsub.s32 %v985, %v987
    %v989 = vrot.slane %v981, %v988
    %v991 = vunpack.c.l.s4 1934713408
    %v992 = vunpack.c.0.s8 %v991
    %v993 = vlaneseq
    %v994 = vshrl.u32 %v993, 7
    %v995 = vsub.s32 %v992, %v994
    %v996 = vrot.slane %v982, %v995
    %v997 = vcombine.high %v973, 0.0
    %v998 = vcombine.high %v980, 0.0
    %v999 = vcombine.high %v989, 0.0
    %v1000 = vcombine.high %v996, 0.0
    %v1001 = vcombine.low %v326, %v924
    %v1002 = vcombine.high %v326, %v924
    %v1004 = vunpack.c.l.s4 1983009808
    %v1005 = vunpack.c.0.s8 %v1004
    %v1006 = vlaneseq
    %v1007 = vshrl.u32 %v1006, 7
    %v1008 = vsub.s32 %v1005, %v1007
    %v1009 = vrot.slane %v1001, %v1008
    %v1011 = vunpack.c.l.s4 1983009808
    %v1012 = vunpack.c.0.s8 %v1011
    %v1013 = vlaneseq
    %v1014 = vshrl.u32 %v1013, 7
    %v1015 = vsub.s32 %v1012, %v1014
    %v1016 = vrot.slane %v1002, %v1015
    %v1017 = vcombine.low %v918, %v930
    %v1018 = vcombine.high %v918, %v930
    %v1020 = vunpack.c.l.s4 1983009808
    %v1021 = vunpack.c.0.s8 %v1020
    %v1022 = vlaneseq
    %v1023 = vshrl.u32 %v1022, 7
    %v1024 = vsub.s32 %v1021, %v1023
    %v1025 = vrot.slane %v1017, %v1024
    %v1027 = vunpack.c.l.s4 1983009808
    %v1028 = vunpack.c.0.s8 %v1027
    %v1029 = vlaneseq
    %v1030 = vshrl.u32 %v1029, 7
    %v1031 = vsub.s32 %v1028, %v1030
    %v1032 = vrot.slane %v1018, %v1031
    %v1033 = vcombine.low %v1009, %v1025
    %v1034 = vcombine.high %v1009, %v1025
    %v1036 = vunpack.c.l.s4 1934713408
    %v1037 = vunpack.c.0.s8 %v1036
    %v1038 = vlaneseq
    %v1039 = vshrl.u32 %v1038, 7
    %v1040 = vsub.s32 %v1037, %v1039
    %v1041 = vrot.slane %v1033, %v1040
    %v1043 = vunpack.c.l.s4 1934713408
    %v1044 = vunpack.c.0.s8 %v1043
    %v1045 = vlaneseq
    %v1046 = vshrl.u32 %v1045, 7
    %v1047 = vsub.s32 %v1044, %v1046
    %v1048 = vrot.slane %v1034, %v1047
    %v1049 = vcombine.low %v1016, %v1032
    %v1050 = vcombine.high %v1016, %v1032
    %v1052 = vunpack.c.l.s4 1934713408
    %v1053 = vunpack.c.0.s8 %v1052
    %v1054 = vlaneseq
    %v1055 = vshrl.u32 %v1054, 7
    %v1056 = vsub.s32 %v1053, %v1055
    %v1057 = vrot.slane %v1049, %v1056
    %v1059 = vunpack.c.l.s4 1934713408
    %v1060 = vunpack.c.0.s8 %v1059
    %v1061 = vlaneseq
    %v1062 = vshrl.u32 %v1061, 7
    %v1063 = vsub.s32 %v1060, %v1062
    %v1064 = vrot.slane %v1050, %v1063
    %v1065 = vcombine.high %v1041, 0.0
    %v1066 = vcombine.high %v1048, 0.0
    %v1067 = vcombine.high %v1057, 0.0
    %v1068 = vcombine.high %v1064, 0.0
    %v1069 = vcombine.low %v973, %v980
    %v1071 = vunpack.c.l.s4 1983009808
    %v1072 = vunpack.c.0.s8 %v1071
    %v1073 = vlaneseq
    %v1074 = vshrl.u32 %v1073, 7
    %v1075 = vsub.s32 %v1072, %v1074
    %v1076 = vrot.slane %v1069, %v1075
    %v1077 = vcombine.low %v997, %v998
    %v1079 = vunpack.c.l.s4 1983009808
    %v1080 = vunpack.c.0.s8 %v1079
    %v1081 = vlaneseq
    %v1082 = vshrl.u32 %v1081, 7
    %v1083 = vsub.s32 %v1080, %v1082
    %v1084 = vrot.slane %v1077, %v1083
    %v1085 = vcombine.low %v989, %v996
    %v1087 = vunpack.c.l.s4 1983009808
    %v1088 = vunpack.c.0.s8 %v1087
    %v1089 = vlaneseq
    %v1090 = vshrl.u32 %v1089, 7
    %v1091 = vsub.s32 %v1088, %v1090
    %v1092 = vrot.slane %v1085, %v1091
    %v1093 = vcombine.low %v999, %v1000
    %v1095 = vunpack.c.l.s4 1983009808
    %v1096 = vunpack.c.0.s8 %v1095
    %v1097 = vlaneseq
    %v1098 = vshrl.u32 %v1097, 7
    %v1099 = vsub.s32 %v1096, %v1098
    %v1100 = vrot.slane %v1093, %v1099
    %v1101 = vcombine.low %v1076, %v1084
    %v1102 = vcombine.high %v1076, %v1084
    %v1104 = vunpack.c.l.s4 1934713408
    %v1105 = vunpack.c.0.s8 %v1104
    %v1106 = vlaneseq
    %v1107 = vshrl.u32 %v1106, 7
    %v1108 = vsub.s32 %v1105, %v1107
    %v1109 = vrot.slane %v1101, %v1108
    %v1111 = vunpack.c.l.s4 1934713408
    %v1112 = vunpack.c.0.s8 %v1111
    %v1113 = vlaneseq
    %v1114 = vshrl.u32 %v1113, 7
    %v1115 = vsub.s32 %v1112, %v1114
    %v1116 = vrot.slane %v1102, %v1115
    %v1117 = vcombine.low %v1092, %v1100
    %v1118 = vcombine.high %v1092, %v1100
    %v1120 = vunpack.c.l.s4 1934713408
    %v1121 = vunpack.c.0.s8 %v1120
    %v1122 = vlaneseq
    %v1123 = vshrl.u32 %v1122, 7
    %v1124 = vsub.s32 %v1121, %v1123
    %v1125 = vrot.slane %v1117, %v1124
    %v1127 = vunpack.c.l.s4 1934713408
    %v1128 = vunpack.c.0.s8 %v1127
    %v1129 = vlaneseq
    %v1130 = vshrl.u32 %v1129, 7
    %v1131 = vsub.s32 %v1128, %v1130
    %v1132 = vrot.slane %v1118, %v1131
    %v1133 = vcombine.low %v1109, %v1125
    %v1134 = vcombine.high %v1109, %v1125
    %v1135 = vcombine.low %v1116, %v1132
    %v1136 = vcombine.high %v1116, %v1132
    %v1137 = vcombine.low %v1041, %v1048
    %v1139 = vunpack.c.l.s4 1983009808
    %v1140 = vunpack.c.0.s8 %v1139
    %v1141 = vlaneseq
    %v1142 = vshrl.u32 %v1141, 7
    %v1143 = vsub.s32 %v1140, %v1142
    %v1144 = vrot.slane %v1137, %v1143
    %v1145 = vcombine.low %v1065, %v1066
    %v1147 = vunpack.c.l.s4 1983009808
    %v1148 = vunpack.c.0.s8 %v1147
    %v1149 = vlaneseq
    %v1150 = vshrl.u32 %v1149, 7
    %v1151 = vsub.s32 %v1148, %v1150
    %v1152 = vrot.slane %v1145, %v1151
    %v1153 = vcombine.low %v1057, %v1064
    %v1155 = vunpack.c.l.s4 1983009808
    %v1156 = vunpack.c.0.s8 %v1155
    %v1157 = vlaneseq
    %v1158 = vshrl.u32 %v1157, 7
    %v1159 = vsub.s32 %v1156, %v1158
    %v1160 = vrot.slane %v1153, %v1159
    %v1161 = vcombine.low %v1067, %v1068
    %v1163 = vunpack.c.l.s4 1983009808
    %v1164 = vunpack.c.0.s8 %v1163
    %v1165 = vlaneseq
    %v1166 = vshrl.u32 %v1165, 7
    %v1167 = vsub.s32 %v1164, %v1166
    %v1168 = vrot.slane %v1161, %v1167
    %v1169 = vcombine.low %v1144, %v1152
    %v1170 = vcombine.high %v1144, %v1152
    %v1172 = vunpack.c.l.s4 1934713408
    %v1173 = vunpack.c.0.s8 %v1172
    %v1174 = vlaneseq
    %v1175 = vshrl.u32 %v1174, 7
    %v1176 = vsub.s32 %v1173, %v1175
    %v1177 = vrot.slane %v1169, %v1176
    %v1179 = vunpack.c.l.s4 1934713408
    %v1180 = vunpack.c.0.s8 %v1179
    %v1181 = vlaneseq
    %v1182 = vshrl.u32 %v1181, 7
    %v1183 = vsub.s32 %v1180, %v1182
    %v1184 = vrot.slane %v1170, %v1183
    %v1185 = vcombine.low %v1160, %v1168
    %v1186 = vcombine.high %v1160, %v1168
    %v1188 = vunpack.c.l.s4 1934713408
    %v1189 = vunpack.c.0.s8 %v1188
    %v1190 = vlaneseq
    %v1191 = vshrl.u32 %v1190, 7
    %v1192 = vsub.s32 %v1189, %v1191
    %v1193 = vrot.slane %v1185, %v1192
    %v1195 = vunpack.c.l.s4 1934713408
    %v1196 = vunpack.c.0.s8 %v1195
    %v1197 = vlaneseq
    %v1198 = vshrl.u32 %v1197, 7
    %v1199 = vsub.s32 %v1196, %v1198
    %v1200 = vrot.slane %v1186, %v1199
    %v1201 = vcombine.low %v1177, %v1193
    %v1202 = vcombine.high %v1177, %v1193
    %v1203 = vcombine.low %v1184, %v1200
    %v1204 = vcombine.high %v1184, %v1200
    %v1205 = vld [vmem:[%s6] sm:$0xff]
    %v1206 = vld [vmem:[%s7] sm:$0xff]
    %v1207 = vsub.f32 0.0, %v549
    %v1208 = vsub.f32 0.0, %v550
    %v1209 = vsub.f32 0.0, %v551
    %v1210 = vsub.f32 0.0, %v552
    %v1211 = vsub.f32 0.0, %v617
    %v1212 = vsub.f32 0.0, %v618
    %v1213 = vsub.f32 0.0, %v619
    %v1214 = vsub.f32 0.0, %v620
    %1223 = vrot.lane.b32.xlu0 %v1207, 120
    %v1224 = vpop.permute.xlu0 %1223
    %1225 = vrot.lane.b32.xlu0 %v1208, 120
    %v1226 = vpop.permute.xlu0 %1225
    %1227 = vrot.lane.b32.xlu0 %v1209, 120
    %v1228 = vpop.permute.xlu0 %1227
    %1229 = vrot.lane.b32.xlu0 %v1210, 120
    %v1230 = vpop.permute.xlu0 %1229
    %1231 = vrot.lane.b32.xlu0 %v1211, 120
    %v1232 = vpop.permute.xlu0 %1231
    %1233 = vrot.lane.b32.xlu0 %v1212, 120
    %v1234 = vpop.permute.xlu0 %1233
    %1235 = vrot.lane.b32.xlu0 %v1213, 120
    %v1236 = vpop.permute.xlu0 %1235
    %1237 = vrot.lane.b32.xlu0 %v1214, 120
    %v1238 = vpop.permute.xlu0 %1237
    %1255 = vrot.lane.b32.xlu0 %v549, 8
    %v1256 = vpop.permute.xlu0 %1255
    %1257 = vrot.lane.b32.xlu0 %v550, 8
    %v1258 = vpop.permute.xlu0 %1257
    %1259 = vrot.lane.b32.xlu0 %v551, 8
    %v1260 = vpop.permute.xlu0 %1259
    %1261 = vrot.lane.b32.xlu0 %v552, 8
    %v1262 = vpop.permute.xlu0 %1261
    %1263 = vrot.lane.b32.xlu0 %v617, 8
    %v1264 = vpop.permute.xlu0 %1263
    %1265 = vrot.lane.b32.xlu0 %v618, 8
    %v1266 = vpop.permute.xlu0 %1265
    %1267 = vrot.lane.b32.xlu0 %v619, 8
    %v1268 = vpop.permute.xlu0 %1267
    %1269 = vrot.lane.b32.xlu0 %v620, 8
    %v1270 = vpop.permute.xlu0 %1269
    %vm1279 = vcmask 64512
    %v1280 = vsel %vm1279, %v1224, %v1256
    %v1281 = vsel %vm1279, %v1226, %v1258
    %v1282 = vsel %vm1279, %v1228, %v1260
    %v1283 = vsel %vm1279, %v1230, %v1262
    %v1284 = vsel %vm1279, %v1232, %v1264
    %v1285 = vsel %vm1279, %v1234, %v1266
    %v1286 = vsel %vm1279, %v1236, %v1268
    %v1287 = vsel %vm1279, %v1238, %v1270
    %v1288 = vmul.f32 %v549, %v1205
    %v1289 = vmul.f32 %v550, %v1205
    %v1290 = vmul.f32 %v551, %v1205
    %v1291 = vmul.f32 %v552, %v1205
    %v1292 = vmul.f32 %v617, %v1205
    %v1293 = vmul.f32 %v618, %v1205
    %v1294 = vmul.f32 %v619, %v1205
    %v1295 = vmul.f32 %v620, %v1205
    %v1296 = vmul.f32 %v1280, %v1206
    %v1297 = vmul.f32 %v1281, %v1206
    %v1298 = vmul.f32 %v1282, %v1206
    %v1299 = vmul.f32 %v1283, %v1206
    %v1300 = vmul.f32 %v1284, %v1206
    %v1301 = vmul.f32 %v1285, %v1206
    %v1302 = vmul.f32 %v1286, %v1206
    %v1303 = vmul.f32 %v1287, %v1206
    %v1304 = vadd.f32 %v1288, %v1296
    %v1305 = vadd.f32 %v1289, %v1297
    %v1306 = vadd.f32 %v1290, %v1298
    %v1307 = vadd.f32 %v1291, %v1299
    %v1308 = vadd.f32 %v1292, %v1300
    %v1309 = vadd.f32 %v1293, %v1301
    %v1310 = vadd.f32 %v1294, %v1302
    %v1311 = vadd.f32 %v1295, %v1303
    %v1312 = vmul.f32 %v1304, 0.25
    %v1313 = vmul.f32 %v1305, 0.25
    %v1314 = vmul.f32 %v1306, 0.25
    %v1315 = vmul.f32 %v1307, 0.25
    %v1316 = vmul.f32 %v1308, 0.25
    %v1317 = vmul.f32 %v1309, 0.25
    %v1318 = vmul.f32 %v1310, 0.25
    %v1319 = vmul.f32 %v1311, 0.25
    %v1320 = vsub.f32 0.0, %v841
    %v1321 = vsub.f32 0.0, %v842
    %v1322 = vsub.f32 0.0, %v843
    %v1323 = vsub.f32 0.0, %v844
    %v1324 = vsub.f32 0.0, %v909
    %v1325 = vsub.f32 0.0, %v910
    %v1326 = vsub.f32 0.0, %v911
    %v1327 = vsub.f32 0.0, %v912
    %1336 = vrot.lane.b32.xlu0 %v1320, 120
    %v1337 = vpop.permute.xlu0 %1336
    %1338 = vrot.lane.b32.xlu0 %v1321, 120
    %v1339 = vpop.permute.xlu0 %1338
    %1340 = vrot.lane.b32.xlu0 %v1322, 120
    %v1341 = vpop.permute.xlu0 %1340
    %1342 = vrot.lane.b32.xlu0 %v1323, 120
    %v1343 = vpop.permute.xlu0 %1342
    %1344 = vrot.lane.b32.xlu0 %v1324, 120
    %v1345 = vpop.permute.xlu0 %1344
    %1346 = vrot.lane.b32.xlu0 %v1325, 120
    %v1347 = vpop.permute.xlu0 %1346
    %1348 = vrot.lane.b32.xlu0 %v1326, 120
    %v1349 = vpop.permute.xlu0 %1348
    %1350 = vrot.lane.b32.xlu0 %v1327, 120
    %v1351 = vpop.permute.xlu0 %1350
    %1368 = vrot.lane.b32.xlu0 %v841, 8
    %v1369 = vpop.permute.xlu0 %1368
    %1370 = vrot.lane.b32.xlu0 %v842, 8
    %v1371 = vpop.permute.xlu0 %1370
    %1372 = vrot.lane.b32.xlu0 %v843, 8
    %v1373 = vpop.permute.xlu0 %1372
    %1374 = vrot.lane.b32.xlu0 %v844, 8
    %v1375 = vpop.permute.xlu0 %1374
    %1376 = vrot.lane.b32.xlu0 %v909, 8
    %v1377 = vpop.permute.xlu0 %1376
    %1378 = vrot.lane.b32.xlu0 %v910, 8
    %v1379 = vpop.permute.xlu0 %1378
    %1380 = vrot.lane.b32.xlu0 %v911, 8
    %v1381 = vpop.permute.xlu0 %1380
    %1382 = vrot.lane.b32.xlu0 %v912, 8
    %v1383 = vpop.permute.xlu0 %1382
    %v1392 = vsel %vm1279, %v1337, %v1369
    %v1393 = vsel %vm1279, %v1339, %v1371
    %v1394 = vsel %vm1279, %v1341, %v1373
    %v1395 = vsel %vm1279, %v1343, %v1375
    %v1396 = vsel %vm1279, %v1345, %v1377
    %v1397 = vsel %vm1279, %v1347, %v1379
    %v1398 = vsel %vm1279, %v1349, %v1381
    %v1399 = vsel %vm1279, %v1351, %v1383
    %v1400 = vmul.f32 %v841, %v1205
    %v1401 = vmul.f32 %v842, %v1205
    %v1402 = vmul.f32 %v843, %v1205
    %v1403 = vmul.f32 %v844, %v1205
    %v1404 = vmul.f32 %v909, %v1205
    %v1405 = vmul.f32 %v910, %v1205
    %v1406 = vmul.f32 %v911, %v1205
    %v1407 = vmul.f32 %v912, %v1205
    %v1408 = vmul.f32 %v1392, %v1206
    %v1409 = vmul.f32 %v1393, %v1206
    %v1410 = vmul.f32 %v1394, %v1206
    %v1411 = vmul.f32 %v1395, %v1206
    %v1412 = vmul.f32 %v1396, %v1206
    %v1413 = vmul.f32 %v1397, %v1206
    %v1414 = vmul.f32 %v1398, %v1206
    %v1415 = vmul.f32 %v1399, %v1206
    %v1416 = vadd.f32 %v1400, %v1408
    %v1417 = vadd.f32 %v1401, %v1409
    %v1418 = vadd.f32 %v1402, %v1410
    %v1419 = vadd.f32 %v1403, %v1411
    %v1420 = vadd.f32 %v1404, %v1412
    %v1421 = vadd.f32 %v1405, %v1413
    %v1422 = vadd.f32 %v1406, %v1414
    %v1423 = vadd.f32 %v1407, %v1415
    %vm1424 = vcmask 130048
    %v1426 = vsel %vm1424, %v1312, 0
    %v1429 = vsel %vm1424, %v1416, 0
    %1431 = vmatprep.subr.mxu0 0.0
    %1432 = vmatpush1.xpose.msra.mxu0 %v1429
    %1433 = vmatprep.subr.mxu0 0.0
    %1434 = vmatpush1.xpose.msra.mxu0 0.0
    %1435 = vmatprep.subr.mxu0 0.0
    %1436 = vmatpush1.xpose.msra.mxu0 0.0
    %1437 = vmatprep.subr.mxu0 0.0
    %1438 = vmatpush1.xpose.msra.mxu0 0.0
    %1439 = vmatprep.subr.mxu0 0.0
    %1440 = vmatpush1.xpose.msra.mxu0 0.0
    %1441 = vmatprep.subr.mxu0 0.0
    %1442 = vmatpush1.xpose.msra.mxu0 0.0
    %1443 = vmatprep.subr.mxu0 0.0
    %1444 = vmatpush1.xpose.msra.mxu0 0.0
    %1445 = vmatprep.subr.mxu0 0.0
    %1446 = vmatpush1.xpose.msra.mxu0 0.0
    %1447 = vmatprep.subr.mxu0 0.0
    %1448 = vmatpush1.xpose.msra.mxu0 0.0
    %1449 = vmatprep.subr.mxu0 0.0
    %1450 = vmatpush1.xpose.msra.mxu0 0.0
    %1451 = vmatprep.subr.mxu0 0.0
    %1452 = vmatpush1.xpose.msra.mxu0 0.0
    %1453 = vmatprep.subr.mxu0 0.0
    %1454 = vmatpush1.xpose.msra.mxu0 0.0
    %1455 = vmatprep.subr.mxu0 0.0
    %1456 = vmatpush1.xpose.msra.mxu0 0.0
    %1457 = vmatprep.subr.mxu0 0.0
    %1458 = vmatpush1.xpose.msra.mxu0 0.0
    %1459 = vmatprep.subr.mxu0 0.0
    %1460 = vmatpush1.xpose.msra.mxu0 0.0
    %1461 = vmatprep.subr.mxu0 0.0
    %1462 = vmatpush1.xpose.msra.mxu0 0.0
    %1463 = vmatprep.subr.mxu0 0.0
    %1464 = vmatpush1.xpose.msra.mxu0 0.0
    %1465 = vmatprep.subr.mxu0 0.0
    %1466 = vmatpush1.xpose.msra.mxu0 0.0
    %1467 = vmatprep.subr.mxu0 0.0
    %1468 = vmatpush1.xpose.msra.mxu0 0.0
    %1469 = vmatprep.subr.mxu0 0.0
    %1470 = vmatpush1.xpose.msra.mxu0 0.0
    %1471 = vmatprep.subr.mxu0 0.0
    %1472 = vmatpush1.xpose.msra.mxu0 0.0
    %1473 = vmatprep.subr.mxu0 0.0
    %1474 = vmatpush1.xpose.msra.mxu0 0.0
    %1475 = vmatprep.subr.mxu0 0.0
    %1476 = vmatpush1.xpose.msra.mxu0 0.0
    %1477 = vmatprep.subr.mxu0 0.0
    %1478 = vmatpush1.xpose.msra.mxu0 0.0
    %1479 = vmatprep.subr.mxu0 0.0
    %1480 = vmatpush1.xpose.msra.mxu0 0.0
    %1481 = vmatprep.subr.mxu0 0.0
    %1482 = vmatpush1.xpose.msra.mxu0 0.0
    %1483 = vmatprep.subr.mxu0 0.0
    %1484 = vmatpush1.xpose.msra.mxu0 0.0
    %1485 = vmatprep.subr.mxu0 0.0
    %1486 = vmatpush1.xpose.msra.mxu0 0.0
    %1487 = vmatprep.subr.mxu0 0.0
    %1488 = vmatpush1.xpose.msra.mxu0 0.0
    %1489 = vmatprep.subr.mxu0 0.0
    %1490 = vmatpush1.xpose.msra.mxu0 0.0
    %1491 = vmatprep.subr.mxu0 0.0
    %1492 = vmatpush1.xpose.msra.mxu0 0.0
    %1493 = vmatprep.subr.mxu0 0.0
    %1494 = vmatpush1.xpose.msra.mxu0 0.0
    %1495 = vmatprep.mubr.f32.mxu0 0.0
    %1496 = vmatmul.mubr.f32.gmra.mrb[0].mxu0 %v1426
    %v1497 = vpop.f32.mrb[0].mxu0
    %v1498 = vadd.f32 0.0, %v1497
    %v1499 = vpop.f32.mrb[0].mxu0
    %1500 = vdwg.mxu0
    %v1502 = vsel %vm1424, %v1313, 0
    %v1505 = vsel %vm1424, %v1417, 0
    %1507 = vmatprep.subr.mxu0 0.0
    %1508 = vmatpush1.xpose.msra.mxu0 %v1505
    %1509 = vmatprep.subr.mxu0 0.0
    %1510 = vmatpush1.xpose.msra.mxu0 0.0
    %1511 = vmatprep.subr.mxu0 0.0
    %1512 = vmatpush1.xpose.msra.mxu0 0.0
    %1513 = vmatprep.subr.mxu0 0.0
    %1514 = vmatpush1.xpose.msra.mxu0 0.0
    %1515 = vmatprep.subr.mxu0 0.0
    %1516 = vmatpush1.xpose.msra.mxu0 0.0
    %1517 = vmatprep.subr.mxu0 0.0
    %1518 = vmatpush1.xpose.msra.mxu0 0.0
    %1519 = vmatprep.subr.mxu0 0.0
    %1520 = vmatpush1.xpose.msra.mxu0 0.0
    %1521 = vmatprep.subr.mxu0 0.0
    %1522 = vmatpush1.xpose.msra.mxu0 0.0
    %1523 = vmatprep.subr.mxu0 0.0
    %1524 = vmatpush1.xpose.msra.mxu0 0.0
    %1525 = vmatprep.subr.mxu0 0.0
    %1526 = vmatpush1.xpose.msra.mxu0 0.0
    %1527 = vmatprep.subr.mxu0 0.0
    %1528 = vmatpush1.xpose.msra.mxu0 0.0
    %1529 = vmatprep.subr.mxu0 0.0
    %1530 = vmatpush1.xpose.msra.mxu0 0.0
    %1531 = vmatprep.subr.mxu0 0.0
    %1532 = vmatpush1.xpose.msra.mxu0 0.0
    %1533 = vmatprep.subr.mxu0 0.0
    %1534 = vmatpush1.xpose.msra.mxu0 0.0
    %1535 = vmatprep.subr.mxu0 0.0
    %1536 = vmatpush1.xpose.msra.mxu0 0.0
    %1537 = vmatprep.subr.mxu0 0.0
    %1538 = vmatpush1.xpose.msra.mxu0 0.0
    %1539 = vmatprep.subr.mxu0 0.0
    %1540 = vmatpush1.xpose.msra.mxu0 0.0
    %1541 = vmatprep.subr.mxu0 0.0
    %1542 = vmatpush1.xpose.msra.mxu0 0.0
    %1543 = vmatprep.subr.mxu0 0.0
    %1544 = vmatpush1.xpose.msra.mxu0 0.0
    %1545 = vmatprep.subr.mxu0 0.0
    %1546 = vmatpush1.xpose.msra.mxu0 0.0
    %1547 = vmatprep.subr.mxu0 0.0
    %1548 = vmatpush1.xpose.msra.mxu0 0.0
    %1549 = vmatprep.subr.mxu0 0.0
    %1550 = vmatpush1.xpose.msra.mxu0 0.0
    %1551 = vmatprep.subr.mxu0 0.0
    %1552 = vmatpush1.xpose.msra.mxu0 0.0
    %1553 = vmatprep.subr.mxu0 0.0
    %1554 = vmatpush1.xpose.msra.mxu0 0.0
    %1555 = vmatprep.subr.mxu0 0.0
    %1556 = vmatpush1.xpose.msra.mxu0 0.0
    %1557 = vmatprep.subr.mxu0 0.0
    %1558 = vmatpush1.xpose.msra.mxu0 0.0
    %1559 = vmatprep.subr.mxu0 0.0
    %1560 = vmatpush1.xpose.msra.mxu0 0.0
    %1561 = vmatprep.subr.mxu0 0.0
    %1562 = vmatpush1.xpose.msra.mxu0 0.0
    %1563 = vmatprep.subr.mxu0 0.0
    %1564 = vmatpush1.xpose.msra.mxu0 0.0
    %1565 = vmatprep.subr.mxu0 0.0
    %1566 = vmatpush1.xpose.msra.mxu0 0.0
    %1567 = vmatprep.subr.mxu0 0.0
    %1568 = vmatpush1.xpose.msra.mxu0 0.0
    %1569 = vmatprep.subr.mxu0 0.0
    %1570 = vmatpush1.xpose.msra.mxu0 0.0
    %1571 = vmatprep.mubr.f32.mxu0 0.0
    %1572 = vmatmul.mubr.f32.gmra.mrb[0].mxu0 %v1502
    %v1573 = vpop.f32.mrb[0].mxu0
    %v1574 = vadd.f32 0.0, %v1573
    %v1575 = vpop.f32.mrb[0].mxu0
    %1576 = vdwg.mxu0
    %v1578 = vsel %vm1424, %v1314, 0
    %v1581 = vsel %vm1424, %v1418, 0
    %1583 = vmatprep.subr.mxu0 0.0
    %1584 = vmatpush1.xpose.msra.mxu0 %v1581
    %1585 = vmatprep.subr.mxu0 0.0
    %1586 = vmatpush1.xpose.msra.mxu0 0.0
    %1587 = vmatprep.subr.mxu0 0.0
    %1588 = vmatpush1.xpose.msra.mxu0 0.0
    %1589 = vmatprep.subr.mxu0 0.0
    %1590 = vmatpush1.xpose.msra.mxu0 0.0
    %1591 = vmatprep.subr.mxu0 0.0
    %1592 = vmatpush1.xpose.msra.mxu0 0.0
    %1593 = vmatprep.subr.mxu0 0.0
    %1594 = vmatpush1.xpose.msra.mxu0 0.0
    %1595 = vmatprep.subr.mxu0 0.0
    %1596 = vmatpush1.xpose.msra.mxu0 0.0
    %1597 = vmatprep.subr.mxu0 0.0
    %1598 = vmatpush1.xpose.msra.mxu0 0.0
    %1599 = vmatprep.subr.mxu0 0.0
    %1600 = vmatpush1.xpose.msra.mxu0 0.0
    %1601 = vmatprep.subr.mxu0 0.0
    %1602 = vmatpush1.xpose.msra.mxu0 0.0
    %1603 = vmatprep.subr.mxu0 0.0
    %1604 = vmatpush1.xpose.msra.mxu0 0.0
    %1605 = vmatprep.subr.mxu0 0.0
    %1606 = vmatpush1.xpose.msra.mxu0 0.0
    %1607 = vmatprep.subr.mxu0 0.0
    %1608 = vmatpush1.xpose.msra.mxu0 0.0
    %1609 = vmatprep.subr.mxu0 0.0
    %1610 = vmatpush1.xpose.msra.mxu0 0.0
    %1611 = vmatprep.subr.mxu0 0.0
    %1612 = vmatpush1.xpose.msra.mxu0 0.0
    %1613 = vmatprep.subr.mxu0 0.0
    %1614 = vmatpush1.xpose.msra.mxu0 0.0
    %1615 = vmatprep.subr.mxu0 0.0
    %1616 = vmatpush1.xpose.msra.mxu0 0.0
    %1617 = vmatprep.subr.mxu0 0.0
    %1618 = vmatpush1.xpose.msra.mxu0 0.0
    %1619 = vmatprep.subr.mxu0 0.0
    %1620 = vmatpush1.xpose.msra.mxu0 0.0
    %1621 = vmatprep.subr.mxu0 0.0
    %1622 = vmatpush1.xpose.msra.mxu0 0.0
    %1623 = vmatprep.subr.mxu0 0.0
    %1624 = vmatpush1.xpose.msra.mxu0 0.0
    %1625 = vmatprep.subr.mxu0 0.0
    %1626 = vmatpush1.xpose.msra.mxu0 0.0
    %1627 = vmatprep.subr.mxu0 0.0
    %1628 = vmatpush1.xpose.msra.mxu0 0.0
    %1629 = vmatprep.subr.mxu0 0.0
    %1630 = vmatpush1.xpose.msra.mxu0 0.0
    %1631 = vmatprep.subr.mxu0 0.0
    %1632 = vmatpush1.xpose.msra.mxu0 0.0
    %1633 = vmatprep.subr.mxu0 0.0
    %1634 = vmatpush1.xpose.msra.mxu0 0.0
    %1635 = vmatprep.subr.mxu0 0.0
    %1636 = vmatpush1.xpose.msra.mxu0 0.0
    %1637 = vmatprep.subr.mxu0 0.0
    %1638 = vmatpush1.xpose.msra.mxu0 0.0
    %1639 = vmatprep.subr.mxu0 0.0
    %1640 = vmatpush1.xpose.msra.mxu0 0.0
    %1641 = vmatprep.subr.mxu0 0.0
    %1642 = vmatpush1.xpose.msra.mxu0 0.0
    %1643 = vmatprep.subr.mxu0 0.0
    %1644 = vmatpush1.xpose.msra.mxu0 0.0
    %1645 = vmatprep.subr.mxu0 0.0
    %1646 = vmatpush1.xpose.msra.mxu0 0.0
    %1647 = vmatprep.mubr.f32.mxu0 0.0
    %1648 = vmatmul.mubr.f32.gmra.mrb[0].mxu0 %v1578
    %v1649 = vpop.f32.mrb[0].mxu0
    %v1650 = vadd.f32 0.0, %v1649
    %v1651 = vpop.f32.mrb[0].mxu0
    %1652 = vdwg.mxu0
    %v1654 = vsel %vm1424, %v1315, 0
    %v1657 = vsel %vm1424, %v1419, 0
    %1659 = vmatprep.subr.mxu0 0.0
    %1660 = vmatpush1.xpose.msra.mxu0 %v1657
    %1661 = vmatprep.subr.mxu0 0.0
    %1662 = vmatpush1.xpose.msra.mxu0 0.0
    %1663 = vmatprep.subr.mxu0 0.0
    %1664 = vmatpush1.xpose.msra.mxu0 0.0
    %1665 = vmatprep.subr.mxu0 0.0
    %1666 = vmatpush1.xpose.msra.mxu0 0.0
    %1667 = vmatprep.subr.mxu0 0.0
    %1668 = vmatpush1.xpose.msra.mxu0 0.0
    %1669 = vmatprep.subr.mxu0 0.0
    %1670 = vmatpush1.xpose.msra.mxu0 0.0
    %1671 = vmatprep.subr.mxu0 0.0
    %1672 = vmatpush1.xpose.msra.mxu0 0.0
    %1673 = vmatprep.subr.mxu0 0.0
    %1674 = vmatpush1.xpose.msra.mxu0 0.0
    %1675 = vmatprep.subr.mxu0 0.0
    %1676 = vmatpush1.xpose.msra.mxu0 0.0
    %1677 = vmatprep.subr.mxu0 0.0
    %1678 = vmatpush1.xpose.msra.mxu0 0.0
    %1679 = vmatprep.subr.mxu0 0.0
    %1680 = vmatpush1.xpose.msra.mxu0 0.0
    %1681 = vmatprep.subr.mxu0 0.0
    %1682 = vmatpush1.xpose.msra.mxu0 0.0
    %1683 = vmatprep.subr.mxu0 0.0
    %1684 = vmatpush1.xpose.msra.mxu0 0.0
    %1685 = vmatprep.subr.mxu0 0.0
    %1686 = vmatpush1.xpose.msra.mxu0 0.0
    %1687 = vmatprep.subr.mxu0 0.0
    %1688 = vmatpush1.xpose.msra.mxu0 0.0
    %1689 = vmatprep.subr.mxu0 0.0
    %1690 = vmatpush1.xpose.msra.mxu0 0.0
    %1691 = vmatprep.subr.mxu0 0.0
    %1692 = vmatpush1.xpose.msra.mxu0 0.0
    %1693 = vmatprep.subr.mxu0 0.0
    %1694 = vmatpush1.xpose.msra.mxu0 0.0
    %1695 = vmatprep.subr.mxu0 0.0
    %1696 = vmatpush1.xpose.msra.mxu0 0.0
    %1697 = vmatprep.subr.mxu0 0.0
    %1698 = vmatpush1.xpose.msra.mxu0 0.0
    %1699 = vmatprep.subr.mxu0 0.0
    %1700 = vmatpush1.xpose.msra.mxu0 0.0
    %1701 = vmatprep.subr.mxu0 0.0
    %1702 = vmatpush1.xpose.msra.mxu0 0.0
    %1703 = vmatprep.subr.mxu0 0.0
    %1704 = vmatpush1.xpose.msra.mxu0 0.0
    %1705 = vmatprep.subr.mxu0 0.0
    %1706 = vmatpush1.xpose.msra.mxu0 0.0
    %1707 = vmatprep.subr.mxu0 0.0
    %1708 = vmatpush1.xpose.msra.mxu0 0.0
    %1709 = vmatprep.subr.mxu0 0.0
    %1710 = vmatpush1.xpose.msra.mxu0 0.0
    %1711 = vmatprep.subr.mxu0 0.0
    %1712 = vmatpush1.xpose.msra.mxu0 0.0
    %1713 = vmatprep.subr.mxu0 0.0
    %1714 = vmatpush1.xpose.msra.mxu0 0.0
    %1715 = vmatprep.subr.mxu0 0.0
    %1716 = vmatpush1.xpose.msra.mxu0 0.0
    %1717 = vmatprep.subr.mxu0 0.0
    %1718 = vmatpush1.xpose.msra.mxu0 0.0
    %1719 = vmatprep.subr.mxu0 0.0
    %1720 = vmatpush1.xpose.msra.mxu0 0.0
    %1721 = vmatprep.subr.mxu0 0.0
    %1722 = vmatpush1.xpose.msra.mxu0 0.0
    %1723 = vmatprep.mubr.f32.mxu0 0.0
    %1724 = vmatmul.mubr.f32.gmra.mrb[0].mxu0 %v1654
    %v1725 = vpop.f32.mrb[0].mxu0
    %v1726 = vadd.f32 0.0, %v1725
    %v1727 = vpop.f32.mrb[0].mxu0
    %1728 = vdwg.mxu0
    %v1730 = vsel %vm1424, %v1316, 0
    %v1733 = vsel %vm1424, %v1420, 0
    %1735 = vmatprep.subr.mxu0 0.0
    %1736 = vmatpush1.xpose.msra.mxu0 %v1733
    %1737 = vmatprep.subr.mxu0 0.0
    %1738 = vmatpush1.xpose.msra.mxu0 0.0
    %1739 = vmatprep.subr.mxu0 0.0
    %1740 = vmatpush1.xpose.msra.mxu0 0.0
    %1741 = vmatprep.subr.mxu0 0.0
    %1742 = vmatpush1.xpose.msra.mxu0 0.0
    %1743 = vmatprep.subr.mxu0 0.0
    %1744 = vmatpush1.xpose.msra.mxu0 0.0
    %1745 = vmatprep.subr.mxu0 0.0
    %1746 = vmatpush1.xpose.msra.mxu0 0.0
    %1747 = vmatprep.subr.mxu0 0.0
    %1748 = vmatpush1.xpose.msra.mxu0 0.0
    %1749 = vmatprep.subr.mxu0 0.0
    %1750 = vmatpush1.xpose.msra.mxu0 0.0
    %1751 = vmatprep.subr.mxu0 0.0
    %1752 = vmatpush1.xpose.msra.mxu0 0.0
    %1753 = vmatprep.subr.mxu0 0.0
    %1754 = vmatpush1.xpose.msra.mxu0 0.0
    %1755 = vmatprep.subr.mxu0 0.0
    %1756 = vmatpush1.xpose.msra.mxu0 0.0
    %1757 = vmatprep.subr.mxu0 0.0
    %1758 = vmatpush1.xpose.msra.mxu0 0.0
    %1759 = vmatprep.subr.mxu0 0.0
    %1760 = vmatpush1.xpose.msra.mxu0 0.0
    %1761 = vmatprep.subr.mxu0 0.0
    %1762 = vmatpush1.xpose.msra.mxu0 0.0
    %1763 = vmatprep.subr.mxu0 0.0
    %1764 = vmatpush1.xpose.msra.mxu0 0.0
    %1765 = vmatprep.subr.mxu0 0.0
    %1766 = vmatpush1.xpose.msra.mxu0 0.0
    %1767 = vmatprep.subr.mxu0 0.0
    %1768 = vmatpush1.xpose.msra.mxu0 0.0
    %1769 = vmatprep.subr.mxu0 0.0
    %1770 = vmatpush1.xpose.msra.mxu0 0.0
    %1771 = vmatprep.subr.mxu0 0.0
    %1772 = vmatpush1.xpose.msra.mxu0 0.0
    %1773 = vmatprep.subr.mxu0 0.0
    %1774 = vmatpush1.xpose.msra.mxu0 0.0
    %1775 = vmatprep.subr.mxu0 0.0
    %1776 = vmatpush1.xpose.msra.mxu0 0.0
    %1777 = vmatprep.subr.mxu0 0.0
    %1778 = vmatpush1.xpose.msra.mxu0 0.0
    %1779 = vmatprep.subr.mxu0 0.0
    %1780 = vmatpush1.xpose.msra.mxu0 0.0
    %1781 = vmatprep.subr.mxu0 0.0
    %1782 = vmatpush1.xpose.msra.mxu0 0.0
    %1783 = vmatprep.subr.mxu0 0.0
    %1784 = vmatpush1.xpose.msra.mxu0 0.0
    %1785 = vmatprep.subr.mxu0 0.0
    %1786 = vmatpush1.xpose.msra.mxu0 0.0
    %1787 = vmatprep.subr.mxu0 0.0
    %1788 = vmatpush1.xpose.msra.mxu0 0.0
    %1789 = vmatprep.subr.mxu0 0.0
    %1790 = vmatpush1.xpose.msra.mxu0 0.0
    %1791 = vmatprep.subr.mxu0 0.0
    %1792 = vmatpush1.xpose.msra.mxu0 0.0
    %1793 = vmatprep.subr.mxu0 0.0
    %1794 = vmatpush1.xpose.msra.mxu0 0.0
    %1795 = vmatprep.subr.mxu0 0.0
    %1796 = vmatpush1.xpose.msra.mxu0 0.0
    %1797 = vmatprep.subr.mxu0 0.0
    %1798 = vmatpush1.xpose.msra.mxu0 0.0
    %1799 = vmatprep.mubr.f32.mxu0 0.0
    %1800 = vmatmul.mubr.f32.gmra.mrb[0].mxu0 %v1730
    %v1801 = vpop.f32.mrb[0].mxu0
    %v1802 = vadd.f32 0.0, %v1801
    %v1803 = vpop.f32.mrb[0].mxu0
    %1804 = vdwg.mxu0
    %v1806 = vsel %vm1424, %v1317, 0
    %v1809 = vsel %vm1424, %v1421, 0
    %1811 = vmatprep.subr.mxu0 0.0
    %1812 = vmatpush1.xpose.msra.mxu0 %v1809
    %1813 = vmatprep.subr.mxu0 0.0
    %1814 = vmatpush1.xpose.msra.mxu0 0.0
    %1815 = vmatprep.subr.mxu0 0.0
    %1816 = vmatpush1.xpose.msra.mxu0 0.0
    %1817 = vmatprep.subr.mxu0 0.0
    %1818 = vmatpush1.xpose.msra.mxu0 0.0
    %1819 = vmatprep.subr.mxu0 0.0
    %1820 = vmatpush1.xpose.msra.mxu0 0.0
    %1821 = vmatprep.subr.mxu0 0.0
    %1822 = vmatpush1.xpose.msra.mxu0 0.0
    %1823 = vmatprep.subr.mxu0 0.0
    %1824 = vmatpush1.xpose.msra.mxu0 0.0
    %1825 = vmatprep.subr.mxu0 0.0
    %1826 = vmatpush1.xpose.msra.mxu0 0.0
    %1827 = vmatprep.subr.mxu0 0.0
    %1828 = vmatpush1.xpose.msra.mxu0 0.0
    %1829 = vmatprep.subr.mxu0 0.0
    %1830 = vmatpush1.xpose.msra.mxu0 0.0
    %1831 = vmatprep.subr.mxu0 0.0
    %1832 = vmatpush1.xpose.msra.mxu0 0.0
    %1833 = vmatprep.subr.mxu0 0.0
    %1834 = vmatpush1.xpose.msra.mxu0 0.0
    %1835 = vmatprep.subr.mxu0 0.0
    %1836 = vmatpush1.xpose.msra.mxu0 0.0
    %1837 = vmatprep.subr.mxu0 0.0
    %1838 = vmatpush1.xpose.msra.mxu0 0.0
    %1839 = vmatprep.subr.mxu0 0.0
    %1840 = vmatpush1.xpose.msra.mxu0 0.0
    %1841 = vmatprep.subr.mxu0 0.0
    %1842 = vmatpush1.xpose.msra.mxu0 0.0
    %1843 = vmatprep.subr.mxu0 0.0
    %1844 = vmatpush1.xpose.msra.mxu0 0.0
    %1845 = vmatprep.subr.mxu0 0.0
    %1846 = vmatpush1.xpose.msra.mxu0 0.0
    %1847 = vmatprep.subr.mxu0 0.0
    %1848 = vmatpush1.xpose.msra.mxu0 0.0
    %1849 = vmatprep.subr.mxu0 0.0
    %1850 = vmatpush1.xpose.msra.mxu0 0.0
    %1851 = vmatprep.subr.mxu0 0.0
    %1852 = vmatpush1.xpose.msra.mxu0 0.0
    %1853 = vmatprep.subr.mxu0 0.0
    %1854 = vmatpush1.xpose.msra.mxu0 0.0
    %1855 = vmatprep.subr.mxu0 0.0
    %1856 = vmatpush1.xpose.msra.mxu0 0.0
    %1857 = vmatprep.subr.mxu0 0.0
    %1858 = vmatpush1.xpose.msra.mxu0 0.0
    %1859 = vmatprep.subr.mxu0 0.0
    %1860 = vmatpush1.xpose.msra.mxu0 0.0
    %1861 = vmatprep.subr.mxu0 0.0
    %1862 = vmatpush1.xpose.msra.mxu0 0.0
    %1863 = vmatprep.subr.mxu0 0.0
    %1864 = vmatpush1.xpose.msra.mxu0 0.0
    %1865 = vmatprep.subr.mxu0 0.0
    %1866 = vmatpush1.xpose.msra.mxu0 0.0
    %1867 = vmatprep.subr.mxu0 0.0
    %1868 = vmatpush1.xpose.msra.mxu0 0.0
    %1869 = vmatprep.subr.mxu0 0.0
    %1870 = vmatpush1.xpose.msra.mxu0 0.0
    %1871 = vmatprep.subr.mxu0 0.0
    %1872 = vmatpush1.xpose.msra.mxu0 0.0
    %1873 = vmatprep.subr.mxu0 0.0
    %1874 = vmatpush1.xpose.msra.mxu0 0.0
    %1875 = vmatprep.mubr.f32.mxu0 0.0
    %1876 = vmatmul.mubr.f32.gmra.mrb[0].mxu0 %v1806
    %v1877 = vpop.f32.mrb[0].mxu0
    %v1878 = vadd.f32 0.0, %v1877
    %v1879 = vpop.f32.mrb[0].mxu0
    %1880 = vdwg.mxu0
    %v1882 = vsel %vm1424, %v1318, 0
    %v1885 = vsel %vm1424, %v1422, 0
    %1887 = vmatprep.subr.mxu0 0.0
    %1888 = vmatpush1.xpose.msra.mxu0 %v1885
    %1889 = vmatprep.subr.mxu0 0.0
    %1890 = vmatpush1.xpose.msra.mxu0 0.0
    %1891 = vmatprep.subr.mxu0 0.0
    %1892 = vmatpush1.xpose.msra.mxu0 0.0
    %1893 = vmatprep.subr.mxu0 0.0
    %1894 = vmatpush1.xpose.msra.mxu0 0.0
    %1895 = vmatprep.subr.mxu0 0.0
    %1896 = vmatpush1.xpose.msra.mxu0 0.0
    %1897 = vmatprep.subr.mxu0 0.0
    %1898 = vmatpush1.xpose.msra.mxu0 0.0
    %1899 = vmatprep.subr.mxu0 0.0
    %1900 = vmatpush1.xpose.msra.mxu0 0.0
    %1901 = vmatprep.subr.mxu0 0.0
    %1902 = vmatpush1.xpose.msra.mxu0 0.0
    %1903 = vmatprep.subr.mxu0 0.0
    %1904 = vmatpush1.xpose.msra.mxu0 0.0
    %1905 = vmatprep.subr.mxu0 0.0
    %1906 = vmatpush1.xpose.msra.mxu0 0.0
    %1907 = vmatprep.subr.mxu0 0.0
    %1908 = vmatpush1.xpose.msra.mxu0 0.0
    %1909 = vmatprep.subr.mxu0 0.0
    %1910 = vmatpush1.xpose.msra.mxu0 0.0
    %1911 = vmatprep.subr.mxu0 0.0
    %1912 = vmatpush1.xpose.msra.mxu0 0.0
    %1913 = vmatprep.subr.mxu0 0.0
    %1914 = vmatpush1.xpose.msra.mxu0 0.0
    %1915 = vmatprep.subr.mxu0 0.0
    %1916 = vmatpush1.xpose.msra.mxu0 0.0
    %1917 = vmatprep.subr.mxu0 0.0
    %1918 = vmatpush1.xpose.msra.mxu0 0.0
    %1919 = vmatprep.subr.mxu0 0.0
    %1920 = vmatpush1.xpose.msra.mxu0 0.0
    %1921 = vmatprep.subr.mxu0 0.0
    %1922 = vmatpush1.xpose.msra.mxu0 0.0
    %1923 = vmatprep.subr.mxu0 0.0
    %1924 = vmatpush1.xpose.msra.mxu0 0.0
    %1925 = vmatprep.subr.mxu0 0.0
    %1926 = vmatpush1.xpose.msra.mxu0 0.0
    %1927 = vmatprep.subr.mxu0 0.0
    %1928 = vmatpush1.xpose.msra.mxu0 0.0
    %1929 = vmatprep.subr.mxu0 0.0
    %1930 = vmatpush1.xpose.msra.mxu0 0.0
    %1931 = vmatprep.subr.mxu0 0.0
    %1932 = vmatpush1.xpose.msra.mxu0 0.0
    %1933 = vmatprep.subr.mxu0 0.0
    %1934 = vmatpush1.xpose.msra.mxu0 0.0
    %1935 = vmatprep.subr.mxu0 0.0
    %1936 = vmatpush1.xpose.msra.mxu0 0.0
    %1937 = vmatprep.subr.mxu0 0.0
    %1938 = vmatpush1.xpose.msra.mxu0 0.0
    %1939 = vmatprep.subr.mxu0 0.0
    %1940 = vmatpush1.xpose.msra.mxu0 0.0
    %1941 = vmatprep.subr.mxu0 0.0
    %1942 = vmatpush1.xpose.msra.mxu0 0.0
    %1943 = vmatprep.subr.mxu0 0.0
    %1944 = vmatpush1.xpose.msra.mxu0 0.0
    %1945 = vmatprep.subr.mxu0 0.0
    %1946 = vmatpush1.xpose.msra.mxu0 0.0
    %1947 = vmatprep.subr.mxu0 0.0
    %1948 = vmatpush1.xpose.msra.mxu0 0.0
    %1949 = vmatprep.subr.mxu0 0.0
    %1950 = vmatpush1.xpose.msra.mxu0 0.0
    %1951 = vmatprep.mubr.f32.mxu0 0.0
    %1952 = vmatmul.mubr.f32.gmra.mrb[0].mxu0 %v1882
    %v1953 = vpop.f32.mrb[0].mxu0
    %v1954 = vadd.f32 0.0, %v1953
    %v1955 = vpop.f32.mrb[0].mxu0
    %1956 = vdwg.mxu0
    %v1958 = vsel %vm1424, %v1319, 0
    %v1961 = vsel %vm1424, %v1423, 0
    %1963 = vmatprep.subr.mxu0 0.0
    %1964 = vmatpush1.xpose.msra.mxu0 %v1961
    %1965 = vmatprep.subr.mxu0 0.0
    %1966 = vmatpush1.xpose.msra.mxu0 0.0
    %1967 = vmatprep.subr.mxu0 0.0
    %1968 = vmatpush1.xpose.msra.mxu0 0.0
    %1969 = vmatprep.subr.mxu0 0.0
    %1970 = vmatpush1.xpose.msra.mxu0 0.0
    %1971 = vmatprep.subr.mxu0 0.0
    %1972 = vmatpush1.xpose.msra.mxu0 0.0
    %1973 = vmatprep.subr.mxu0 0.0
    %1974 = vmatpush1.xpose.msra.mxu0 0.0
    %1975 = vmatprep.subr.mxu0 0.0
    %1976 = vmatpush1.xpose.msra.mxu0 0.0
    %1977 = vmatprep.subr.mxu0 0.0
    %1978 = vmatpush1.xpose.msra.mxu0 0.0
    %1979 = vmatprep.subr.mxu0 0.0
    %1980 = vmatpush1.xpose.msra.mxu0 0.0
    %1981 = vmatprep.subr.mxu0 0.0
    %1982 = vmatpush1.xpose.msra.mxu0 0.0
    %1983 = vmatprep.subr.mxu0 0.0
    %1984 = vmatpush1.xpose.msra.mxu0 0.0
    %1985 = vmatprep.subr.mxu0 0.0
    %1986 = vmatpush1.xpose.msra.mxu0 0.0
    %1987 = vmatprep.subr.mxu0 0.0
    %1988 = vmatpush1.xpose.msra.mxu0 0.0
    %1989 = vmatprep.subr.mxu0 0.0
    %1990 = vmatpush1.xpose.msra.mxu0 0.0
    %1991 = vmatprep.subr.mxu0 0.0
    %1992 = vmatpush1.xpose.msra.mxu0 0.0
    %1993 = vmatprep.subr.mxu0 0.0
    %1994 = vmatpush1.xpose.msra.mxu0 0.0
    %1995 = vmatprep.subr.mxu0 0.0
    %1996 = vmatpush1.xpose.msra.mxu0 0.0
    %1997 = vmatprep.subr.mxu0 0.0
    %1998 = vmatpush1.xpose.msra.mxu0 0.0
    %1999 = vmatprep.subr.mxu0 0.0
    %2000 = vmatpush1.xpose.msra.mxu0 0.0
    %2001 = vmatprep.subr.mxu0 0.0
    %2002 = vmatpush1.xpose.msra.mxu0 0.0
    %2003 = vmatprep.subr.mxu0 0.0
    %2004 = vmatpush1.xpose.msra.mxu0 0.0
    %2005 = vmatprep.subr.mxu0 0.0
    %2006 = vmatpush1.xpose.msra.mxu0 0.0
    %2007 = vmatprep.subr.mxu0 0.0
    %2008 = vmatpush1.xpose.msra.mxu0 0.0
    %2009 = vmatprep.subr.mxu0 0.0
    %2010 = vmatpush1.xpose.msra.mxu0 0.0
    %2011 = vmatprep.subr.mxu0 0.0
    %2012 = vmatpush1.xpose.msra.mxu0 0.0
    %2013 = vmatprep.subr.mxu0 0.0
    %2014 = vmatpush1.xpose.msra.mxu0 0.0
    %2015 = vmatprep.subr.mxu0 0.0
    %2016 = vmatpush1.xpose.msra.mxu0 0.0
    %2017 = vmatprep.subr.mxu0 0.0
    %2018 = vmatpush1.xpose.msra.mxu0 0.0
    %2019 = vmatprep.subr.mxu0 0.0
    %2020 = vmatpush1.xpose.msra.mxu0 0.0
    %2021 = vmatprep.subr.mxu0 0.0
    %2022 = vmatpush1.xpose.msra.mxu0 0.0
    %2023 = vmatprep.subr.mxu0 0.0
    %2024 = vmatpush1.xpose.msra.mxu0 0.0
    %2025 = vmatprep.subr.mxu0 0.0
    %2026 = vmatpush1.xpose.msra.mxu0 0.0
    %2027 = vmatprep.mubr.f32.mxu0 0.0
    %2028 = vmatmul.mubr.f32.gmra.mrb[0].mxu0 %v1958
    %v2029 = vpop.f32.mrb[0].mxu0
    %v2030 = vadd.f32 0.0, %v2029
    %v2031 = vpop.f32.mrb[0].mxu0
    %2032 = vdwg.mxu0
    %v2033 = vlaneseq
    %v2034 = vshrl.u32 %v2033, 7
    %v2035 = vlaneseq
    %v2036 = vand.u32 %v2035, 127
    %vm2037 = vcmp.le.s32.totalorder %v2036, %v2034
    %v2038 = vsel %vm2037, 1, 0
    %vm2039 = vcmp.eq.s32.totalorder %v2038, 1
    %v2040 = vsel %vm2039, %v1498, -1e+30
    %v2041 = vsel %vm2039, %v1574, -1e+30
    %v2042 = vsel %vm2039, %v1650, -1e+30
    %v2043 = vsel %vm2039, %v1726, -1e+30
    %v2044 = vsel %vm2039, %v1802, -1e+30
    %v2045 = vsel %vm2039, %v1878, -1e+30
    %v2046 = vsel %vm2039, %v1954, -1e+30
    %v2047 = vsel %vm2039, %v2030, -1e+30
    %v2048 = vsel %vm1279, %v2040, -inf
    %2049 = vmax.xlane.f32.xlu0 %v2048
    %v2050 = vpop.xlane.xlu0 %2049
    %v2051 = vsel %vm1279, %v2041, -inf
    %2052 = vmax.xlane.f32.xlu0 %v2051
    %v2053 = vpop.xlane.xlu0 %2052
    %v2054 = vsel %vm1279, %v2042, -inf
    %2055 = vmax.xlane.f32.xlu0 %v2054
    %v2056 = vpop.xlane.xlu0 %2055
    %v2057 = vsel %vm1279, %v2043, -inf
    %2058 = vmax.xlane.f32.xlu0 %v2057
    %v2059 = vpop.xlane.xlu0 %2058
    %v2060 = vsel %vm1279, %v2044, -inf
    %2061 = vmax.xlane.f32.xlu0 %v2060
    %v2062 = vpop.xlane.xlu0 %2061
    %v2063 = vsel %vm1279, %v2045, -inf
    %2064 = vmax.xlane.f32.xlu0 %v2063
    %v2065 = vpop.xlane.xlu0 %2064
    %v2066 = vsel %vm1279, %v2046, -inf
    %2067 = vmax.xlane.f32.xlu0 %v2066
    %v2068 = vpop.xlane.xlu0 %2067
    %v2069 = vsel %vm1279, %v2047, -inf
    %2070 = vmax.xlane.f32.xlu0 %v2069
    %v2071 = vpop.xlane.xlu0 %2070
    %v2072 = vsub.f32 -inf, %v2050
    %v2073 = vsub.f32 -inf, %v2053
    %v2074 = vsub.f32 -inf, %v2056
    %v2075 = vsub.f32 -inf, %v2059
    %v2076 = vsub.f32 -inf, %v2062
    %v2077 = vsub.f32 -inf, %v2065
    %v2078 = vsub.f32 -inf, %v2068
    %v2079 = vsub.f32 -inf, %v2071
    %v2080 = vmul.f32 %v2072, 1.442695
    %v2081 = vpow.pop %v2080
    %v2082 = vmul.f32 %v2073, 1.442695
    %v2083 = vpow.pop %v2082
    %v2084 = vmul.f32 %v2074, 1.442695
    %v2085 = vpow.pop %v2084
    %v2086 = vmul.f32 %v2075, 1.442695
    %v2087 = vpow.pop %v2086
    %v2088 = vmul.f32 %v2076, 1.442695
    %v2089 = vpow.pop %v2088
    %v2090 = vmul.f32 %v2077, 1.442695
    %v2091 = vpow.pop %v2090
    %v2092 = vmul.f32 %v2078, 1.442695
    %v2093 = vpow.pop %v2092
    %v2094 = vmul.f32 %v2079, 1.442695
    %v2095 = vpow.pop %v2094
    %v2096 = vsub.f32 %v2040, %v2050
    %v2097 = vsub.f32 %v2041, %v2053
    %v2098 = vsub.f32 %v2042, %v2056
    %v2099 = vsub.f32 %v2043, %v2059
    %v2100 = vsub.f32 %v2044, %v2062
    %v2101 = vsub.f32 %v2045, %v2065
    %v2102 = vsub.f32 %v2046, %v2068
    %v2103 = vsub.f32 %v2047, %v2071
    %v2104 = vmul.f32 %v2096, 1.442695
    %v2105 = vpow.pop %v2104
    %v2106 = vmul.f32 %v2097, 1.442695
    %v2107 = vpow.pop %v2106
    %v2108 = vmul.f32 %v2098, 1.442695
    %v2109 = vpow.pop %v2108
    %v2110 = vmul.f32 %v2099, 1.442695
    %v2111 = vpow.pop %v2110
    %v2112 = vmul.f32 %v2100, 1.442695
    %v2113 = vpow.pop %v2112
    %v2114 = vmul.f32 %v2101, 1.442695
    %v2115 = vpow.pop %v2114
    %v2116 = vmul.f32 %v2102, 1.442695
    %v2117 = vpow.pop %v2116
    %v2118 = vmul.f32 %v2103, 1.442695
    %v2119 = vpow.pop %v2118
    %v2120 = vmul.f32 %v2081, 0.0
    %v2121 = vmul.f32 %v2083, 0.0
    %v2122 = vmul.f32 %v2085, 0.0
    %v2123 = vmul.f32 %v2087, 0.0
    %v2124 = vmul.f32 %v2089, 0.0
    %v2125 = vmul.f32 %v2091, 0.0
    %v2126 = vmul.f32 %v2093, 0.0
    %v2127 = vmul.f32 %v2095, 0.0
    %v2128 = vsel %vm1279, %v2105, 0.0
    %2129 = vadd.xlane.f32.xlu0 %v2128
    %v2130 = vpop.xlane.xlu0 %2129
    %v2131 = vsel %vm1279, %v2107, 0.0
    %2132 = vadd.xlane.f32.xlu0 %v2131
    %v2133 = vpop.xlane.xlu0 %2132
    %v2134 = vsel %vm1279, %v2109, 0.0
    %2135 = vadd.xlane.f32.xlu0 %v2134
    %v2136 = vpop.xlane.xlu0 %2135
    %v2137 = vsel %vm1279, %v2111, 0.0
    %2138 = vadd.xlane.f32.xlu0 %v2137
    %v2139 = vpop.xlane.xlu0 %2138
    %v2140 = vsel %vm1279, %v2113, 0.0
    %2141 = vadd.xlane.f32.xlu0 %v2140
    %v2142 = vpop.xlane.xlu0 %2141
    %v2143 = vsel %vm1279, %v2115, 0.0
    %2144 = vadd.xlane.f32.xlu0 %v2143
    %v2145 = vpop.xlane.xlu0 %2144
    %v2146 = vsel %vm1279, %v2117, 0.0
    %2147 = vadd.xlane.f32.xlu0 %v2146
    %v2148 = vpop.xlane.xlu0 %2147
    %v2149 = vsel %vm1279, %v2119, 0.0
    %2150 = vadd.xlane.f32.xlu0 %v2149
    %v2151 = vpop.xlane.xlu0 %2150
    %v2152 = vadd.f32 %v2120, %v2130
    %v2153 = vadd.f32 %v2121, %v2133
    %v2154 = vadd.f32 %v2122, %v2136
    %v2155 = vadd.f32 %v2123, %v2139
    %v2156 = vadd.f32 %v2124, %v2142
    %v2157 = vadd.f32 %v2125, %v2145
    %v2158 = vadd.f32 %v2126, %v2148
    %v2159 = vadd.f32 %v2127, %v2151
    %v2161 = vsel %vm1279, %v2105, 0
    %2163 = vmatprep.subr.mxu0 0.0
    %2164 = vmatpush1.msra.mxu0 %v1133
    %2165 = vmatprep.subr.mxu0 0.0
    %2166 = vmatpush1.msra.mxu0 0.0
    %2167 = vmatprep.subr.mxu0 0.0
    %2168 = vmatpush1.msra.mxu0 0.0
    %2169 = vmatprep.subr.mxu0 0.0
    %2170 = vmatpush1.msra.mxu0 0.0
    %2171 = vmatprep.subr.mxu0 0.0
    %2172 = vmatpush1.msra.mxu0 0.0
    %2173 = vmatprep.subr.mxu0 0.0
    %2174 = vmatpush1.msra.mxu0 0.0
    %2175 = vmatprep.subr.mxu0 0.0
    %2176 = vmatpush1.msra.mxu0 0.0
    %2177 = vmatprep.subr.mxu0 0.0
    %2178 = vmatpush1.msra.mxu0 0.0
    %2179 = vmatprep.subr.mxu0 0.0
    %2180 = vmatpush1.msra.mxu0 0.0
    %2181 = vmatprep.subr.mxu0 0.0
    %2182 = vmatpush1.msra.mxu0 0.0
    %2183 = vmatprep.subr.mxu0 0.0
    %2184 = vmatpush1.msra.mxu0 0.0
    %2185 = vmatprep.subr.mxu0 0.0
    %2186 = vmatpush1.msra.mxu0 0.0
    %2187 = vmatprep.subr.mxu0 0.0
    %2188 = vmatpush1.msra.mxu0 0.0
    %2189 = vmatprep.subr.mxu0 0.0
    %2190 = vmatpush1.msra.mxu0 0.0
    %2191 = vmatprep.subr.mxu0 0.0
    %2192 = vmatpush1.msra.mxu0 0.0
    %2193 = vmatprep.subr.mxu0 0.0
    %2194 = vmatpush1.msra.mxu0 0.0
    %2195 = vmatprep.subr.mxu0 0.0
    %2196 = vmatpush1.msra.mxu0 0.0
    %2197 = vmatprep.subr.mxu0 0.0
    %2198 = vmatpush1.msra.mxu0 0.0
    %2199 = vmatprep.subr.mxu0 0.0
    %2200 = vmatpush1.msra.mxu0 0.0
    %2201 = vmatprep.subr.mxu0 0.0
    %2202 = vmatpush1.msra.mxu0 0.0
    %2203 = vmatprep.subr.mxu0 0.0
    %2204 = vmatpush1.msra.mxu0 0.0
    %2205 = vmatprep.subr.mxu0 0.0
    %2206 = vmatpush1.msra.mxu0 0.0
    %2207 = vmatprep.subr.mxu0 0.0
    %2208 = vmatpush1.msra.mxu0 0.0
    %2209 = vmatprep.subr.mxu0 0.0
    %2210 = vmatpush1.msra.mxu0 0.0
    %2211 = vmatprep.subr.mxu0 0.0
    %2212 = vmatpush1.msra.mxu0 0.0
    %2213 = vmatprep.subr.mxu0 0.0
    %2214 = vmatpush1.msra.mxu0 0.0
    %2215 = vmatprep.subr.mxu0 0.0
    %2216 = vmatpush1.msra.mxu0 0.0
    %2217 = vmatprep.subr.mxu0 0.0
    %2218 = vmatpush1.msra.mxu0 0.0
    %2219 = vmatprep.subr.mxu0 0.0
    %2220 = vmatpush1.msra.mxu0 0.0
    %2221 = vmatprep.subr.mxu0 0.0
    %2222 = vmatpush1.msra.mxu0 0.0
    %2223 = vmatprep.subr.mxu0 0.0
    %2224 = vmatpush1.msra.mxu0 0.0
    %2225 = vmatprep.subr.mxu0 0.0
    %2226 = vmatpush1.msra.mxu0 0.0
    %2227 = vmatprep.mubr.f32.mxu0 0.0
    %2228 = vmatmul.mubr.f32.gmra.mrb[0].mxu0 %v2161
    %v2229 = vpop.f32.mrb[0].mxu0
    %v2230 = vadd.f32 0.0, %v2229
    %v2231 = vpop.f32.mrb[0].mxu0
    %2232 = vdwg.mxu0
    %v2234 = vsel %vm1279, %v2107, 0
    %2236 = vmatprep.subr.mxu0 0.0
    %2237 = vmatpush1.msra.mxu0 %v1134
    %2238 = vmatprep.subr.mxu0 0.0
    %2239 = vmatpush1.msra.mxu0 0.0
    %2240 = vmatprep.subr.mxu0 0.0
    %2241 = vmatpush1.msra.mxu0 0.0
    %2242 = vmatprep.subr.mxu0 0.0
    %2243 = vmatpush1.msra.mxu0 0.0
    %2244 = vmatprep.subr.mxu0 0.0
    %2245 = vmatpush1.msra.mxu0 0.0
    %2246 = vmatprep.subr.mxu0 0.0
    %2247 = vmatpush1.msra.mxu0 0.0
    %2248 = vmatprep.subr.mxu0 0.0
    %2249 = vmatpush1.msra.mxu0 0.0
    %2250 = vmatprep.subr.mxu0 0.0
    %2251 = vmatpush1.msra.mxu0 0.0
    %2252 = vmatprep.subr.mxu0 0.0
    %2253 = vmatpush1.msra.mxu0 0.0
    %2254 = vmatprep.subr.mxu0 0.0
    %2255 = vmatpush1.msra.mxu0 0.0
    %2256 = vmatprep.subr.mxu0 0.0
    %2257 = vmatpush1.msra.mxu0 0.0
    %2258 = vmatprep.subr.mxu0 0.0
    %2259 = vmatpush1.msra.mxu0 0.0
    %2260 = vmatprep.subr.mxu0 0.0
    %2261 = vmatpush1.msra.mxu0 0.0
    %2262 = vmatprep.subr.mxu0 0.0
    %2263 = vmatpush1.msra.mxu0 0.0
    %2264 = vmatprep.subr.mxu0 0.0
    %2265 = vmatpush1.msra.mxu0 0.0
    %2266 = vmatprep.subr.mxu0 0.0
    %2267 = vmatpush1.msra.mxu0 0.0
    %2268 = vmatprep.subr.mxu0 0.0
    %2269 = vmatpush1.msra.mxu0 0.0
    %2270 = vmatprep.subr.mxu0 0.0
    %2271 = vmatpush1.msra.mxu0 0.0
    %2272 = vmatprep.subr.mxu0 0.0
    %2273 = vmatpush1.msra.mxu0 0.0
    %2274 = vmatprep.subr.mxu0 0.0
    %2275 = vmatpush1.msra.mxu0 0.0
    %2276 = vmatprep.subr.mxu0 0.0
    %2277 = vmatpush1.msra.mxu0 0.0
    %2278 = vmatprep.subr.mxu0 0.0
    %2279 = vmatpush1.msra.mxu0 0.0
    %2280 = vmatprep.subr.mxu0 0.0
    %2281 = vmatpush1.msra.mxu0 0.0
    %2282 = vmatprep.subr.mxu0 0.0
    %2283 = vmatpush1.msra.mxu0 0.0
    %2284 = vmatprep.subr.mxu0 0.0
    %2285 = vmatpush1.msra.mxu0 0.0
    %2286 = vmatprep.subr.mxu0 0.0
    %2287 = vmatpush1.msra.mxu0 0.0
    %2288 = vmatprep.subr.mxu0 0.0
    %2289 = vmatpush1.msra.mxu0 0.0
    %2290 = vmatprep.subr.mxu0 0.0
    %2291 = vmatpush1.msra.mxu0 0.0
    %2292 = vmatprep.subr.mxu0 0.0
    %2293 = vmatpush1.msra.mxu0 0.0
    %2294 = vmatprep.subr.mxu0 0.0
    %2295 = vmatpush1.msra.mxu0 0.0
    %2296 = vmatprep.subr.mxu0 0.0
    %2297 = vmatpush1.msra.mxu0 0.0
    %2298 = vmatprep.subr.mxu0 0.0
    %2299 = vmatpush1.msra.mxu0 0.0
    %2300 = vmatprep.mubr.f32.mxu0 0.0
    %2301 = vmatmul.mubr.f32.gmra.mrb[0].mxu0 %v2234
    %v2302 = vpop.f32.mrb[0].mxu0
    %v2303 = vadd.f32 0.0, %v2302
    %v2304 = vpop.f32.mrb[0].mxu0
    %2305 = vdwg.mxu0
    %v2307 = vsel %vm1279, %v2109, 0
    %2309 = vmatprep.subr.mxu0 0.0
    %2310 = vmatpush1.msra.mxu0 %v1135
    %2311 = vmatprep.subr.mxu0 0.0
    %2312 = vmatpush1.msra.mxu0 0.0
    %2313 = vmatprep.subr.mxu0 0.0
    %2314 = vmatpush1.msra.mxu0 0.0
    %2315 = vmatprep.subr.mxu0 0.0
    %2316 = vmatpush1.msra.mxu0 0.0
    %2317 = vmatprep.subr.mxu0 0.0
    %2318 = vmatpush1.msra.mxu0 0.0
    %2319 = vmatprep.subr.mxu0 0.0
    %2320 = vmatpush1.msra.mxu0 0.0
    %2321 = vmatprep.subr.mxu0 0.0
    %2322 = vmatpush1.msra.mxu0 0.0
    %2323 = vmatprep.subr.mxu0 0.0
    %2324 = vmatpush1.msra.mxu0 0.0
    %2325 = vmatprep.subr.mxu0 0.0
    %2326 = vmatpush1.msra.mxu0 0.0
    %2327 = vmatprep.subr.mxu0 0.0
    %2328 = vmatpush1.msra.mxu0 0.0
    %2329 = vmatprep.subr.mxu0 0.0
    %2330 = vmatpush1.msra.mxu0 0.0
    %2331 = vmatprep.subr.mxu0 0.0
    %2332 = vmatpush1.msra.mxu0 0.0
    %2333 = vmatprep.subr.mxu0 0.0
    %2334 = vmatpush1.msra.mxu0 0.0
    %2335 = vmatprep.subr.mxu0 0.0
    %2336 = vmatpush1.msra.mxu0 0.0
    %2337 = vmatprep.subr.mxu0 0.0
    %2338 = vmatpush1.msra.mxu0 0.0
    %2339 = vmatprep.subr.mxu0 0.0
    %2340 = vmatpush1.msra.mxu0 0.0
    %2341 = vmatprep.subr.mxu0 0.0
    %2342 = vmatpush1.msra.mxu0 0.0
    %2343 = vmatprep.subr.mxu0 0.0
    %2344 = vmatpush1.msra.mxu0 0.0
    %2345 = vmatprep.subr.mxu0 0.0
    %2346 = vmatpush1.msra.mxu0 0.0
    %2347 = vmatprep.subr.mxu0 0.0
    %2348 = vmatpush1.msra.mxu0 0.0
    %2349 = vmatprep.subr.mxu0 0.0
    %2350 = vmatpush1.msra.mxu0 0.0
    %2351 = vmatprep.subr.mxu0 0.0
    %2352 = vmatpush1.msra.mxu0 0.0
    %2353 = vmatprep.subr.mxu0 0.0
    %2354 = vmatpush1.msra.mxu0 0.0
    %2355 = vmatprep.subr.mxu0 0.0
    %2356 = vmatpush1.msra.mxu0 0.0
    %2357 = vmatprep.subr.mxu0 0.0
    %2358 = vmatpush1.msra.mxu0 0.0
    %2359 = vmatprep.subr.mxu0 0.0
    %2360 = vmatpush1.msra.mxu0 0.0
    %2361 = vmatprep.subr.mxu0 0.0
    %2362 = vmatpush1.msra.mxu0 0.0
    %2363 = vmatprep.subr.mxu0 0.0
    %2364 = vmatpush1.msra.mxu0 0.0
    %2365 = vmatprep.subr.mxu0 0.0
    %2366 = vmatpush1.msra.mxu0 0.0
    %2367 = vmatprep.subr.mxu0 0.0
    %2368 = vmatpush1.msra.mxu0 0.0
    %2369 = vmatprep.subr.mxu0 0.0
    %2370 = vmatpush1.msra.mxu0 0.0
    %2371 = vmatprep.subr.mxu0 0.0
    %2372 = vmatpush1.msra.mxu0 0.0
    %2373 = vmatprep.mubr.f32.mxu0 0.0
    %2374 = vmatmul.mubr.f32.gmra.mrb[0].mxu0 %v2307
    %v2375 = vpop.f32.mrb[0].mxu0
    %v2376 = vadd.f32 0.0, %v2375
    %v2377 = vpop.f32.mrb[0].mxu0
    %2378 = vdwg.mxu0
    %v2380 = vsel %vm1279, %v2111, 0
    %2382 = vmatprep.subr.mxu0 0.0
    %2383 = vmatpush1.msra.mxu0 %v1136
    %2384 = vmatprep.subr.mxu0 0.0
    %2385 = vmatpush1.msra.mxu0 0.0
    %2386 = vmatprep.subr.mxu0 0.0
    %2387 = vmatpush1.msra.mxu0 0.0
    %2388 = vmatprep.subr.mxu0 0.0
    %2389 = vmatpush1.msra.mxu0 0.0
    %2390 = vmatprep.subr.mxu0 0.0
    %2391 = vmatpush1.msra.mxu0 0.0
    %2392 = vmatprep.subr.mxu0 0.0
    %2393 = vmatpush1.msra.mxu0 0.0
    %2394 = vmatprep.subr.mxu0 0.0
    %2395 = vmatpush1.msra.mxu0 0.0
    %2396 = vmatprep.subr.mxu0 0.0
    %2397 = vmatpush1.msra.mxu0 0.0
    %2398 = vmatprep.subr.mxu0 0.0
    %2399 = vmatpush1.msra.mxu0 0.0
    %2400 = vmatprep.subr.mxu0 0.0
    %2401 = vmatpush1.msra.mxu0 0.0
    %2402 = vmatprep.subr.mxu0 0.0
    %2403 = vmatpush1.msra.mxu0 0.0
    %2404 = vmatprep.subr.mxu0 0.0
    %2405 = vmatpush1.msra.mxu0 0.0
    %2406 = vmatprep.subr.mxu0 0.0
    %2407 = vmatpush1.msra.mxu0 0.0
    %2408 = vmatprep.subr.mxu0 0.0
    %2409 = vmatpush1.msra.mxu0 0.0
    %2410 = vmatprep.subr.mxu0 0.0
    %2411 = vmatpush1.msra.mxu0 0.0
    %2412 = vmatprep.subr.mxu0 0.0
    %2413 = vmatpush1.msra.mxu0 0.0
    %2414 = vmatprep.subr.mxu0 0.0
    %2415 = vmatpush1.msra.mxu0 0.0
    %2416 = vmatprep.subr.mxu0 0.0
    %2417 = vmatpush1.msra.mxu0 0.0
    %2418 = vmatprep.subr.mxu0 0.0
    %2419 = vmatpush1.msra.mxu0 0.0
    %2420 = vmatprep.subr.mxu0 0.0
    %2421 = vmatpush1.msra.mxu0 0.0
    %2422 = vmatprep.subr.mxu0 0.0
    %2423 = vmatpush1.msra.mxu0 0.0
    %2424 = vmatprep.subr.mxu0 0.0
    %2425 = vmatpush1.msra.mxu0 0.0
    %2426 = vmatprep.subr.mxu0 0.0
    %2427 = vmatpush1.msra.mxu0 0.0
    %2428 = vmatprep.subr.mxu0 0.0
    %2429 = vmatpush1.msra.mxu0 0.0
    %2430 = vmatprep.subr.mxu0 0.0
    %2431 = vmatpush1.msra.mxu0 0.0
    %2432 = vmatprep.subr.mxu0 0.0
    %2433 = vmatpush1.msra.mxu0 0.0
    %2434 = vmatprep.subr.mxu0 0.0
    %2435 = vmatpush1.msra.mxu0 0.0
    %2436 = vmatprep.subr.mxu0 0.0
    %2437 = vmatpush1.msra.mxu0 0.0
    %2438 = vmatprep.subr.mxu0 0.0
    %2439 = vmatpush1.msra.mxu0 0.0
    %2440 = vmatprep.subr.mxu0 0.0
    %2441 = vmatpush1.msra.mxu0 0.0
    %2442 = vmatprep.subr.mxu0 0.0
    %2443 = vmatpush1.msra.mxu0 0.0
    %2444 = vmatprep.subr.mxu0 0.0
    %2445 = vmatpush1.msra.mxu0 0.0
    %2446 = vmatprep.mubr.f32.mxu0 0.0
    %2447 = vmatmul.mubr.f32.gmra.mrb[0].mxu0 %v2380
    %v2448 = vpop.f32.mrb[0].mxu0
    %v2449 = vadd.f32 0.0, %v2448
    %v2450 = vpop.f32.mrb[0].mxu0
    %2451 = vdwg.mxu0
    %v2453 = vsel %vm1279, %v2113, 0
    %2455 = vmatprep.subr.mxu0 0.0
    %2456 = vmatpush1.msra.mxu0 %v1201
    %2457 = vmatprep.subr.mxu0 0.0
    %2458 = vmatpush1.msra.mxu0 0.0
    %2459 = vmatprep.subr.mxu0 0.0
    %2460 = vmatpush1.msra.mxu0 0.0
    %2461 = vmatprep.subr.mxu0 0.0
    %2462 = vmatpush1.msra.mxu0 0.0
    %2463 = vmatprep.subr.mxu0 0.0
    %2464 = vmatpush1.msra.mxu0 0.0
    %2465 = vmatprep.subr.mxu0 0.0
    %2466 = vmatpush1.msra.mxu0 0.0
    %2467 = vmatprep.subr.mxu0 0.0
    %2468 = vmatpush1.msra.mxu0 0.0
    %2469 = vmatprep.subr.mxu0 0.0
    %2470 = vmatpush1.msra.mxu0 0.0
    %2471 = vmatprep.subr.mxu0 0.0
    %2472 = vmatpush1.msra.mxu0 0.0
    %2473 = vmatprep.subr.mxu0 0.0
    %2474 = vmatpush1.msra.mxu0 0.0
    %2475 = vmatprep.subr.mxu0 0.0
    %2476 = vmatpush1.msra.mxu0 0.0
    %2477 = vmatprep.subr.mxu0 0.0
    %2478 = vmatpush1.msra.mxu0 0.0
    %2479 = vmatprep.subr.mxu0 0.0
    %2480 = vmatpush1.msra.mxu0 0.0
    %2481 = vmatprep.subr.mxu0 0.0
    %2482 = vmatpush1.msra.mxu0 0.0
    %2483 = vmatprep.subr.mxu0 0.0
    %2484 = vmatpush1.msra.mxu0 0.0
    %2485 = vmatprep.subr.mxu0 0.0
    %2486 = vmatpush1.msra.mxu0 0.0
    %2487 = vmatprep.subr.mxu0 0.0
    %2488 = vmatpush1.msra.mxu0 0.0
    %2489 = vmatprep.subr.mxu0 0.0
    %2490 = vmatpush1.msra.mxu0 0.0
    %2491 = vmatprep.subr.mxu0 0.0
    %2492 = vmatpush1.msra.mxu0 0.0
    %2493 = vmatprep.subr.mxu0 0.0
    %2494 = vmatpush1.msra.mxu0 0.0
    %2495 = vmatprep.subr.mxu0 0.0
    %2496 = vmatpush1.msra.mxu0 0.0
    %2497 = vmatprep.subr.mxu0 0.0
    %2498 = vmatpush1.msra.mxu0 0.0
    %2499 = vmatprep.subr.mxu0 0.0
    %2500 = vmatpush1.msra.mxu0 0.0
    %2501 = vmatprep.subr.mxu0 0.0
    %2502 = vmatpush1.msra.mxu0 0.0
    %2503 = vmatprep.subr.mxu0 0.0
    %2504 = vmatpush1.msra.mxu0 0.0
    %2505 = vmatprep.subr.mxu0 0.0
    %2506 = vmatpush1.msra.mxu0 0.0
    %2507 = vmatprep.subr.mxu0 0.0
    %2508 = vmatpush1.msra.mxu0 0.0
    %2509 = vmatprep.subr.mxu0 0.0
    %2510 = vmatpush1.msra.mxu0 0.0
    %2511 = vmatprep.subr.mxu0 0.0
    %2512 = vmatpush1.msra.mxu0 0.0
    %2513 = vmatprep.subr.mxu0 0.0
    %2514 = vmatpush1.msra.mxu0 0.0
    %2515 = vmatprep.subr.mxu0 0.0
    %2516 = vmatpush1.msra.mxu0 0.0
    %2517 = vmatprep.subr.mxu0 0.0
    %2518 = vmatpush1.msra.mxu0 0.0
    %2519 = vmatprep.mubr.f32.mxu0 0.0
    %2520 = vmatmul.mubr.f32.gmra.mrb[0].mxu0 %v2453
    %v2521 = vpop.f32.mrb[0].mxu0
    %v2522 = vadd.f32 0.0, %v2521
    %v2523 = vpop.f32.mrb[0].mxu0
    %2524 = vdwg.mxu0
    %v2526 = vsel %vm1279, %v2115, 0
    %2528 = vmatprep.subr.mxu0 0.0
    %2529 = vmatpush1.msra.mxu0 %v1202
    %2530 = vmatprep.subr.mxu0 0.0
    %2531 = vmatpush1.msra.mxu0 0.0
    %2532 = vmatprep.subr.mxu0 0.0
    %2533 = vmatpush1.msra.mxu0 0.0
    %2534 = vmatprep.subr.mxu0 0.0
    %2535 = vmatpush1.msra.mxu0 0.0
    %2536 = vmatprep.subr.mxu0 0.0
    %2537 = vmatpush1.msra.mxu0 0.0
    %2538 = vmatprep.subr.mxu0 0.0
    %2539 = vmatpush1.msra.mxu0 0.0
    %2540 = vmatprep.subr.mxu0 0.0
    %2541 = vmatpush1.msra.mxu0 0.0
    %2542 = vmatprep.subr.mxu0 0.0
    %2543 = vmatpush1.msra.mxu0 0.0
    %2544 = vmatprep.subr.mxu0 0.0
    %2545 = vmatpush1.msra.mxu0 0.0
    %2546 = vmatprep.subr.mxu0 0.0
    %2547 = vmatpush1.msra.mxu0 0.0
    %2548 = vmatprep.subr.mxu0 0.0
    %2549 = vmatpush1.msra.mxu0 0.0
    %2550 = vmatprep.subr.mxu0 0.0
    %2551 = vmatpush1.msra.mxu0 0.0
    %2552 = vmatprep.subr.mxu0 0.0
    %2553 = vmatpush1.msra.mxu0 0.0
    %2554 = vmatprep.subr.mxu0 0.0
    %2555 = vmatpush1.msra.mxu0 0.0
    %2556 = vmatprep.subr.mxu0 0.0
    %2557 = vmatpush1.msra.mxu0 0.0
    %2558 = vmatprep.subr.mxu0 0.0
    %2559 = vmatpush1.msra.mxu0 0.0
    %2560 = vmatprep.subr.mxu0 0.0
    %2561 = vmatpush1.msra.mxu0 0.0
    %2562 = vmatprep.subr.mxu0 0.0
    %2563 = vmatpush1.msra.mxu0 0.0
    %2564 = vmatprep.subr.mxu0 0.0
    %2565 = vmatpush1.msra.mxu0 0.0
    %2566 = vmatprep.subr.mxu0 0.0
    %2567 = vmatpush1.msra.mxu0 0.0
    %2568 = vmatprep.subr.mxu0 0.0
    %2569 = vmatpush1.msra.mxu0 0.0
    %2570 = vmatprep.subr.mxu0 0.0
    %2571 = vmatpush1.msra.mxu0 0.0
    %2572 = vmatprep.subr.mxu0 0.0
    %2573 = vmatpush1.msra.mxu0 0.0
    %2574 = vmatprep.subr.mxu0 0.0
    %2575 = vmatpush1.msra.mxu0 0.0
    %2576 = vmatprep.subr.mxu0 0.0
    %2577 = vmatpush1.msra.mxu0 0.0
    %2578 = vmatprep.subr.mxu0 0.0
    %2579 = vmatpush1.msra.mxu0 0.0
    %2580 = vmatprep.subr.mxu0 0.0
    %2581 = vmatpush1.msra.mxu0 0.0
    %2582 = vmatprep.subr.mxu0 0.0
    %2583 = vmatpush1.msra.mxu0 0.0
    %2584 = vmatprep.subr.mxu0 0.0
    %2585 = vmatpush1.msra.mxu0 0.0
    %2586 = vmatprep.subr.mxu0 0.0
    %2587 = vmatpush1.msra.mxu0 0.0
    %2588 = vmatprep.subr.mxu0 0.0
    %2589 = vmatpush1.msra.mxu0 0.0
    %2590 = vmatprep.subr.mxu0 0.0
    %2591 = vmatpush1.msra.mxu0 0.0
    %2592 = vmatprep.mubr.f32.mxu0 0.0
    %2593 = vmatmul.mubr.f32.gmra.mrb[0].mxu0 %v2526
    %v2594 = vpop.f32.mrb[0].mxu0
    %v2595 = vadd.f32 0.0, %v2594
    %v2596 = vpop.f32.mrb[0].mxu0
    %2597 = vdwg.mxu0
    %v2599 = vsel %vm1279, %v2117, 0
    %2601 = vmatprep.subr.mxu0 0.0
    %2602 = vmatpush1.msra.mxu0 %v1203
    %2603 = vmatprep.subr.mxu0 0.0
    %2604 = vmatpush1.msra.mxu0 0.0
    %2605 = vmatprep.subr.mxu0 0.0
    %2606 = vmatpush1.msra.mxu0 0.0
    %2607 = vmatprep.subr.mxu0 0.0
    %2608 = vmatpush1.msra.mxu0 0.0
    %2609 = vmatprep.subr.mxu0 0.0
    %2610 = vmatpush1.msra.mxu0 0.0
    %2611 = vmatprep.subr.mxu0 0.0
    %2612 = vmatpush1.msra.mxu0 0.0
    %2613 = vmatprep.subr.mxu0 0.0
    %2614 = vmatpush1.msra.mxu0 0.0
    %2615 = vmatprep.subr.mxu0 0.0
    %2616 = vmatpush1.msra.mxu0 0.0
    %2617 = vmatprep.subr.mxu0 0.0
    %2618 = vmatpush1.msra.mxu0 0.0
    %2619 = vmatprep.subr.mxu0 0.0
    %2620 = vmatpush1.msra.mxu0 0.0
    %2621 = vmatprep.subr.mxu0 0.0
    %2622 = vmatpush1.msra.mxu0 0.0
    %2623 = vmatprep.subr.mxu0 0.0
    %2624 = vmatpush1.msra.mxu0 0.0
    %2625 = vmatprep.subr.mxu0 0.0
    %2626 = vmatpush1.msra.mxu0 0.0
    %2627 = vmatprep.subr.mxu0 0.0
    %2628 = vmatpush1.msra.mxu0 0.0
    %2629 = vmatprep.subr.mxu0 0.0
    %2630 = vmatpush1.msra.mxu0 0.0
    %2631 = vmatprep.subr.mxu0 0.0
    %2632 = vmatpush1.msra.mxu0 0.0
    %2633 = vmatprep.subr.mxu0 0.0
    %2634 = vmatpush1.msra.mxu0 0.0
    %2635 = vmatprep.subr.mxu0 0.0
    %2636 = vmatpush1.msra.mxu0 0.0
    %2637 = vmatprep.subr.mxu0 0.0
    %2638 = vmatpush1.msra.mxu0 0.0
    %2639 = vmatprep.subr.mxu0 0.0
    %2640 = vmatpush1.msra.mxu0 0.0
    %2641 = vmatprep.subr.mxu0 0.0
    %2642 = vmatpush1.msra.mxu0 0.0
    %2643 = vmatprep.subr.mxu0 0.0
    %2644 = vmatpush1.msra.mxu0 0.0
    %2645 = vmatprep.subr.mxu0 0.0
    %2646 = vmatpush1.msra.mxu0 0.0
    %2647 = vmatprep.subr.mxu0 0.0
    %2648 = vmatpush1.msra.mxu0 0.0
    %2649 = vmatprep.subr.mxu0 0.0
    %2650 = vmatpush1.msra.mxu0 0.0
    %2651 = vmatprep.subr.mxu0 0.0
    %2652 = vmatpush1.msra.mxu0 0.0
    %2653 = vmatprep.subr.mxu0 0.0
    %2654 = vmatpush1.msra.mxu0 0.0
    %2655 = vmatprep.subr.mxu0 0.0
    %2656 = vmatpush1.msra.mxu0 0.0
    %2657 = vmatprep.subr.mxu0 0.0
    %2658 = vmatpush1.msra.mxu0 0.0
    %2659 = vmatprep.subr.mxu0 0.0
    %2660 = vmatpush1.msra.mxu0 0.0
    %2661 = vmatprep.subr.mxu0 0.0
    %2662 = vmatpush1.msra.mxu0 0.0
    %2663 = vmatprep.subr.mxu0 0.0
    %2664 = vmatpush1.msra.mxu0 0.0
    %2665 = vmatprep.mubr.f32.mxu0 0.0
    %2666 = vmatmul.mubr.f32.gmra.mrb[0].mxu0 %v2599
    %v2667 = vpop.f32.mrb[0].mxu0
    %v2668 = vadd.f32 0.0, %v2667
    %v2669 = vpop.f32.mrb[0].mxu0
    %2670 = vdwg.mxu0
    %v2672 = vsel %vm1279, %v2119, 0
    %2674 = vmatprep.subr.mxu0 0.0
    %2675 = vmatpush1.msra.mxu0 %v1204
    %2676 = vmatprep.subr.mxu0 0.0
    %2677 = vmatpush1.msra.mxu0 0.0
    %2678 = vmatprep.subr.mxu0 0.0
    %2679 = vmatpush1.msra.mxu0 0.0
    %2680 = vmatprep.subr.mxu0 0.0
    %2681 = vmatpush1.msra.mxu0 0.0
    %2682 = vmatprep.subr.mxu0 0.0
    %2683 = vmatpush1.msra.mxu0 0.0
    %2684 = vmatprep.subr.mxu0 0.0
    %2685 = vmatpush1.msra.mxu0 0.0
    %2686 = vmatprep.subr.mxu0 0.0
    %2687 = vmatpush1.msra.mxu0 0.0
    %2688 = vmatprep.subr.mxu0 0.0
    %2689 = vmatpush1.msra.mxu0 0.0
    %2690 = vmatprep.subr.mxu0 0.0
    %2691 = vmatpush1.msra.mxu0 0.0
    %2692 = vmatprep.subr.mxu0 0.0
    %2693 = vmatpush1.msra.mxu0 0.0
    %2694 = vmatprep.subr.mxu0 0.0
    %2695 = vmatpush1.msra.mxu0 0.0
    %2696 = vmatprep.subr.mxu0 0.0
    %2697 = vmatpush1.msra.mxu0 0.0
    %2698 = vmatprep.subr.mxu0 0.0
    %2699 = vmatpush1.msra.mxu0 0.0
    %2700 = vmatprep.subr.mxu0 0.0
    %2701 = vmatpush1.msra.mxu0 0.0
    %2702 = vmatprep.subr.mxu0 0.0
    %2703 = vmatpush1.msra.mxu0 0.0
    %2704 = vmatprep.subr.mxu0 0.0
    %2705 = vmatpush1.msra.mxu0 0.0
    %2706 = vmatprep.subr.mxu0 0.0
    %2707 = vmatpush1.msra.mxu0 0.0
    %2708 = vmatprep.subr.mxu0 0.0
    %2709 = vmatpush1.msra.mxu0 0.0
    %2710 = vmatprep.subr.mxu0 0.0
    %2711 = vmatpush1.msra.mxu0 0.0
    %2712 = vmatprep.subr.mxu0 0.0
    %2713 = vmatpush1.msra.mxu0 0.0
    %2714 = vmatprep.subr.mxu0 0.0
    %2715 = vmatpush1.msra.mxu0 0.0
    %2716 = vmatprep.subr.mxu0 0.0
    %2717 = vmatpush1.msra.mxu0 0.0
    %2718 = vmatprep.subr.mxu0 0.0
    %2719 = vmatpush1.msra.mxu0 0.0
    %2720 = vmatprep.subr.mxu0 0.0
    %2721 = vmatpush1.msra.mxu0 0.0
    %2722 = vmatprep.subr.mxu0 0.0
    %2723 = vmatpush1.msra.mxu0 0.0
    %2724 = vmatprep.subr.mxu0 0.0
    %2725 = vmatpush1.msra.mxu0 0.0
    %2726 = vmatprep.subr.mxu0 0.0
    %2727 = vmatpush1.msra.mxu0 0.0
    %2728 = vmatprep.subr.mxu0 0.0
    %2729 = vmatpush1.msra.mxu0 0.0
    %2730 = vmatprep.subr.mxu0 0.0
    %2731 = vmatpush1.msra.mxu0 0.0
    %2732 = vmatprep.subr.mxu0 0.0
    %2733 = vmatpush1.msra.mxu0 0.0
    %2734 = vmatprep.subr.mxu0 0.0
    %2735 = vmatpush1.msra.mxu0 0.0
    %2736 = vmatprep.subr.mxu0 0.0
    %2737 = vmatpush1.msra.mxu0 0.0
    %2738 = vmatprep.mubr.f32.mxu0 0.0
    %2739 = vmatmul.mubr.f32.gmra.mrb[0].mxu0 %v2672
    %v2740 = vpop.f32.mrb[0].mxu0
    %v2741 = vadd.f32 0.0, %v2740
    %v2742 = vpop.f32.mrb[0].mxu0
    %2743 = vdwg.mxu0
    %v2744 = vadd.f32 %v2120, %v2230
    %v2745 = vadd.f32 %v2121, %v2303
    %v2746 = vadd.f32 %v2122, %v2376
    %v2747 = vadd.f32 %v2123, %v2449
    %v2748 = vadd.f32 %v2124, %v2522
    %v2749 = vadd.f32 %v2125, %v2595
    %v2750 = vadd.f32 %v2126, %v2668
    %v2751 = vadd.f32 %v2127, %v2741
    %v2752 = vrcp.pop %v2152
    %v2753 = vrcp.pop %v2153
    %v2754 = vrcp.pop %v2154
    %v2755 = vrcp.pop %v2155
    %v2756 = vrcp.pop %v2156
    %v2757 = vrcp.pop %v2157
    %v2758 = vrcp.pop %v2158
    %v2759 = vrcp.pop %v2159
    %v2760 = vmul.f32 %v2744, %v2752
    %v2761 = vmul.f32 %v2745, %v2753
    %v2762 = vmul.f32 %v2746, %v2754
    %v2763 = vmul.f32 %v2747, %v2755
    %v2764 = vmul.f32 %v2748, %v2756
    %v2765 = vmul.f32 %v2749, %v2757
    %v2766 = vmul.f32 %v2750, %v2758
    %v2767 = vmul.f32 %v2751, %v2759
    %v2768 = vcombine.low %v2760, %v2762
    %v2769 = vcombine.high %v2760, %v2762
    %v2771 = vunpack.c.l.s4 1983009808
    %v2772 = vunpack.c.0.s8 %v2771
    %v2773 = vlaneseq
    %v2774 = vshrl.u32 %v2773, 7
    %v2775 = vsub.s32 %v2772, %v2774
    %v2776 = vrot.slane %v2768, %v2775
    %v2778 = vunpack.c.l.s4 1983009808
    %v2779 = vunpack.c.0.s8 %v2778
    %v2780 = vlaneseq
    %v2781 = vshrl.u32 %v2780, 7
    %v2782 = vsub.s32 %v2779, %v2781
    %v2783 = vrot.slane %v2769, %v2782
    %v2784 = vcombine.low %v2761, %v2763
    %v2785 = vcombine.high %v2761, %v2763
    %v2787 = vunpack.c.l.s4 1983009808
    %v2788 = vunpack.c.0.s8 %v2787
    %v2789 = vlaneseq
    %v2790 = vshrl.u32 %v2789, 7
    %v2791 = vsub.s32 %v2788, %v2790
    %v2792 = vrot.slane %v2784, %v2791
    %v2794 = vunpack.c.l.s4 1983009808
    %v2795 = vunpack.c.0.s8 %v2794
    %v2796 = vlaneseq
    %v2797 = vshrl.u32 %v2796, 7
    %v2798 = vsub.s32 %v2795, %v2797
    %v2799 = vrot.slane %v2785, %v2798
    %v2800 = vcombine.low %v2776, %v2792
    %v2801 = vcombine.high %v2776, %v2792
    %v2803 = vunpack.c.l.s4 1934713408
    %v2804 = vunpack.c.0.s8 %v2803
    %v2805 = vlaneseq
    %v2806 = vshrl.u32 %v2805, 7
    %v2807 = vsub.s32 %v2804, %v2806
    %v2808 = vrot.slane %v2800, %v2807
    %v2810 = vunpack.c.l.s4 1934713408
    %v2811 = vunpack.c.0.s8 %v2810
    %v2812 = vlaneseq
    %v2813 = vshrl.u32 %v2812, 7
    %v2814 = vsub.s32 %v2811, %v2813
    %v2815 = vrot.slane %v2801, %v2814
    %v2816 = vcombine.low %v2783, %v2799
    %v2817 = vcombine.high %v2783, %v2799
    %v2819 = vunpack.c.l.s4 1934713408
    %v2820 = vunpack.c.0.s8 %v2819
    %v2821 = vlaneseq
    %v2822 = vshrl.u32 %v2821, 7
    %v2823 = vsub.s32 %v2820, %v2822
    %v2824 = vrot.slane %v2816, %v2823
    %v2826 = vunpack.c.l.s4 1934713408
    %v2827 = vunpack.c.0.s8 %v2826
    %v2828 = vlaneseq
    %v2829 = vshrl.u32 %v2828, 7
    %v2830 = vsub.s32 %v2827, %v2829
    %v2831 = vrot.slane %v2817, %v2830
    %v2832 = vcombine.high %v2808, 0.0
    %v2833 = vcombine.high %v2815, 0.0
    %v2834 = vcombine.high %v2824, 0.0
    %v2835 = vcombine.high %v2831, 0.0
    %v2836 = vcombine.low %v2764, %v2766
    %v2837 = vcombine.high %v2764, %v2766
    %v2839 = vunpack.c.l.s4 1983009808
    %v2840 = vunpack.c.0.s8 %v2839
    %v2841 = vlaneseq
    %v2842 = vshrl.u32 %v2841, 7
    %v2843 = vsub.s32 %v2840, %v2842
    %v2844 = vrot.slane %v2836, %v2843
    %v2846 = vunpack.c.l.s4 1983009808
    %v2847 = vunpack.c.0.s8 %v2846
    %v2848 = vlaneseq
    %v2849 = vshrl.u32 %v2848, 7
    %v2850 = vsub.s32 %v2847, %v2849
    %v2851 = vrot.slane %v2837, %v2850
    %v2852 = vcombine.low %v2765, %v2767
    %v2853 = vcombine.high %v2765, %v2767
    %v2855 = vunpack.c.l.s4 1983009808
    %v2856 = vunpack.c.0.s8 %v2855
    %v2857 = vlaneseq
    %v2858 = vshrl.u32 %v2857, 7
    %v2859 = vsub.s32 %v2856, %v2858
    %v2860 = vrot.slane %v2852, %v2859
    %v2862 = vunpack.c.l.s4 1983009808
    %v2863 = vunpack.c.0.s8 %v2862
    %v2864 = vlaneseq
    %v2865 = vshrl.u32 %v2864, 7
    %v2866 = vsub.s32 %v2863, %v2865
    %v2867 = vrot.slane %v2853, %v2866
    %v2868 = vcombine.low %v2844, %v2860
    %v2869 = vcombine.high %v2844, %v2860
    %v2871 = vunpack.c.l.s4 1934713408
    %v2872 = vunpack.c.0.s8 %v2871
    %v2873 = vlaneseq
    %v2874 = vshrl.u32 %v2873, 7
    %v2875 = vsub.s32 %v2872, %v2874
    %v2876 = vrot.slane %v2868, %v2875
    %v2878 = vunpack.c.l.s4 1934713408
    %v2879 = vunpack.c.0.s8 %v2878
    %v2880 = vlaneseq
    %v2881 = vshrl.u32 %v2880, 7
    %v2882 = vsub.s32 %v2879, %v2881
    %v2883 = vrot.slane %v2869, %v2882
    %v2884 = vcombine.low %v2851, %v2867
    %v2885 = vcombine.high %v2851, %v2867
    %v2887 = vunpack.c.l.s4 1934713408
    %v2888 = vunpack.c.0.s8 %v2887
    %v2889 = vlaneseq
    %v2890 = vshrl.u32 %v2889, 7
    %v2891 = vsub.s32 %v2888, %v2890
    %v2892 = vrot.slane %v2884, %v2891
    %v2894 = vunpack.c.l.s4 1934713408
    %v2895 = vunpack.c.0.s8 %v2894
    %v2896 = vlaneseq
    %v2897 = vshrl.u32 %v2896, 7
    %v2898 = vsub.s32 %v2895, %v2897
    %v2899 = vrot.slane %v2885, %v2898
    %v2900 = vcombine.high %v2876, 0.0
    %v2901 = vcombine.high %v2883, 0.0
    %v2902 = vcombine.high %v2892, 0.0
    %v2903 = vcombine.high %v2899, 0.0
    %v2904 = vcombine.low %v2808, %v2815
    %v2906 = vunpack.c.l.s4 1983009808
    %v2907 = vunpack.c.0.s8 %v2906
    %v2908 = vlaneseq
    %v2909 = vshrl.u32 %v2908, 7
    %v2910 = vsub.s32 %v2907, %v2909
    %v2911 = vrot.slane %v2904, %v2910
    %v2912 = vcombine.low %v2832, %v2833
    %v2914 = vunpack.c.l.s4 1983009808
    %v2915 = vunpack.c.0.s8 %v2914
    %v2916 = vlaneseq
    %v2917 = vshrl.u32 %v2916, 7
    %v2918 = vsub.s32 %v2915, %v2917
    %v2919 = vrot.slane %v2912, %v2918
    %v2920 = vcombine.low %v2824, %v2831
    %v2922 = vunpack.c.l.s4 1983009808
    %v2923 = vunpack.c.0.s8 %v2922
    %v2924 = vlaneseq
    %v2925 = vshrl.u32 %v2924, 7
    %v2926 = vsub.s32 %v2923, %v2925
    %v2927 = vrot.slane %v2920, %v2926
    %v2928 = vcombine.low %v2834, %v2835
    %v2930 = vunpack.c.l.s4 1983009808
    %v2931 = vunpack.c.0.s8 %v2930
    %v2932 = vlaneseq
    %v2933 = vshrl.u32 %v2932, 7
    %v2934 = vsub.s32 %v2931, %v2933
    %v2935 = vrot.slane %v2928, %v2934
    %v2936 = vcombine.low %v2911, %v2919
    %v2937 = vcombine.high %v2911, %v2919
    %v2939 = vunpack.c.l.s4 1934713408
    %v2940 = vunpack.c.0.s8 %v2939
    %v2941 = vlaneseq
    %v2942 = vshrl.u32 %v2941, 7
    %v2943 = vsub.s32 %v2940, %v2942
    %v2944 = vrot.slane %v2936, %v2943
    %v2946 = vunpack.c.l.s4 1934713408
    %v2947 = vunpack.c.0.s8 %v2946
    %v2948 = vlaneseq
    %v2949 = vshrl.u32 %v2948, 7
    %v2950 = vsub.s32 %v2947, %v2949
    %v2951 = vrot.slane %v2937, %v2950
    %v2952 = vcombine.low %v2927, %v2935
    %v2953 = vcombine.high %v2927, %v2935
    %v2955 = vunpack.c.l.s4 1934713408
    %v2956 = vunpack.c.0.s8 %v2955
    %v2957 = vlaneseq
    %v2958 = vshrl.u32 %v2957, 7
    %v2959 = vsub.s32 %v2956, %v2958
    %v2960 = vrot.slane %v2952, %v2959
    %v2962 = vunpack.c.l.s4 1934713408
    %v2963 = vunpack.c.0.s8 %v2962
    %v2964 = vlaneseq
    %v2965 = vshrl.u32 %v2964, 7
    %v2966 = vsub.s32 %v2963, %v2965
    %v2967 = vrot.slane %v2953, %v2966
    %v2968 = vcombine.low %v2944, %v2960
    %v2969 = vcombine.high %v2944, %v2960
    %v2970 = vcombine.low %v2951, %v2967
    %v2971 = vcombine.high %v2951, %v2967
    %v2972 = vcombine.low %v2876, %v2883
    %v2974 = vunpack.c.l.s4 1983009808
    %v2975 = vunpack.c.0.s8 %v2974
    %v2976 = vlaneseq
    %v2977 = vshrl.u32 %v2976, 7
    %v2978 = vsub.s32 %v2975, %v2977
    %v2979 = vrot.slane %v2972, %v2978
    %v2980 = vcombine.low %v2900, %v2901
    %v2982 = vunpack.c.l.s4 1983009808
    %v2983 = vunpack.c.0.s8 %v2982
    %v2984 = vlaneseq
    %v2985 = vshrl.u32 %v2984, 7
    %v2986 = vsub.s32 %v2983, %v2985
    %v2987 = vrot.slane %v2980, %v2986
    %v2988 = vcombine.low %v2892, %v2899
    %v2990 = vunpack.c.l.s4 1983009808
    %v2991 = vunpack.c.0.s8 %v2990
    %v2992 = vlaneseq
    %v2993 = vshrl.u32 %v2992, 7
    %v2994 = vsub.s32 %v2991, %v2993
    %v2995 = vrot.slane %v2988, %v2994
    %v2996 = vcombine.low %v2902, %v2903
    %v2998 = vunpack.c.l.s4 1983009808
    %v2999 = vunpack.c.0.s8 %v2998
    %v3000 = vlaneseq
    %v3001 = vshrl.u32 %v3000, 7
    %v3002 = vsub.s32 %v2999, %v3001
    %v3003 = vrot.slane %v2996, %v3002
    %v3004 = vcombine.low %v2979, %v2987
    %v3005 = vcombine.high %v2979, %v2987
    %v3007 = vunpack.c.l.s4 1934713408
    %v3008 = vunpack.c.0.s8 %v3007
    %v3009 = vlaneseq
    %v3010 = vshrl.u32 %v3009, 7
    %v3011 = vsub.s32 %v3008, %v3010
    %v3012 = vrot.slane %v3004, %v3011
    %v3014 = vunpack.c.l.s4 1934713408
    %v3015 = vunpack.c.0.s8 %v3014
    %v3016 = vlaneseq
    %v3017 = vshrl.u32 %v3016, 7
    %v3018 = vsub.s32 %v3015, %v3017
    %v3019 = vrot.slane %v3005, %v3018
    %v3020 = vcombine.low %v2995, %v3003
    %v3021 = vcombine.high %v2995, %v3003
    %v3023 = vunpack.c.l.s4 1934713408
    %v3024 = vunpack.c.0.s8 %v3023
    %v3025 = vlaneseq
    %v3026 = vshrl.u32 %v3025, 7
    %v3027 = vsub.s32 %v3024, %v3026
    %v3028 = vrot.slane %v3020, %v3027
    %v3030 = vunpack.c.l.s4 1934713408
    %v3031 = vunpack.c.0.s8 %v3030
    %v3032 = vlaneseq
    %v3033 = vshrl.u32 %v3032, 7
    %v3034 = vsub.s32 %v3031, %v3033
    %v3035 = vrot.slane %v3021, %v3034
    %v3036 = vcombine.low %v3012, %v3028
    %v3037 = vcombine.high %v3012, %v3028
    %v3038 = vcombine.low %v3019, %v3035
    %v3039 = vcombine.high %v3019, %v3035
    %3042 = vrot.lane.b32.xlu0 %v2969, 16
    %v3043 = vpop.permute.xlu0 %3042
    %3044 = vrot.lane.b32.xlu0 %v3037, 16
    %v3045 = vpop.permute.xlu0 %3044
    %3050 = vrot.lane.b32.xlu0 %v2970, 32
    %v3051 = vpop.permute.xlu0 %3050
    %3052 = vrot.lane.b32.xlu0 %v3038, 32
    %v3053 = vpop.permute.xlu0 %3052
    %3058 = vrot.lane.b32.xlu0 %v2971, 48
    %v3059 = vpop.permute.xlu0 %3058
    %3060 = vrot.lane.b32.xlu0 %v3039, 48
    %v3061 = vpop.permute.xlu0 %3060
    %v3064 = vsel %vm1424, %v2968, %v3043
    %v3065 = vsel %vm1424, %v3036, %v3045
    %v3066 = vsel %vm48, %v3064, %v3051
    %v3067 = vsel %vm48, %v3065, %v3053
    %vm3068 = vcmask 392192
    %v3069 = vsel %vm3068, %v3066, %v3059
    %v3070 = vsel %vm3068, %v3067, %v3061
    %v3071 = vld [vmem:[%s5] sm:$0xff]
    %v3072 = vld [vmem:[%s5 + $0x8] sm:$0xff]
    %v3073 = vld [vmem:[%s5 + $0x10] sm:$0xff]
    %v3074 = vld [vmem:[%s5 + $0x18] sm:$0xff]
    %v3075 = vld [vmem:[%s5 + $0x20] sm:$0xff]
    %v3076 = vld [vmem:[%s5 + $0x28] sm:$0xff]
    %v3077 = vld [vmem:[%s5 + $0x30] sm:$0xff]
    %v3078 = vld [vmem:[%s5 + $0x38] sm:$0xff]
    %vm3079 = vcmask 523264
    %v3081 = vsel %vm3079, %v3069, 0
    %v3084 = vsel %vm3079, %v3070, 0
    %3086 = vmatprep.subr.mxu0 0.0
    %3087 = vmatpush1.msra.mxu0 %v3071
    %3088 = vmatprep.subr.mxu0 0.0
    %3089 = vmatpush1.msra.mxu0 %v3072
    %3090 = vmatprep.subr.mxu0 0.0
    %3091 = vmatpush1.msra.mxu0 %v3073
    %3092 = vmatprep.subr.mxu0 0.0
    %3093 = vmatpush1.msra.mxu0 %v3074
    %3094 = vmatprep.subr.mxu0 0.0
    %3095 = vmatpush1.msra.mxu0 %v3075
    %3096 = vmatprep.subr.mxu0 0.0
    %3097 = vmatpush1.msra.mxu0 %v3076
    %3098 = vmatprep.subr.mxu0 0.0
    %3099 = vmatpush1.msra.mxu0 %v3077
    %3100 = vmatprep.subr.mxu0 0.0
    %3101 = vmatpush1.msra.mxu0 %v3078
    %3102 = vmatprep.subr.mxu0 0.0
    %3103 = vmatpush1.msra.mxu0 0.0
    %3104 = vmatprep.subr.mxu0 0.0
    %3105 = vmatpush1.msra.mxu0 0.0
    %3106 = vmatprep.subr.mxu0 0.0
    %3107 = vmatpush1.msra.mxu0 0.0
    %3108 = vmatprep.subr.mxu0 0.0
    %3109 = vmatpush1.msra.mxu0 0.0
    %3110 = vmatprep.subr.mxu0 0.0
    %3111 = vmatpush1.msra.mxu0 0.0
    %3112 = vmatprep.subr.mxu0 0.0
    %3113 = vmatpush1.msra.mxu0 0.0
    %3114 = vmatprep.subr.mxu0 0.0
    %3115 = vmatpush1.msra.mxu0 0.0
    %3116 = vmatprep.subr.mxu0 0.0
    %3117 = vmatpush1.msra.mxu0 0.0
    %3118 = vmatprep.subr.mxu0 0.0
    %3119 = vmatpush1.msra.mxu0 0.0
    %3120 = vmatprep.subr.mxu0 0.0
    %3121 = vmatpush1.msra.mxu0 0.0
    %3122 = vmatprep.subr.mxu0 0.0
    %3123 = vmatpush1.msra.mxu0 0.0
    %3124 = vmatprep.subr.mxu0 0.0
    %3125 = vmatpush1.msra.mxu0 0.0
    %3126 = vmatprep.subr.mxu0 0.0
    %3127 = vmatpush1.msra.mxu0 0.0
    %3128 = vmatprep.subr.mxu0 0.0
    %3129 = vmatpush1.msra.mxu0 0.0
    %3130 = vmatprep.subr.mxu0 0.0
    %3131 = vmatpush1.msra.mxu0 0.0
    %3132 = vmatprep.subr.mxu0 0.0
    %3133 = vmatpush1.msra.mxu0 0.0
    %3134 = vmatprep.subr.mxu0 0.0
    %3135 = vmatpush1.msra.mxu0 0.0
    %3136 = vmatprep.subr.mxu0 0.0
    %3137 = vmatpush1.msra.mxu0 0.0
    %3138 = vmatprep.subr.mxu0 0.0
    %3139 = vmatpush1.msra.mxu0 0.0
    %3140 = vmatprep.subr.mxu0 0.0
    %3141 = vmatpush1.msra.mxu0 0.0
    %3142 = vmatprep.subr.mxu0 0.0
    %3143 = vmatpush1.msra.mxu0 0.0
    %3144 = vmatprep.subr.mxu0 0.0
    %3145 = vmatpush1.msra.mxu0 0.0
    %3146 = vmatprep.subr.mxu0 0.0
    %3147 = vmatpush1.msra.mxu0 0.0
    %3148 = vmatprep.subr.mxu0 0.0
    %3149 = vmatpush1.msra.mxu0 0.0
    %3150 = vmatprep.mubr.f32.mxu0 0.0
    %3151 = vmatmul.mubr.f32.gmra.mrb[0].mxu0 %v3081
    %v3152 = vpop.f32.mrb[0].mxu0
    %v3153 = vadd.f32 0.0, %v3152
    %v3154 = vpop.f32.mrb[0].mxu0
    %3155 = vmatprep.mubr.f32.mxu0 0.0
    %3156 = vmatmul.mubr.f32.gmra.mrb[0].mxu0 %v3084
    %v3157 = vpop.f32.mrb[0].mxu0
    %v3158 = vadd.f32 0.0, %v3157
    %v3159 = vpop.f32.mrb[0].mxu0
    %3160 = vdwg.mxu0
    %3161 = vst.msk [vmem:[#allocation5] sm:$0xff] %vm48, %v3153
    %3162 = vst.msk [vmem:[#allocation5 + $0x8] sm:$0xff] %vm48, %v3158
    // Predicated region
    $region38: #{tpu_custom_call.1} parent=1 // pred_check
      _
    $region39: #{tpu_custom_call.1} parent=1 // pred_check_branch
      %3164 = sbr.rel (0) target = $region41
    $region40: #{tpu_custom_call.1} parent=1 // pred_region
      %s3166 = ssub.s32 256, 256
      %3167 = vsyncadd [#allocation4], %s3166
      %s3168 = sshll.u32 [#allocation5], 4
      %s3169 = int_to_ptr.vmem [resolvable:$true] %s3168
      %3174 = dma.vmem_to_hbm [thread:$0]  %s3169, 256, %s8, [#allocation4], 128, 128, 8
    $region41: #{tpu_custom_call.1} parent=1 // pred_fallthru
      _
    // Predicated region
    $region42: #{tpu_custom_call.1} parent=1 // pred_check
      _
    $region43: #{tpu_custom_call.1} parent=1 // pred_check_branch
      %3176 = sbr.rel (0) target = $region45
    $region44: #{tpu_custom_call.1} parent=1 // pred_region
      %3177 = dma.done [#allocation4], 256
    $region45: #{tpu_custom_call.1} parent=1 // pred_fallthru
      _
    %3178 = vsyncpa [#allocation3], 1
    %3179 = vsyncpa [#allocation4], 1

// kernel: tpu_custom_call.1
$region0: #{tpu_custom_call.1}
  #allocation0 [shape = 'u32[]', space=smem, size = 0x4, offset = 0x4, fixed_abs, tag = 'smem constant byte address 0x4 - core index']
  #allocation1 [shape = 'u32[144,128]{1,0:T(1,128)}', space=vmem, size = 0x12000, scoped, tag = 'internal scratch']
  %s0 = inlined_call_operand.hbm [shape: f32[2,8,32], index: 0, kind: input, shape index: {}]
  %s1 = inlined_call_operand.vmem [shape: f32[1,32], index: 1, kind: input, shape index: {}]
  %s2 = inlined_call_operand.vmem [shape: f32[32,64], index: 2, kind: input, shape index: {}]
  %s3 = inlined_call_operand.vmem [shape: f32[32,64], index: 3, kind: input, shape index: {}]
  %s4 = inlined_call_operand.vmem [shape: f32[32,64], index: 4, kind: input, shape index: {}]
  %s5 = inlined_call_operand.vmem [shape: f32[64,32], index: 5, kind: input, shape index: {}]
  %s6 = inlined_call_operand.vmem [shape: f32[8,16], index: 6, kind: input, shape index: {}]
  %s7 = inlined_call_operand.vmem [shape: f32[8,16], index: 7, kind: input, shape index: {}]
  %s8 = inlined_call_operand.hbm [shape: f32[2,8,32], index: 8, kind: output, shape index: {}]
  %s9 = sld [smem:[#allocation0]]
  $region46: #{tpu_custom_call.1} parent=0
    _
  %s11 = ssub.s32 1, %s9
  %s12 = scalar_select 0, %s11, %s9
  $region1: #{tpu_custom_call.1} parent=0
    #allocation2 [shape = 'u8[8192]{0}', space=vmem, size = 0x2000, scoped, tag = 'input window, operand 0, single buffered']
    #allocation3 [shape = 's32[1]{0}', space=sflag, size = 0x4, scoped, tag = 'scoped memory for tpu_custom_call.1']
    #allocation4 [shape = 's32[1]{0}', space=sflag, size = 0x4, scoped, tag = 'scoped memory for tpu_custom_call.1']
    #allocation5 [shape = 'u8[8192]{0}', space=vmem, size = 0x2000, scoped, tag = 'output window, operand 0, single buffered']
    %13 = vsyncpa [#allocation3], 0
    %14 = vsyncpa [#allocation4], 0
    // Predicated region
    $region2: #{tpu_custom_call.1} parent=1 // pred_check
      _
    $region3: #{tpu_custom_call.1} parent=1 // pred_check_branch
      %16 = sbr.rel (0) target = $region5
    $region4: #{tpu_custom_call.1} parent=1 // pred_region
      %s18 = ssub.s32 256, 256
      %19 = vsyncadd [#allocation3], %s18
      %s20 = sshll.u32 [#allocation2], 4
      %s21 = int_to_ptr.vmem [resolvable:$true] %s20
      %26 = dma.hbm_to_vmem [thread:$0]  %s0, 256, %s21, [#allocation3], 128, 128, 8
    $region5: #{tpu_custom_call.1} parent=1 // pred_fallthru
      _
    // Predicated region
    $region6: #{tpu_custom_call.1} parent=1 // pred_check
      _
    $region7: #{tpu_custom_call.1} parent=1 // pred_check_branch
      %28 = sbr.rel (0) target = $region9
    $region8: #{tpu_custom_call.1} parent=1 // pred_region
      _
    $region9: #{tpu_custom_call.1} parent=1 // pred_fallthru
      _
    // Predicated region
    $region10: #{tpu_custom_call.1} parent=1 // pred_check
      _
    $region11: #{tpu_custom_call.1} parent=1 // pred_check_branch
      %30 = sbr.rel (0) target = $region13
    $region12: #{tpu_custom_call.1} parent=1 // pred_region
      _
    $region13: #{tpu_custom_call.1} parent=1 // pred_fallthru
      _
    // Predicated region
    $region14: #{tpu_custom_call.1} parent=1 // pred_check
      _
    $region15: #{tpu_custom_call.1} parent=1 // pred_check_branch
      %32 = sbr.rel (0) target = $region17
    $region16: #{tpu_custom_call.1} parent=1 // pred_region
      _
    $region17: #{tpu_custom_call.1} parent=1 // pred_fallthru
      _
    // Predicated region
    $region18: #{tpu_custom_call.1} parent=1 // pred_check
      _
    $region19: #{tpu_custom_call.1} parent=1 // pred_check_branch
      %34 = sbr.rel (0) target = $region21
    $region20: #{tpu_custom_call.1} parent=1 // pred_region
      _
    $region21: #{tpu_custom_call.1} parent=1 // pred_fallthru
      _
    // Predicated region
    $region22: #{tpu_custom_call.1} parent=1 // pred_check
      _
    $region23: #{tpu_custom_call.1} parent=1 // pred_check_branch
      %36 = sbr.rel (0) target = $region25
    $region24: #{tpu_custom_call.1} parent=1 // pred_region
      _
    $region25: #{tpu_custom_call.1} parent=1 // pred_fallthru
      _
    // Predicated region
    $region26: #{tpu_custom_call.1} parent=1 // pred_check
      _
    $region27: #{tpu_custom_call.1} parent=1 // pred_check_branch
      %38 = sbr.rel (0) target = $region29
    $region28: #{tpu_custom_call.1} parent=1 // pred_region
      _
    $region29: #{tpu_custom_call.1} parent=1 // pred_fallthru
      _
    // Predicated region
    $region30: #{tpu_custom_call.1} parent=1 // pred_check
      _
    $region31: #{tpu_custom_call.1} parent=1 // pred_check_branch
      %40 = sbr.rel (0) target = $region33
    $region32: #{tpu_custom_call.1} parent=1 // pred_region
      _
    $region33: #{tpu_custom_call.1} parent=1 // pred_fallthru
      _
    // Predicated region
    $region34: #{tpu_custom_call.1} parent=1 // pred_check
      _
    $region35: #{tpu_custom_call.1} parent=1 // pred_check_branch
      %42 = sbr.rel (0) target = $region37
    $region36: #{tpu_custom_call.1} parent=1 // pred_region
      %43 = dma.done [#allocation3], 256
    $region37: #{tpu_custom_call.1} parent=1 // pred_fallthru
      _
    %v44 = vld [vmem:[#allocation2] sm:$0xff]
    %v45 = vld [vmem:[#allocation2 + $0x8] sm:$0xff]
    %v46 = vmul.f32 %v44, %v44
    %v47 = vmul.f32 %v45, %v45
    %vm48 = vcmask 261120
    %v49 = vsel %vm48, %v46, 0.0
    %50 = vadd.xlane.f32.xlu0 %v49
    %v51 = vpop.xlane.xlu0 %50
    %v52 = vsel %vm48, %v47, 0.0
    %53 = vadd.xlane.f32.xlu0 %v52
    %v54 = vpop.xlane.xlu0 %53
    %v55 = vrsqrt.pop %v51
    %v56 = vmul.f32 %v51, %v55
    %vm57 = vcmp.eq.f32.partialorder %v51, inf
    %v58 = vsel %vm57, %v51, %v56
    %vm59 = vcmp.eq.f32.partialorder %v51, 0.0
    %v60 = vand.u32 %v51, 2147483648
    %v61 = vsel %vm59, %v60, %v58
    %v62 = vrsqrt.pop %v54
    %v63 = vmul.f32 %v54, %v62
    %vm64 = vcmp.eq.f32.partialorder %v54, inf
    %v65 = vsel %vm64, %v54, %v63
    %vm66 = vcmp.eq.f32.partialorder %v54, 0.0
    %v67 = vand.u32 %v54, 2147483648
    %v68 = vsel %vm66, %v67, %v65
    %v69 = vmul.f32 %v61, 0.17677669
    %v70 = vmul.f32 %v68, 0.17677669
    %v71 = vmax.f32 %v69, 1e-08
    %v72 = vmax.f32 %v70, 1e-08
    %v73 = vrcp.pop %v71
    %v74 = vrcp.pop %v72
    %v75 = vmul.f32 %v44, %v73
    %v76 = vmul.f32 %v45, %v74
    %v77 = vld [vmem:[%s1] sm:$0x1]
    %v79 = vlaneseq
    %v80 = vshrl.u32 %v79, 7
    %v81 = vsub.s32 0, %v80
    %v82 = vrot.slane %v77, %v81
    %v84 = vmul.f32 %v75, %v82
    %v85 = vmul.f32 %v76, %v82
    %v86 = vld [vmem:[%s2] sm:$0xff]
    %v87 = vld [vmem:[%s2 + $0x8] sm:$0xff]
    %v88 = vld [vmem:[%s2 + $0x10] sm:$0xff]
    %v89 = vld [vmem:[%s2 + $0x18] sm:$0xff]
    %v91 = vsel %vm48, %v84, 0
    %v94 = vsel %vm48, %v85, 0
    %96 = vmatprep.subr.mxu0 0.0
    %97 = vmatpush1.msra.mxu0 %v86
    %98 = vmatprep.subr.mxu0 0.0
    %99 = vmatpush1.msra.mxu0 %v87
    %100 = vmatprep.subr.mxu0 0.0
    %101 = vmatpush1.msra.mxu0 %v88
    %102 = vmatprep.subr.mxu0 0.0
    %103 = vmatpush1.msra.mxu0 %v89
    %104 = vmatprep.subr.mxu0 0.0
    %105 = vmatpush1.msra.mxu0 0.0
    %106 = vmatprep.subr.mxu0 0.0
    %107 = vmatpush1.msra.mxu0 0.0
    %108 = vmatprep.subr.mxu0 0.0
    %109 = vmatpush1.msra.mxu0 0.0
    %110 = vmatprep.subr.mxu0 0.0
    %111 = vmatpush1.msra.mxu0 0.0
    %112 = vmatprep.subr.mxu0 0.0
    %113 = vmatpush1.msra.mxu0 0.0
    %114 = vmatprep.subr.mxu0 0.0
    %115 = vmatpush1.msra.mxu0 0.0
    %116 = vmatprep.subr.mxu0 0.0
    %117 = vmatpush1.msra.mxu0 0.0
    %118 = vmatprep.subr.mxu0 0.0
    %119 = vmatpush1.msra.mxu0 0.0
    %120 = vmatprep.subr.mxu0 0.0
    %121 = vmatpush1.msra.mxu0 0.0
    %122 = vmatprep.subr.mxu0 0.0
    %123 = vmatpush1.msra.mxu0 0.0
    %124 = vmatprep.subr.mxu0 0.0
    %125 = vmatpush1.msra.mxu0 0.0
    %126 = vmatprep.subr.mxu0 0.0
    %127 = vmatpush1.msra.mxu0 0.0
    %128 = vmatprep.subr.mxu0 0.0
    %129 = vmatpush1.msra.mxu0 0.0
    %130 = vmatprep.subr.mxu0 0.0
    %131 = vmatpush1.msra.mxu0 0.0
    %132 = vmatprep.subr.mxu0 0.0
    %133 = vmatpush1.msra.mxu0 0.0
    %134 = vmatprep.subr.mxu0 0.0
    %135 = vmatpush1.msra.mxu0 0.0
    %136 = vmatprep.subr.mxu0 0.0
    %137 = vmatpush1.msra.mxu0 0.0
    %138 = vmatprep.subr.mxu0 0.0
    %139 = vmatpush1.msra.mxu0 0.0
    %140 = vmatprep.subr.mxu0 0.0
    %141 = vmatpush1.msra.mxu0 0.0
    %142 = vmatprep.subr.mxu0 0.0
    %143 = vmatpush1.msra.mxu0 0.0
    %144 = vmatprep.subr.mxu0 0.0
    %145 = vmatpush1.msra.mxu0 0.0
    %146 = vmatprep.subr.mxu0 0.0
    %147 = vmatpush1.msra.mxu0 0.0
    %148 = vmatprep.subr.mxu0 0.0
    %149 = vmatpush1.msra.mxu0 0.0
    %150 = vmatprep.subr.mxu0 0.0
    %151 = vmatpush1.msra.mxu0 0.0
    %152 = vmatprep.subr.mxu0 0.0
    %153 = vmatpush1.msra.mxu0 0.0
    %154 = vmatprep.subr.mxu0 0.0
    %155 = vmatpush1.msra.mxu0 0.0
    %156 = vmatprep.subr.mxu0 0.0
    %157 = vmatpush1.msra.mxu0 0.0
    %158 = vmatprep.subr.mxu0 0.0
    %159 = vmatpush1.msra.mxu0 0.0
    %160 = vmatprep.mubr.f32.mxu0 0.0
    %161 = vmatmul.mubr.f32.gmra.mrb[0].mxu0 %v91
    %v162 = vpop.f32.mrb[0].mxu0
    %v163 = vadd.f32 0.0, %v162
    %v164 = vpop.f32.mrb[0].mxu0
    %165 = vmatprep.mubr.f32.mxu0 0.0
    %166 = vmatmul.mubr.f32.gmra.mrb[0].mxu0 %v94
    %v167 = vpop.f32.mrb[0].mxu0
    %v168 = vadd.f32 0.0, %v167
    %v169 = vpop.f32.mrb[0].mxu0
    %170 = vdwg.mxu0
    %v171 = vld [vmem:[%s3] sm:$0xff]
    %v172 = vld [vmem:[%s3 + $0x8] sm:$0xff]
    %v173 = vld [vmem:[%s3 + $0x10] sm:$0xff]
    %v174 = vld [vmem:[%s3 + $0x18] sm:$0xff]
    %175 = vmatprep.subr.mxu0 0.0
    %176 = vmatpush1.msra.mxu0 %v171
    %177 = vmatprep.subr.mxu0 0.0
    %178 = vmatpush1.msra.mxu0 %v172
    %179 = vmatprep.subr.mxu0 0.0
    %180 = vmatpush1.msra.mxu0 %v173
    %181 = vmatprep.subr.mxu0 0.0
    %182 = vmatpush1.msra.mxu0 %v174
    %183 = vmatprep.subr.mxu0 0.0
    %184 = vmatpush1.msra.mxu0 0.0
    %185 = vmatprep.subr.mxu0 0.0
    %186 = vmatpush1.msra.mxu0 0.0
    %187 = vmatprep.subr.mxu0 0.0
    %188 = vmatpush1.msra.mxu0 0.0
    %189 = vmatprep.subr.mxu0 0.0
    %190 = vmatpush1.msra.mxu0 0.0
    %191 = vmatprep.subr.mxu0 0.0
    %192 = vmatpush1.msra.mxu0 0.0
    %193 = vmatprep.subr.mxu0 0.0
    %194 = vmatpush1.msra.mxu0 0.0
    %195 = vmatprep.subr.mxu0 0.0
    %196 = vmatpush1.msra.mxu0 0.0
    %197 = vmatprep.subr.mxu0 0.0
    %198 = vmatpush1.msra.mxu0 0.0
    %199 = vmatprep.subr.mxu0 0.0
    %200 = vmatpush1.msra.mxu0 0.0
    %201 = vmatprep.subr.mxu0 0.0
    %202 = vmatpush1.msra.mxu0 0.0
    %203 = vmatprep.subr.mxu0 0.0
    %204 = vmatpush1.msra.mxu0 0.0
    %205 = vmatprep.subr.mxu0 0.0
    %206 = vmatpush1.msra.mxu0 0.0
    %207 = vmatprep.subr.mxu0 0.0
    %208 = vmatpush1.msra.mxu0 0.0
    %209 = vmatprep.subr.mxu0 0.0
    %210 = vmatpush1.msra.mxu0 0.0
    %211 = vmatprep.subr.mxu0 0.0
    %212 = vmatpush1.msra.mxu0 0.0
    %213 = vmatprep.subr.mxu0 0.0
    %214 = vmatpush1.msra.mxu0 0.0
    %215 = vmatprep.subr.mxu0 0.0
    %216 = vmatpush1.msra.mxu0 0.0
    %217 = vmatprep.subr.mxu0 0.0
    %218 = vmatpush1.msra.mxu0 0.0
    %219 = vmatprep.subr.mxu0 0.0
    %220 = vmatpush1.msra.mxu0 0.0
    %221 = vmatprep.subr.mxu0 0.0
    %222 = vmatpush1.msra.mxu0 0.0
    %223 = vmatprep.subr.mxu0 0.0
    %224 = vmatpush1.msra.mxu0 0.0
    %225 = vmatprep.subr.mxu0 0.0
    %226 = vmatpush1.msra.mxu0 0.0
    %227 = vmatprep.subr.mxu0 0.0
    %228 = vmatpush1.msra.mxu0 0.0
    %229 = vmatprep.subr.mxu0 0.0
    %230 = vmatpush1.msra.mxu0 0.0
    %231 = vmatprep.subr.mxu0 0.0
    %232 = vmatpush1.msra.mxu0 0.0
    %233 = vmatprep.subr.mxu0 0.0
    %234 = vmatpush1.msra.mxu0 0.0
    %235 = vmatprep.subr.mxu0 0.0
    %236 = vmatpush1.msra.mxu0 0.0
    %237 = vmatprep.subr.mxu0 0.0
    %238 = vmatpush1.msra.mxu0 0.0
    %239 = vmatprep.mubr.f32.mxu0 0.0
    %240 = vmatmul.mubr.f32.gmra.mrb[0].mxu0 %v91
    %v241 = vpop.f32.mrb[0].mxu0
    %v242 = vadd.f32 0.0, %v241
    %v243 = vpop.f32.mrb[0].mxu0
    %244 = vmatprep.mubr.f32.mxu0 0.0
    %245 = vmatmul.mubr.f32.gmra.mrb[0].mxu0 %v94
    %v246 = vpop.f32.mrb[0].mxu0
    %v247 = vadd.f32 0.0, %v246
    %v248 = vpop.f32.mrb[0].mxu0
    %249 = vdwg.mxu0
    %v250 = vld [vmem:[%s4] sm:$0xff]
    %v251 = vld [vmem:[%s4 + $0x8] sm:$0xff]
    %v252 = vld [vmem:[%s4 + $0x10] sm:$0xff]
    %v253 = vld [vmem:[%s4 + $0x18] sm:$0xff]
    %254 = vmatprep.subr.mxu0 0.0
    %255 = vmatpush1.msra.mxu0 %v250
    %256 = vmatprep.subr.mxu0 0.0
    %257 = vmatpush1.msra.mxu0 %v251
    %258 = vmatprep.subr.mxu0 0.0
    %259 = vmatpush1.msra.mxu0 %v252
    %260 = vmatprep.subr.mxu0 0.0
    %261 = vmatpush1.msra.mxu0 %v253
    %262 = vmatprep.subr.mxu0 0.0
    %263 = vmatpush1.msra.mxu0 0.0
    %264 = vmatprep.subr.mxu0 0.0
    %265 = vmatpush1.msra.mxu0 0.0
    %266 = vmatprep.subr.mxu0 0.0
    %267 = vmatpush1.msra.mxu0 0.0
    %268 = vmatprep.subr.mxu0 0.0
    %269 = vmatpush1.msra.mxu0 0.0
    %270 = vmatprep.subr.mxu0 0.0
    %271 = vmatpush1.msra.mxu0 0.0
    %272 = vmatprep.subr.mxu0 0.0
    %273 = vmatpush1.msra.mxu0 0.0
    %274 = vmatprep.subr.mxu0 0.0
    %275 = vmatpush1.msra.mxu0 0.0
    %276 = vmatprep.subr.mxu0 0.0
    %277 = vmatpush1.msra.mxu0 0.0
    %278 = vmatprep.subr.mxu0 0.0
    %279 = vmatpush1.msra.mxu0 0.0
    %280 = vmatprep.subr.mxu0 0.0
    %281 = vmatpush1.msra.mxu0 0.0
    %282 = vmatprep.subr.mxu0 0.0
    %283 = vmatpush1.msra.mxu0 0.0
    %284 = vmatprep.subr.mxu0 0.0
    %285 = vmatpush1.msra.mxu0 0.0
    %286 = vmatprep.subr.mxu0 0.0
    %287 = vmatpush1.msra.mxu0 0.0
    %288 = vmatprep.subr.mxu0 0.0
    %289 = vmatpush1.msra.mxu0 0.0
    %290 = vmatprep.subr.mxu0 0.0
    %291 = vmatpush1.msra.mxu0 0.0
    %292 = vmatprep.subr.mxu0 0.0
    %293 = vmatpush1.msra.mxu0 0.0
    %294 = vmatprep.subr.mxu0 0.0
    %295 = vmatpush1.msra.mxu0 0.0
    %296 = vmatprep.subr.mxu0 0.0
    %297 = vmatpush1.msra.mxu0 0.0
    %298 = vmatprep.subr.mxu0 0.0
    %299 = vmatpush1.msra.mxu0 0.0
    %300 = vmatprep.subr.mxu0 0.0
    %301 = vmatpush1.msra.mxu0 0.0
    %302 = vmatprep.subr.mxu0 0.0
    %303 = vmatpush1.msra.mxu0 0.0
    %304 = vmatprep.subr.mxu0 0.0
    %305 = vmatpush1.msra.mxu0 0.0
    %306 = vmatprep.subr.mxu0 0.0
    %307 = vmatpush1.msra.mxu0 0.0
    %308 = vmatprep.subr.mxu0 0.0
    %309 = vmatpush1.msra.mxu0 0.0
    %310 = vmatprep.subr.mxu0 0.0
    %311 = vmatpush1.msra.mxu0 0.0
    %312 = vmatprep.subr.mxu0 0.0
    %313 = vmatpush1.msra.mxu0 0.0
    %314 = vmatprep.subr.mxu0 0.0
    %315 = vmatpush1.msra.mxu0 0.0
    %316 = vmatprep.subr.mxu0 0.0
    %317 = vmatpush1.msra.mxu0 0.0
    %318 = vmatprep.mubr.f32.mxu0 0.0
    %319 = vmatmul.mubr.f32.gmra.mrb[0].mxu0 %v91
    %v320 = vpop.f32.mrb[0].mxu0
    %v321 = vadd.f32 0.0, %v320
    %v322 = vpop.f32.mrb[0].mxu0
    %323 = vmatprep.mubr.f32.mxu0 0.0
    %324 = vmatmul.mubr.f32.gmra.mrb[0].mxu0 %v94
    %v325 = vpop.f32.mrb[0].mxu0
    %v326 = vadd.f32 0.0, %v325
    %v327 = vpop.f32.mrb[0].mxu0
    %328 = vdwg.mxu0
    %331 = vrot.lane.b32.xlu0 %v163, 112
    %v332 = vpop.permute.xlu0 %331
    %333 = vrot.lane.b32.xlu0 %v168, 112
    %v334 = vpop.permute.xlu0 %333
    %337 = vrot.lane.b32.xlu0 %v163, 96
    %v338 = vpop.permute.xlu0 %337
    %339 = vrot.lane.b32.xlu0 %v168, 96
    %v340 = vpop.permute.xlu0 %339
    %343 = vrot.lane.b32.xlu0 %v163, 80
    %v344 = vpop.permute.xlu0 %343
    %345 = vrot.lane.b32.xlu0 %v168, 80
    %v346 = vpop.permute.xlu0 %345
    %v349 = vcombine.low %v163, %v338
    %v350 = vcombine.high %v163, %v338
    %v352 = vunpack.c.l.s4 1983009808
    %v353 = vunpack.c.0.s8 %v352
    %v354 = vlaneseq
    %v355 = vshrl.u32 %v354, 7
    %v356 = vsub.s32 %v353, %v355
    %v357 = vrot.slane %v349, %v356
    %v359 = vunpack.c.l.s4 1983009808
    %v360 = vunpack.c.0.s8 %v359
    %v361 = vlaneseq
    %v362 = vshrl.u32 %v361, 7
    %v363 = vsub.s32 %v360, %v362
    %v364 = vrot.slane %v350, %v363
    %v365 = vcombine.low %v332, %v344
    %v366 = vcombine.high %v332, %v344
    %v368 = vunpack.c.l.s4 1983009808
    %v369 = vunpack.c.0.s8 %v368
    %v370 = vlaneseq
    %v371 = vshrl.u32 %v370, 7
    %v372 = vsub.s32 %v369, %v371
    %v373 = vrot.slane %v365, %v372
    %v375 = vunpack.c.l.s4 1983009808
    %v376 = vunpack.c.0.s8 %v375
    %v377 = vlaneseq
    %v378 = vshrl.u32 %v377, 7
    %v379 = vsub.s32 %v376, %v378
    %v380 = vrot.slane %v366, %v379
    %v381 = vcombine.low %v357, %v373
    %v382 = vcombine.high %v357, %v373
    %v384 = vunpack.c.l.s4 1934713408
    %v385 = vunpack.c.0.s8 %v384
    %v386 = vlaneseq
    %v387 = vshrl.u32 %v386, 7
    %v388 = vsub.s32 %v385, %v387
    %v389 = vrot.slane %v381, %v388
    %v391 = vunpack.c.l.s4 1934713408
    %v392 = vunpack.c.0.s8 %v391
    %v393 = vlaneseq
    %v394 = vshrl.u32 %v393, 7
    %v395 = vsub.s32 %v392, %v394
    %v396 = vrot.slane %v382, %v395
    %v397 = vcombine.low %v364, %v380
    %v398 = vcombine.high %v364, %v380
    %v400 = vunpack.c.l.s4 1934713408
    %v401 = vunpack.c.0.s8 %v400
    %v402 = vlaneseq
    %v403 = vshrl.u32 %v402, 7
    %v404 = vsub.s32 %v401, %v403
    %v405 = vrot.slane %v397, %v404
    %v407 = vunpack.c.l.s4 1934713408
    %v408 = vunpack.c.0.s8 %v407
    %v409 = vlaneseq
    %v410 = vshrl.u32 %v409, 7
    %v411 = vsub.s32 %v408, %v410
    %v412 = vrot.slane %v398, %v411
    %v413 = vcombine.high %v389, 0.0
    %v414 = vcombine.high %v396, 0.0
    %v415 = vcombine.high %v405, 0.0
    %v416 = vcombine.high %v412, 0.0
    %v417 = vcombine.low %v168, %v340
    %v418 = vcombine.high %v168, %v340
    %v420 = vunpack.c.l.s4 1983009808
    %v421 = vunpack.c.0.s8 %v420
    %v422 = vlaneseq
    %v423 = vshrl.u32 %v422, 7
    %v424 = vsub.s32 %v421, %v423
    %v425 = vrot.slane %v417, %v424
    %v427 = vunpack.c.l.s4 1983009808
    %v428 = vunpack.c.0.s8 %v427
    %v429 = vlaneseq
    %v430 = vshrl.u32 %v429, 7
    %v431 = vsub.s32 %v428, %v430
    %v432 = vrot.slane %v418, %v431
    %v433 = vcombine.low %v334, %v346
    %v434 = vcombine.high %v334, %v346
    %v436 = vunpack.c.l.s4 1983009808
    %v437 = vunpack.c.0.s8 %v436
    %v438 = vlaneseq
    %v439 = vshrl.u32 %v438, 7
    %v440 = vsub.s32 %v437, %v439
    %v441 = vrot.slane %v433, %v440
    %v443 = vunpack.c.l.s4 1983009808
    %v444 = vunpack.c.0.s8 %v443
    %v445 = vlaneseq
    %v446 = vshrl.u32 %v445, 7
    %v447 = vsub.s32 %v444, %v446
    %v448 = vrot.slane %v434, %v447
    %v449 = vcombine.low %v425, %v441
    %v450 = vcombine.high %v425, %v441
    %v452 = vunpack.c.l.s4 1934713408
    %v453 = vunpack.c.0.s8 %v452
    %v454 = vlaneseq
    %v455 = vshrl.u32 %v454, 7
    %v456 = vsub.s32 %v453, %v455
    %v457 = vrot.slane %v449, %v456
    %v459 = vunpack.c.l.s4 1934713408
    %v460 = vunpack.c.0.s8 %v459
    %v461 = vlaneseq
    %v462 = vshrl.u32 %v461, 7
    %v463 = vsub.s32 %v460, %v462
    %v464 = vrot.slane %v450, %v463
    %v465 = vcombine.low %v432, %v448
    %v466 = vcombine.high %v432, %v448
    %v468 = vunpack.c.l.s4 1934713408
    %v469 = vunpack.c.0.s8 %v468
    %v470 = vlaneseq
    %v471 = vshrl.u32 %v470, 7
    %v472 = vsub.s32 %v469, %v471
    %v473 = vrot.slane %v465, %v472
    %v475 = vunpack.c.l.s4 1934713408
    %v476 = vunpack.c.0.s8 %v475
    %v477 = vlaneseq
    %v478 = vshrl.u32 %v477, 7
    %v479 = vsub.s32 %v476, %v478
    %v480 = vrot.slane %v466, %v479
    %v481 = vcombine.high %v457, 0.0
    %v482 = vcombine.high %v464, 0.0
    %v483 = vcombine.high %v473, 0.0
    %v484 = vcombine.high %v480, 0.0
    %v485 = vcombine.low %v389, %v396
    %v487 = vunpack.c.l.s4 1983009808
    %v488 = vunpack.c.0.s8 %v487
    %v489 = vlaneseq
    %v490 = vshrl.u32 %v489, 7
    %v491 = vsub.s32 %v488, %v490
    %v492 = vrot.slane %v485, %v491
    %v493 = vcombine.low %v413, %v414
    %v495 = vunpack.c.l.s4 1983009808
    %v496 = vunpack.c.0.s8 %v495
    %v497 = vlaneseq
    %v498 = vshrl.u32 %v497, 7
    %v499 = vsub.s32 %v496, %v498
    %v500 = vrot.slane %v493, %v499
    %v501 = vcombine.low %v405, %v412
    %v503 = vunpack.c.l.s4 1983009808
    %v504 = vunpack.c.0.s8 %v503
    %v505 = vlaneseq
    %v506 = vshrl.u32 %v505, 7
    %v507 = vsub.s32 %v504, %v506
    %v508 = vrot.slane %v501, %v507
    %v509 = vcombine.low %v415, %v416
    %v511 = vunpack.c.l.s4 1983009808
    %v512 = vunpack.c.0.s8 %v511
    %v513 = vlaneseq
    %v514 = vshrl.u32 %v513, 7
    %v515 = vsub.s32 %v512, %v514
    %v516 = vrot.slane %v509, %v515
    %v517 = vcombine.low %v492, %v500
    %v518 = vcombine.high %v492, %v500
    %v520 = vunpack.c.l.s4 1934713408
    %v521 = vunpack.c.0.s8 %v520
    %v522 = vlaneseq
    %v523 = vshrl.u32 %v522, 7
    %v524 = vsub.s32 %v521, %v523
    %v525 = vrot.slane %v517, %v524
    %v527 = vunpack.c.l.s4 1934713408
    %v528 = vunpack.c.0.s8 %v527
    %v529 = vlaneseq
    %v530 = vshrl.u32 %v529, 7
    %v531 = vsub.s32 %v528, %v530
    %v532 = vrot.slane %v518, %v531
    %v533 = vcombine.low %v508, %v516
    %v534 = vcombine.high %v508, %v516
    %v536 = vunpack.c.l.s4 1934713408
    %v537 = vunpack.c.0.s8 %v536
    %v538 = vlaneseq
    %v539 = vshrl.u32 %v538, 7
    %v540 = vsub.s32 %v537, %v539
    %v541 = vrot.slane %v533, %v540
    %v543 = vunpack.c.l.s4 1934713408
    %v544 = vunpack.c.0.s8 %v543
    %v545 = vlaneseq
    %v546 = vshrl.u32 %v545, 7
    %v547 = vsub.s32 %v544, %v546
    %v548 = vrot.slane %v534, %v547
    %v549 = vcombine.low %v525, %v541
    %v550 = vcombine.high %v525, %v541
    %v551 = vcombine.low %v532, %v548
    %v552 = vcombine.high %v532, %v548
    %v553 = vcombine.low %v457, %v464
    %v555 = vunpack.c.l.s4 1983009808
    %v556 = vunpack.c.0.s8 %v555
    %v557 = vlaneseq
    %v558 = vshrl.u32 %v557, 7
    %v559 = vsub.s32 %v556, %v558
    %v560 = vrot.slane %v553, %v559
    %v561 = vcombine.low %v481, %v482
    %v563 = vunpack.c.l.s4 1983009808
    %v564 = vunpack.c.0.s8 %v563
    %v565 = vlaneseq
    %v566 = vshrl.u32 %v565, 7
    %v567 = vsub.s32 %v564, %v566
    %v568 = vrot.slane %v561, %v567
    %v569 = vcombine.low %v473, %v480
    %v571 = vunpack.c.l.s4 1983009808
    %v572 = vunpack.c.0.s8 %v571
    %v573 = vlaneseq
    %v574 = vshrl.u32 %v573, 7
    %v575 = vsub.s32 %v572, %v574
    %v576 = vrot.slane %v569, %v575
    %v577 = vcombine.low %v483, %v484
    %v579 = vunpack.c.l.s4 1983009808
    %v580 = vunpack.c.0.s8 %v579
    %v581 = vlaneseq
    %v582 = vshrl.u32 %v581, 7
    %v583 = vsub.s32 %v580, %v582
    %v584 = vrot.slane %v577, %v583
    %v585 = vcombine.low %v560, %v568
    %v586 = vcombine.high %v560, %v568
    %v588 = vunpack.c.l.s4 1934713408
    %v589 = vunpack.c.0.s8 %v588
    %v590 = vlaneseq
    %v591 = vshrl.u32 %v590, 7
    %v592 = vsub.s32 %v589, %v591
    %v593 = vrot.slane %v585, %v592
    %v595 = vunpack.c.l.s4 1934713408
    %v596 = vunpack.c.0.s8 %v595
    %v597 = vlaneseq
    %v598 = vshrl.u32 %v597, 7
    %v599 = vsub.s32 %v596, %v598
    %v600 = vrot.slane %v586, %v599
    %v601 = vcombine.low %v576, %v584
    %v602 = vcombine.high %v576, %v584
    %v604 = vunpack.c.l.s4 1934713408
    %v605 = vunpack.c.0.s8 %v604
    %v606 = vlaneseq
    %v607 = vshrl.u32 %v606, 7
    %v608 = vsub.s32 %v605, %v607
    %v609 = vrot.slane %v601, %v608
    %v611 = vunpack.c.l.s4 1934713408
    %v612 = vunpack.c.0.s8 %v611
    %v613 = vlaneseq
    %v614 = vshrl.u32 %v613, 7
    %v615 = vsub.s32 %v612, %v614
    %v616 = vrot.slane %v602, %v615
    %v617 = vcombine.low %v593, %v609
    %v618 = vcombine.high %v593, %v609
    %v619 = vcombine.low %v600, %v616
    %v620 = vcombine.high %v600, %v616
    %623 = vrot.lane.b32.xlu0 %v242, 112
    %v624 = vpop.permute.xlu0 %623
    %625 = vrot.lane.b32.xlu0 %v247, 112
    %v626 = vpop.permute.xlu0 %625
    %629 = vrot.lane.b32.xlu0 %v242, 96
    %v630 = vpop.permute.xlu0 %629
    %631 = vrot.lane.b32.xlu0 %v247, 96
    %v632 = vpop.permute.xlu0 %631
    %635 = vrot.lane.b32.xlu0 %v242, 80
    %v636 = vpop.permute.xlu0 %635
    %637 = vrot.lane.b32.xlu0 %v247, 80
    %v638 = vpop.permute.xlu0 %637
    %v641 = vcombine.low %v242, %v630
    %v642 = vcombine.high %v242, %v630
    %v644 = vunpack.c.l.s4 1983009808
    %v645 = vunpack.c.0.s8 %v644
    %v646 = vlaneseq
    %v647 = vshrl.u32 %v646, 7
    %v648 = vsub.s32 %v645, %v647
    %v649 = vrot.slane %v641, %v648
    %v651 = vunpack.c.l.s4 1983009808
    %v652 = vunpack.c.0.s8 %v651
    %v653 = vlaneseq
    %v654 = vshrl.u32 %v653, 7
    %v655 = vsub.s32 %v652, %v654
    %v656 = vrot.slane %v642, %v655
    %v657 = vcombine.low %v624, %v636
    %v658 = vcombine.high %v624, %v636
    %v660 = vunpack.c.l.s4 1983009808
    %v661 = vunpack.c.0.s8 %v660
    %v662 = vlaneseq
    %v663 = vshrl.u32 %v662, 7
    %v664 = vsub.s32 %v661, %v663
    %v665 = vrot.slane %v657, %v664
    %v667 = vunpack.c.l.s4 1983009808
    %v668 = vunpack.c.0.s8 %v667
    %v669 = vlaneseq
    %v670 = vshrl.u32 %v669, 7
    %v671 = vsub.s32 %v668, %v670
    %v672 = vrot.slane %v658, %v671
    %v673 = vcombine.low %v649, %v665
    %v674 = vcombine.high %v649, %v665
    %v676 = vunpack.c.l.s4 1934713408
    %v677 = vunpack.c.0.s8 %v676
    %v678 = vlaneseq
    %v679 = vshrl.u32 %v678, 7
    %v680 = vsub.s32 %v677, %v679
    %v681 = vrot.slane %v673, %v680
    %v683 = vunpack.c.l.s4 1934713408
    %v684 = vunpack.c.0.s8 %v683
    %v685 = vlaneseq
    %v686 = vshrl.u32 %v685, 7
    %v687 = vsub.s32 %v684, %v686
    %v688 = vrot.slane %v674, %v687
    %v689 = vcombine.low %v656, %v672
    %v690 = vcombine.high %v656, %v672
    %v692 = vunpack.c.l.s4 1934713408
    %v693 = vunpack.c.0.s8 %v692
    %v694 = vlaneseq
    %v695 = vshrl.u32 %v694, 7
    %v696 = vsub.s32 %v693, %v695
    %v697 = vrot.slane %v689, %v696
    %v699 = vunpack.c.l.s4 1934713408
    %v700 = vunpack.c.0.s8 %v699
    %v701 = vlaneseq
    %v702 = vshrl.u32 %v701, 7
    %v703 = vsub.s32 %v700, %v702
    %v704 = vrot.slane %v690, %v703
    %v705 = vcombine.high %v681, 0.0
    %v706 = vcombine.high %v688, 0.0
    %v707 = vcombine.high %v697, 0.0
    %v708 = vcombine.high %v704, 0.0
    %v709 = vcombine.low %v247, %v632
    %v710 = vcombine.high %v247, %v632
    %v712 = vunpack.c.l.s4 1983009808
    %v713 = vunpack.c.0.s8 %v712
    %v714 = vlaneseq
    %v715 = vshrl.u32 %v714, 7
    %v716 = vsub.s32 %v713, %v715
    %v717 = vrot.slane %v709, %v716
    %v719 = vunpack.c.l.s4 1983009808
    %v720 = vunpack.c.0.s8 %v719
    %v721 = vlaneseq
    %v722 = vshrl.u32 %v721, 7
    %v723 = vsub.s32 %v720, %v722
    %v724 = vrot.slane %v710, %v723
    %v725 = vcombine.low %v626, %v638
    %v726 = vcombine.high %v626, %v638
    %v728 = vunpack.c.l.s4 1983009808
    %v729 = vunpack.c.0.s8 %v728
    %v730 = vlaneseq
    %v731 = vshrl.u32 %v730, 7
    %v732 = vsub.s32 %v729, %v731
    %v733 = vrot.slane %v725, %v732
    %v735 = vunpack.c.l.s4 1983009808
    %v736 = vunpack.c.0.s8 %v735
    %v737 = vlaneseq
    %v738 = vshrl.u32 %v737, 7
    %v739 = vsub.s32 %v736, %v738
    %v740 = vrot.slane %v726, %v739
    %v741 = vcombine.low %v717, %v733
    %v742 = vcombine.high %v717, %v733
    %v744 = vunpack.c.l.s4 1934713408
    %v745 = vunpack.c.0.s8 %v744
    %v746 = vlaneseq
    %v747 = vshrl.u32 %v746, 7
    %v748 = vsub.s32 %v745, %v747
    %v749 = vrot.slane %v741, %v748
    %v751 = vunpack.c.l.s4 1934713408
    %v752 = vunpack.c.0.s8 %v751
    %v753 = vlaneseq
    %v754 = vshrl.u32 %v753, 7
    %v755 = vsub.s32 %v752, %v754
    %v756 = vrot.slane %v742, %v755
    %v757 = vcombine.low %v724, %v740
    %v758 = vcombine.high %v724, %v740
    %v760 = vunpack.c.l.s4 1934713408
    %v761 = vunpack.c.0.s8 %v760
    %v762 = vlaneseq
    %v763 = vshrl.u32 %v762, 7
    %v764 = vsub.s32 %v761, %v763
    %v765 = vrot.slane %v757, %v764
    %v767 = vunpack.c.l.s4 1934713408
    %v768 = vunpack.c.0.s8 %v767
    %v769 = vlaneseq
    %v770 = vshrl.u32 %v769, 7
    %v771 = vsub.s32 %v768, %v770
    %v772 = vrot.slane %v758, %v771
    %v773 = vcombine.high %v749, 0.0
    %v774 = vcombine.high %v756, 0.0
    %v775 = vcombine.high %v765, 0.0
    %v776 = vcombine.high %v772, 0.0
    %v777 = vcombine.low %v681, %v688
    %v779 = vunpack.c.l.s4 1983009808
    %v780 = vunpack.c.0.s8 %v779
    %v781 = vlaneseq
    %v782 = vshrl.u32 %v781, 7
    %v783 = vsub.s32 %v780, %v782
    %v784 = vrot.slane %v777, %v783
    %v785 = vcombine.low %v705, %v706
    %v787 = vunpack.c.l.s4 1983009808
    %v788 = vunpack.c.0.s8 %v787
    %v789 = vlaneseq
    %v790 = vshrl.u32 %v789, 7
    %v791 = vsub.s32 %v788, %v790
    %v792 = vrot.slane %v785, %v791
    %v793 = vcombine.low %v697, %v704
    %v795 = vunpack.c.l.s4 1983009808
    %v796 = vunpack.c.0.s8 %v795
    %v797 = vlaneseq
    %v798 = vshrl.u32 %v797, 7
    %v799 = vsub.s32 %v796, %v798
    %v800 = vrot.slane %v793, %v799
    %v801 = vcombine.low %v707, %v708
    %v803 = vunpack.c.l.s4 1983009808
    %v804 = vunpack.c.0.s8 %v803
    %v805 = vlaneseq
    %v806 = vshrl.u32 %v805, 7
    %v807 = vsub.s32 %v804, %v806
    %v808 = vrot.slane %v801, %v807
    %v809 = vcombine.low %v784, %v792
    %v810 = vcombine.high %v784, %v792
    %v812 = vunpack.c.l.s4 1934713408
    %v813 = vunpack.c.0.s8 %v812
    %v814 = vlaneseq
    %v815 = vshrl.u32 %v814, 7
    %v816 = vsub.s32 %v813, %v815
    %v817 = vrot.slane %v809, %v816
    %v819 = vunpack.c.l.s4 1934713408
    %v820 = vunpack.c.0.s8 %v819
    %v821 = vlaneseq
    %v822 = vshrl.u32 %v821, 7
    %v823 = vsub.s32 %v820, %v822
    %v824 = vrot.slane %v810, %v823
    %v825 = vcombine.low %v800, %v808
    %v826 = vcombine.high %v800, %v808
    %v828 = vunpack.c.l.s4 1934713408
    %v829 = vunpack.c.0.s8 %v828
    %v830 = vlaneseq
    %v831 = vshrl.u32 %v830, 7
    %v832 = vsub.s32 %v829, %v831
    %v833 = vrot.slane %v825, %v832
    %v835 = vunpack.c.l.s4 1934713408
    %v836 = vunpack.c.0.s8 %v835
    %v837 = vlaneseq
    %v838 = vshrl.u32 %v837, 7
    %v839 = vsub.s32 %v836, %v838
    %v840 = vrot.slane %v826, %v839
    %v841 = vcombine.low %v817, %v833
    %v842 = vcombine.high %v817, %v833
    %v843 = vcombine.low %v824, %v840
    %v844 = vcombine.high %v824, %v840
    %v845 = vcombine.low %v749, %v756
    %v847 = vunpack.c.l.s4 1983009808
    %v848 = vunpack.c.0.s8 %v847
    %v849 = vlaneseq
    %v850 = vshrl.u32 %v849, 7
    %v851 = vsub.s32 %v848, %v850
    %v852 = vrot.slane %v845, %v851
    %v853 = vcombine.low %v773, %v774
    %v855 = vunpack.c.l.s4 1983009808
    %v856 = vunpack.c.0.s8 %v855
    %v857 = vlaneseq
    %v858 = vshrl.u32 %v857, 7
    %v859 = vsub.s32 %v856, %v858
    %v860 = vrot.slane %v853, %v859
    %v861 = vcombine.low %v765, %v772
    %v863 = vunpack.c.l.s4 1983009808
    %v864 = vunpack.c.0.s8 %v863
    %v865 = vlaneseq
    %v866 = vshrl.u32 %v865, 7
    %v867 = vsub.s32 %v864, %v866
    %v868 = vrot.slane %v861, %v867
    %v869 = vcombine.low %v775, %v776
    %v871 = vunpack.c.l.s4 1983009808
    %v872 = vunpack.c.0.s8 %v871
    %v873 = vlaneseq
    %v874 = vshrl.u32 %v873, 7
    %v875 = vsub.s32 %v872, %v874
    %v876 = vrot.slane %v869, %v875
    %v877 = vcombine.low %v852, %v860
    %v878 = vcombine.high %v852, %v860
    %v880 = vunpack.c.l.s4 1934713408
    %v881 = vunpack.c.0.s8 %v880
    %v882 = vlaneseq
    %v883 = vshrl.u32 %v882, 7
    %v884 = vsub.s32 %v881, %v883
    %v885 = vrot.slane %v877, %v884
    %v887 = vunpack.c.l.s4 1934713408
    %v888 = vunpack.c.0.s8 %v887
    %v889 = vlaneseq
    %v890 = vshrl.u32 %v889, 7
    %v891 = vsub.s32 %v888, %v890
    %v892 = vrot.slane %v878, %v891
    %v893 = vcombine.low %v868, %v876
    %v894 = vcombine.high %v868, %v876
    %v896 = vunpack.c.l.s4 1934713408
    %v897 = vunpack.c.0.s8 %v896
    %v898 = vlaneseq
    %v899 = vshrl.u32 %v898, 7
    %v900 = vsub.s32 %v897, %v899
    %v901 = vrot.slane %v893, %v900
    %v903 = vunpack.c.l.s4 1934713408
    %v904 = vunpack.c.0.s8 %v903
    %v905 = vlaneseq
    %v906 = vshrl.u32 %v905, 7
    %v907 = vsub.s32 %v904, %v906
    %v908 = vrot.slane %v894, %v907
    %v909 = vcombine.low %v885, %v901
    %v910 = vcombine.high %v885, %v901
    %v911 = vcombine.low %v892, %v908
    %v912 = vcombine.high %v892, %v908
    %915 = vrot.lane.b32.xlu0 %v321, 112
    %v916 = vpop.permute.xlu0 %915
    %917 = vrot.lane.b32.xlu0 %v326, 112
    %v918 = vpop.permute.xlu0 %917
    %921 = vrot.lane.b32.xlu0 %v321, 96
    %v922 = vpop.permute.xlu0 %921
    %923 = vrot.lane.b32.xlu0 %v326, 96
    %v924 = vpop.permute.xlu0 %923
    %927 = vrot.lane.b32.xlu0 %v321, 80
    %v928 = vpop.permute.xlu0 %927
    %929 = vrot.lane.b32.xlu0 %v326, 80
    %v930 = vpop.permute.xlu0 %929
    %v933 = vcombine.low %v321, %v922
    %v934 = vcombine.high %v321, %v922
    %v936 = vunpack.c.l.s4 1983009808
    %v937 = vunpack.c.0.s8 %v936
    %v938 = vlaneseq
    %v939 = vshrl.u32 %v938, 7
    %v940 = vsub.s32 %v937, %v939
    %v941 = vrot.slane %v933, %v940
    %v943 = vunpack.c.l.s4 1983009808
    %v944 = vunpack.c.0.s8 %v943
    %v945 = vlaneseq
    %v946 = vshrl.u32 %v945, 7
    %v947 = vsub.s32 %v944, %v946
    %v948 = vrot.slane %v934, %v947
    %v949 = vcombine.low %v916, %v928
    %v950 = vcombine.high %v916, %v928
    %v952 = vunpack.c.l.s4 1983009808
    %v953 = vunpack.c.0.s8 %v952
    %v954 = vlaneseq
    %v955 = vshrl.u32 %v954, 7
    %v956 = vsub.s32 %v953, %v955
    %v957 = vrot.slane %v949, %v956
    %v959 = vunpack.c.l.s4 1983009808
    %v960 = vunpack.c.0.s8 %v959
    %v961 = vlaneseq
    %v962 = vshrl.u32 %v961, 7
    %v963 = vsub.s32 %v960, %v962
    %v964 = vrot.slane %v950, %v963
    %v965 = vcombine.low %v941, %v957
    %v966 = vcombine.high %v941, %v957
    %v968 = vunpack.c.l.s4 1934713408
    %v969 = vunpack.c.0.s8 %v968
    %v970 = vlaneseq
    %v971 = vshrl.u32 %v970, 7
    %v972 = vsub.s32 %v969, %v971
    %v973 = vrot.slane %v965, %v972
    %v975 = vunpack.c.l.s4 1934713408
    %v976 = vunpack.c.0.s8 %v975
    %v977 = vlaneseq
    %v978 = vshrl.u32 %v977, 7
    %v979 = vsub.s32 %v976, %v978
    %v980 = vrot.slane %v966, %v979
    %v981 = vcombine.low %v948, %v964
    %v982 = vcombine.high %v948, %v964
    %v984 = vunpack.c.l.s4 1934713408
    %v985 = vunpack.c.0.s8 %v984
    %v986 = vlaneseq
    %v987 = vshrl.u32 %v986, 7
    %v988 = vsub.s32 %v985, %v987
    %v989 = vrot.slane %v981, %v988
    %v991 = vunpack.c.l.s4 1934713408
    %v992 = vunpack.c.0.s8 %v991
    %v993 = vlaneseq
    %v994 = vshrl.u32 %v993, 7
    %v995 = vsub.s32 %v992, %v994
    %v996 = vrot.slane %v982, %v995
    %v997 = vcombine.high %v973, 0.0
    %v998 = vcombine.high %v980, 0.0
    %v999 = vcombine.high %v989, 0.0
    %v1000 = vcombine.high %v996, 0.0
    %v1001 = vcombine.low %v326, %v924
    %v1002 = vcombine.high %v326, %v924
    %v1004 = vunpack.c.l.s4 1983009808
    %v1005 = vunpack.c.0.s8 %v1004
    %v1006 = vlaneseq
    %v1007 = vshrl.u32 %v1006, 7
    %v1008 = vsub.s32 %v1005, %v1007
    %v1009 = vrot.slane %v1001, %v1008
    %v1011 = vunpack.c.l.s4 1983009808
    %v1012 = vunpack.c.0.s8 %v1011
    %v1013 = vlaneseq
    %v1014 = vshrl.u32 %v1013, 7
    %v1015 = vsub.s32 %v1012, %v1014
    %v1016 = vrot.slane %v1002, %v1015
    %v1017 = vcombine.low %v918, %v930
    %v1018 = vcombine.high %v918, %v930
    %v1020 = vunpack.c.l.s4 1983009808
    %v1021 = vunpack.c.0.s8 %v1020
    %v1022 = vlaneseq
    %v1023 = vshrl.u32 %v1022, 7
    %v1024 = vsub.s32 %v1021, %v1023
    %v1025 = vrot.slane %v1017, %v1024
    %v1027 = vunpack.c.l.s4 1983009808
    %v1028 = vunpack.c.0.s8 %v1027
    %v1029 = vlaneseq
    %v1030 = vshrl.u32 %v1029, 7
    %v1031 = vsub.s32 %v1028, %v1030
    %v1032 = vrot.slane %v1018, %v1031
    %v1033 = vcombine.low %v1009, %v1025
    %v1034 = vcombine.high %v1009, %v1025
    %v1036 = vunpack.c.l.s4 1934713408
    %v1037 = vunpack.c.0.s8 %v1036
    %v1038 = vlaneseq
    %v1039 = vshrl.u32 %v1038, 7
    %v1040 = vsub.s32 %v1037, %v1039
    %v1041 = vrot.slane %v1033, %v1040
    %v1043 = vunpack.c.l.s4 1934713408
    %v1044 = vunpack.c.0.s8 %v1043
    %v1045 = vlaneseq
    %v1046 = vshrl.u32 %v1045, 7
    %v1047 = vsub.s32 %v1044, %v1046
    %v1048 = vrot.slane %v1034, %v1047
    %v1049 = vcombine.low %v1016, %v1032
    %v1050 = vcombine.high %v1016, %v1032
    %v1052 = vunpack.c.l.s4 1934713408
    %v1053 = vunpack.c.0.s8 %v1052
    %v1054 = vlaneseq
    %v1055 = vshrl.u32 %v1054, 7
    %v1056 = vsub.s32 %v1053, %v1055
    %v1057 = vrot.slane %v1049, %v1056
    %v1059 = vunpack.c.l.s4 1934713408
    %v1060 = vunpack.c.0.s8 %v1059
    %v1061 = vlaneseq
    %v1062 = vshrl.u32 %v1061, 7
    %v1063 = vsub.s32 %v1060, %v1062
    %v1064 = vrot.slane %v1050, %v1063
    %v1065 = vcombine.high %v1041, 0.0
    %v1066 = vcombine.high %v1048, 0.0
    %v1067 = vcombine.high %v1057, 0.0
    %v1068 = vcombine.high %v1064, 0.0
    %v1069 = vcombine.low %v973, %v980
    %v1071 = vunpack.c.l.s4 1983009808
    %v1072 = vunpack.c.0.s8 %v1071
    %v1073 = vlaneseq
    %v1074 = vshrl.u32 %v1073, 7
    %v1075 = vsub.s32 %v1072, %v1074
    %v1076 = vrot.slane %v1069, %v1075
    %v1077 = vcombine.low %v997, %v998
    %v1079 = vunpack.c.l.s4 1983009808
    %v1080 = vunpack.c.0.s8 %v1079
    %v1081 = vlaneseq
    %v1082 = vshrl.u32 %v1081, 7
    %v1083 = vsub.s32 %v1080, %v1082
    %v1084 = vrot.slane %v1077, %v1083
    %v1085 = vcombine.low %v989, %v996
    %v1087 = vunpack.c.l.s4 1983009808
    %v1088 = vunpack.c.0.s8 %v1087
    %v1089 = vlaneseq
    %v1090 = vshrl.u32 %v1089, 7
    %v1091 = vsub.s32 %v1088, %v1090
    %v1092 = vrot.slane %v1085, %v1091
    %v1093 = vcombine.low %v999, %v1000
    %v1095 = vunpack.c.l.s4 1983009808
    %v1096 = vunpack.c.0.s8 %v1095
    %v1097 = vlaneseq
    %v1098 = vshrl.u32 %v1097, 7
    %v1099 = vsub.s32 %v1096, %v1098
    %v1100 = vrot.slane %v1093, %v1099
    %v1101 = vcombine.low %v1076, %v1084
    %v1102 = vcombine.high %v1076, %v1084
    %v1104 = vunpack.c.l.s4 1934713408
    %v1105 = vunpack.c.0.s8 %v1104
    %v1106 = vlaneseq
    %v1107 = vshrl.u32 %v1106, 7
    %v1108 = vsub.s32 %v1105, %v1107
    %v1109 = vrot.slane %v1101, %v1108
    %v1111 = vunpack.c.l.s4 1934713408
    %v1112 = vunpack.c.0.s8 %v1111
    %v1113 = vlaneseq
    %v1114 = vshrl.u32 %v1113, 7
    %v1115 = vsub.s32 %v1112, %v1114
    %v1116 = vrot.slane %v1102, %v1115
    %v1117 = vcombine.low %v1092, %v1100
    %v1118 = vcombine.high %v1092, %v1100
    %v1120 = vunpack.c.l.s4 1934713408
    %v1121 = vunpack.c.0.s8 %v1120
    %v1122 = vlaneseq
    %v1123 = vshrl.u32 %v1122, 7
    %v1124 = vsub.s32 %v1121, %v1123
    %v1125 = vrot.slane %v1117, %v1124
    %v1127 = vunpack.c.l.s4 1934713408
    %v1128 = vunpack.c.0.s8 %v1127
    %v1129 = vlaneseq
    %v1130 = vshrl.u32 %v1129, 7
    %v1131 = vsub.s32 %v1128, %v1130
    %v1132 = vrot.slane %v1118, %v1131
    %v1133 = vcombine.low %v1109, %v1125
    %v1134 = vcombine.high %v1109, %v1125
    %v1135 = vcombine.low %v1116, %v1132
    %v1136 = vcombine.high %v1116, %v1132
    %v1137 = vcombine.low %v1041, %v1048
    %v1139 = vunpack.c.l.s4 1983009808
    %v1140 = vunpack.c.0.s8 %v1139
    %v1141 = vlaneseq
    %v1142 = vshrl.u32 %v1141, 7
    %v1143 = vsub.s32 %v1140, %v1142
    %v1144 = vrot.slane %v1137, %v1143
    %v1145 = vcombine.low %v1065, %v1066
    %v1147 = vunpack.c.l.s4 1983009808
    %v1148 = vunpack.c.0.s8 %v1147
    %v1149 = vlaneseq
    %v1150 = vshrl.u32 %v1149, 7
    %v1151 = vsub.s32 %v1148, %v1150
    %v1152 = vrot.slane %v1145, %v1151
    %v1153 = vcombine.low %v1057, %v1064
    %v1155 = vunpack.c.l.s4 1983009808
    %v1156 = vunpack.c.0.s8 %v1155
    %v1157 = vlaneseq
    %v1158 = vshrl.u32 %v1157, 7
    %v1159 = vsub.s32 %v1156, %v1158
    %v1160 = vrot.slane %v1153, %v1159
    %v1161 = vcombine.low %v1067, %v1068
    %v1163 = vunpack.c.l.s4 1983009808
    %v1164 = vunpack.c.0.s8 %v1163
    %v1165 = vlaneseq
    %v1166 = vshrl.u32 %v1165, 7
    %v1167 = vsub.s32 %v1164, %v1166
    %v1168 = vrot.slane %v1161, %v1167
    %v1169 = vcombine.low %v1144, %v1152
    %v1170 = vcombine.high %v1144, %v1152
    %v1172 = vunpack.c.l.s4 1934713408
    %v1173 = vunpack.c.0.s8 %v1172
    %v1174 = vlaneseq
    %v1175 = vshrl.u32 %v1174, 7
    %v1176 = vsub.s32 %v1173, %v1175
    %v1177 = vrot.slane %v1169, %v1176
    %v1179 = vunpack.c.l.s4 1934713408
    %v1180 = vunpack.c.0.s8 %v1179
    %v1181 = vlaneseq
    %v1182 = vshrl.u32 %v1181, 7
    %v1183 = vsub.s32 %v1180, %v1182
    %v1184 = vrot.slane %v1170, %v1183
    %v1185 = vcombine.low %v1160, %v1168
    %v1186 = vcombine.high %v1160, %v1168
    %v1188 = vunpack.c.l.s4 1934713408
    %v1189 = vunpack.c.0.s8 %v1188
    %v1190 = vlaneseq
    %v1191 = vshrl.u32 %v1190, 7
    %v1192 = vsub.s32 %v1189, %v1191
    %v1193 = vrot.slane %v1185, %v1192
    %v1195 = vunpack.c.l.s4 1934713408
    %v1196 = vunpack.c.0.s8 %v1195
    %v1197 = vlaneseq
    %v1198 = vshrl.u32 %v1197, 7
    %v1199 = vsub.s32 %v1196, %v1198
    %v1200 = vrot.slane %v1186, %v1199
    %v1201 = vcombine.low %v1177, %v1193
    %v1202 = vcombine.high %v1177, %v1193
    %v1203 = vcombine.low %v1184, %v1200
    %v1204 = vcombine.high %v1184, %v1200
    %v1205 = vld [vmem:[%s6] sm:$0xff]
    %v1206 = vld [vmem:[%s7] sm:$0xff]
    %v1207 = vsub.f32 0.0, %v549
    %v1208 = vsub.f32 0.0, %v550
    %v1209 = vsub.f32 0.0, %v551
    %v1210 = vsub.f32 0.0, %v552
    %v1211 = vsub.f32 0.0, %v617
    %v1212 = vsub.f32 0.0, %v618
    %v1213 = vsub.f32 0.0, %v619
    %v1214 = vsub.f32 0.0, %v620
    %1223 = vrot.lane.b32.xlu0 %v1207, 120
    %v1224 = vpop.permute.xlu0 %1223
    %1225 = vrot.lane.b32.xlu0 %v1208, 120
    %v1226 = vpop.permute.xlu0 %1225
    %1227 = vrot.lane.b32.xlu0 %v1209, 120
    %v1228 = vpop.permute.xlu0 %1227
    %1229 = vrot.lane.b32.xlu0 %v1210, 120
    %v1230 = vpop.permute.xlu0 %1229
    %1231 = vrot.lane.b32.xlu0 %v1211, 120
    %v1232 = vpop.permute.xlu0 %1231
    %1233 = vrot.lane.b32.xlu0 %v1212, 120
    %v1234 = vpop.permute.xlu0 %1233
    %1235 = vrot.lane.b32.xlu0 %v1213, 120
    %v1236 = vpop.permute.xlu0 %1235
    %1237 = vrot.lane.b32.xlu0 %v1214, 120
    %v1238 = vpop.permute.xlu0 %1237
    %1255 = vrot.lane.b32.xlu0 %v549, 8
    %v1256 = vpop.permute.xlu0 %1255
    %1257 = vrot.lane.b32.xlu0 %v550, 8
    %v1258 = vpop.permute.xlu0 %1257
    %1259 = vrot.lane.b32.xlu0 %v551, 8
    %v1260 = vpop.permute.xlu0 %1259
    %1261 = vrot.lane.b32.xlu0 %v552, 8
    %v1262 = vpop.permute.xlu0 %1261
    %1263 = vrot.lane.b32.xlu0 %v617, 8
    %v1264 = vpop.permute.xlu0 %1263
    %1265 = vrot.lane.b32.xlu0 %v618, 8
    %v1266 = vpop.permute.xlu0 %1265
    %1267 = vrot.lane.b32.xlu0 %v619, 8
    %v1268 = vpop.permute.xlu0 %1267
    %1269 = vrot.lane.b32.xlu0 %v620, 8
    %v1270 = vpop.permute.xlu0 %1269
    %vm1279 = vcmask 64512
    %v1280 = vsel %vm1279, %v1224, %v1256
    %v1281 = vsel %vm1279, %v1226, %v1258
    %v1282 = vsel %vm1279, %v1228, %v1260
    %v1283 = vsel %vm1279, %v1230, %v1262
    %v1284 = vsel %vm1279, %v1232, %v1264
    %v1285 = vsel %vm1279, %v1234, %v1266
    %v1286 = vsel %vm1279, %v1236, %v1268
    %v1287 = vsel %vm1279, %v1238, %v1270
    %v1288 = vmul.f32 %v549, %v1205
    %v1289 = vmul.f32 %v550, %v1205
    %v1290 = vmul.f32 %v551, %v1205
    %v1291 = vmul.f32 %v552, %v1205
    %v1292 = vmul.f32 %v617, %v1205
    %v1293 = vmul.f32 %v618, %v1205
    %v1294 = vmul.f32 %v619, %v1205
    %v1295 = vmul.f32 %v620, %v1205
    %v1296 = vmul.f32 %v1280, %v1206
    %v1297 = vmul.f32 %v1281, %v1206
    %v1298 = vmul.f32 %v1282, %v1206
    %v1299 = vmul.f32 %v1283, %v1206
    %v1300 = vmul.f32 %v1284, %v1206
    %v1301 = vmul.f32 %v1285, %v1206
    %v1302 = vmul.f32 %v1286, %v1206
    %v1303 = vmul.f32 %v1287, %v1206
    %v1304 = vadd.f32 %v1288, %v1296
    %v1305 = vadd.f32 %v1289, %v1297
    %v1306 = vadd.f32 %v1290, %v1298
    %v1307 = vadd.f32 %v1291, %v1299
    %v1308 = vadd.f32 %v1292, %v1300
    %v1309 = vadd.f32 %v1293, %v1301
    %v1310 = vadd.f32 %v1294, %v1302
    %v1311 = vadd.f32 %v1295, %v1303
    %v1312 = vmul.f32 %v1304, 0.25
    %v1313 = vmul.f32 %v1305, 0.25
    %v1314 = vmul.f32 %v1306, 0.25
    %v1315 = vmul.f32 %v1307, 0.25
    %v1316 = vmul.f32 %v1308, 0.25
    %v1317 = vmul.f32 %v1309, 0.25
    %v1318 = vmul.f32 %v1310, 0.25
    %v1319 = vmul.f32 %v1311, 0.25
    %v1320 = vsub.f32 0.0, %v841
    %v1321 = vsub.f32 0.0, %v842
    %v1322 = vsub.f32 0.0, %v843
    %v1323 = vsub.f32 0.0, %v844
    %v1324 = vsub.f32 0.0, %v909
    %v1325 = vsub.f32 0.0, %v910
    %v1326 = vsub.f32 0.0, %v911
    %v1327 = vsub.f32 0.0, %v912
    %1336 = vrot.lane.b32.xlu0 %v1320, 120
    %v1337 = vpop.permute.xlu0 %1336
    %1338 = vrot.lane.b32.xlu0 %v1321, 120
    %v1339 = vpop.permute.xlu0 %1338
    %1340 = vrot.lane.b32.xlu0 %v1322, 120
    %v1341 = vpop.permute.xlu0 %1340
    %1342 = vrot.lane.b32.xlu0 %v1323, 120
    %v1343 = vpop.permute.xlu0 %1342
    %1344 = vrot.lane.b32.xlu0 %v1324, 120
    %v1345 = vpop.permute.xlu0 %1344
    %1346 = vrot.lane.b32.xlu0 %v1325, 120
    %v1347 = vpop.permute.xlu0 %1346
    %1348 = vrot.lane.b32.xlu0 %v1326, 120
    %v1349 = vpop.permute.xlu0 %1348
    %1350 = vrot.lane.b32.xlu0 %v1327, 120
    %v1351 = vpop.permute.xlu0 %1350
    %1368 = vrot.lane.b32.xlu0 %v841, 8
    %v1369 = vpop.permute.xlu0 %1368
    %1370 = vrot.lane.b32.xlu0 %v842, 8
    %v1371 = vpop.permute.xlu0 %1370
    %1372 = vrot.lane.b32.xlu0 %v843, 8
    %v1373 = vpop.permute.xlu0 %1372
    %1374 = vrot.lane.b32.xlu0 %v844, 8
    %v1375 = vpop.permute.xlu0 %1374
    %1376 = vrot.lane.b32.xlu0 %v909, 8
    %v1377 = vpop.permute.xlu0 %1376
    %1378 = vrot.lane.b32.xlu0 %v910, 8
    %v1379 = vpop.permute.xlu0 %1378
    %1380 = vrot.lane.b32.xlu0 %v911, 8
    %v1381 = vpop.permute.xlu0 %1380
    %1382 = vrot.lane.b32.xlu0 %v912, 8
    %v1383 = vpop.permute.xlu0 %1382
    %v1392 = vsel %vm1279, %v1337, %v1369
    %v1393 = vsel %vm1279, %v1339, %v1371
    %v1394 = vsel %vm1279, %v1341, %v1373
    %v1395 = vsel %vm1279, %v1343, %v1375
    %v1396 = vsel %vm1279, %v1345, %v1377
    %v1397 = vsel %vm1279, %v1347, %v1379
    %v1398 = vsel %vm1279, %v1349, %v1381
    %v1399 = vsel %vm1279, %v1351, %v1383
    %v1400 = vmul.f32 %v841, %v1205
    %v1401 = vmul.f32 %v842, %v1205
    %v1402 = vmul.f32 %v843, %v1205
    %v1403 = vmul.f32 %v844, %v1205
    %v1404 = vmul.f32 %v909, %v1205
    %v1405 = vmul.f32 %v910, %v1205
    %v1406 = vmul.f32 %v911, %v1205
    %v1407 = vmul.f32 %v912, %v1205
    %v1408 = vmul.f32 %v1392, %v1206
    %v1409 = vmul.f32 %v1393, %v1206
    %v1410 = vmul.f32 %v1394, %v1206
    %v1411 = vmul.f32 %v1395, %v1206
    %v1412 = vmul.f32 %v1396, %v1206
    %v1413 = vmul.f32 %v1397, %v1206
    %v1414 = vmul.f32 %v1398, %v1206
    %v1415 = vmul.f32 %v1399, %v1206
    %v1416 = vadd.f32 %v1400, %v1408
    %v1417 = vadd.f32 %v1401, %v1409
    %v1418 = vadd.f32 %v1402, %v1410
    %v1419 = vadd.f32 %v1403, %v1411
    %v1420 = vadd.f32 %v1404, %v1412
    %v1421 = vadd.f32 %v1405, %v1413
    %v1422 = vadd.f32 %v1406, %v1414
    %v1423 = vadd.f32 %v1407, %v1415
    %vm1424 = vcmask 130048
    %v1426 = vsel %vm1424, %v1312, 0
    %v1429 = vsel %vm1424, %v1416, 0
    %1431 = vmatprep.subr.mxu0 0.0
    %1432 = vmatpush1.xpose.msra.mxu0 %v1429
    %1433 = vmatprep.subr.mxu0 0.0
    %1434 = vmatpush1.xpose.msra.mxu0 0.0
    %1435 = vmatprep.subr.mxu0 0.0
    %1436 = vmatpush1.xpose.msra.mxu0 0.0
    %1437 = vmatprep.subr.mxu0 0.0
    %1438 = vmatpush1.xpose.msra.mxu0 0.0
    %1439 = vmatprep.subr.mxu0 0.0
    %1440 = vmatpush1.xpose.msra.mxu0 0.0
    %1441 = vmatprep.subr.mxu0 0.0
    %1442 = vmatpush1.xpose.msra.mxu0 0.0
    %1443 = vmatprep.subr.mxu0 0.0
    %1444 = vmatpush1.xpose.msra.mxu0 0.0
    %1445 = vmatprep.subr.mxu0 0.0
    %1446 = vmatpush1.xpose.msra.mxu0 0.0
    %1447 = vmatprep.subr.mxu0 0.0
    %1448 = vmatpush1.xpose.msra.mxu0 0.0
    %1449 = vmatprep.subr.mxu0 0.0
    %1450 = vmatpush1.xpose.msra.mxu0 0.0
    %1451 = vmatprep.subr.mxu0 0.0
    %1452 = vmatpush1.xpose.msra.mxu0 0.0
    %1453 = vmatprep.subr.mxu0 0.0
    %1454 = vmatpush1.xpose.msra.mxu0 0.0
    %1455 = vmatprep.subr.mxu0 0.0
    %1456 = vmatpush1.xpose.msra.mxu0 0.0
    %1457 = vmatprep.subr.mxu0 0.0
    %1458 = vmatpush1.xpose.msra.mxu0 0.0
    %1459 = vmatprep.subr.mxu0 0.0
    %1460 = vmatpush1.xpose.msra.mxu0 0.0
    %1461 = vmatprep.subr.mxu0 0.0
    %1462 = vmatpush1.xpose.msra.mxu0 0.0
    %1463 = vmatprep.subr.mxu0 0.0
    %1464 = vmatpush1.xpose.msra.mxu0 0.0
    %1465 = vmatprep.subr.mxu0 0.0
    %1466 = vmatpush1.xpose.msra.mxu0 0.0
    %1467 = vmatprep.subr.mxu0 0.0
    %1468 = vmatpush1.xpose.msra.mxu0 0.0
    %1469 = vmatprep.subr.mxu0 0.0
    %1470 = vmatpush1.xpose.msra.mxu0 0.0
    %1471 = vmatprep.subr.mxu0 0.0
    %1472 = vmatpush1.xpose.msra.mxu0 0.0
    %1473 = vmatprep.subr.mxu0 0.0
    %1474 = vmatpush1.xpose.msra.mxu0 0.0
    %1475 = vmatprep.subr.mxu0 0.0
    %1476 = vmatpush1.xpose.msra.mxu0 0.0
    %1477 = vmatprep.subr.mxu0 0.0
    %1478 = vmatpush1.xpose.msra.mxu0 0.0
    %1479 = vmatprep.subr.mxu0 0.0
    %1480 = vmatpush1.xpose.msra.mxu0 0.0
    %1481 = vmatprep.subr.mxu0 0.0
    %1482 = vmatpush1.xpose.msra.mxu0 0.0
    %1483 = vmatprep.subr.mxu0 0.0
    %1484 = vmatpush1.xpose.msra.mxu0 0.0
    %1485 = vmatprep.subr.mxu0 0.0
    %1486 = vmatpush1.xpose.msra.mxu0 0.0
    %1487 = vmatprep.subr.mxu0 0.0
    %1488 = vmatpush1.xpose.msra.mxu0 0.0
    %1489 = vmatprep.subr.mxu0 0.0
    %1490 = vmatpush1.xpose.msra.mxu0 0.0
    %1491 = vmatprep.subr.mxu0 0.0
    %1492 = vmatpush1.xpose.msra.mxu0 0.0
    %1493 = vmatprep.subr.mxu0 0.0
    %1494 = vmatpush1.xpose.msra.mxu0 0.0
    %1495 = vmatprep.mubr.f32.mxu0 0.0
    %1496 = vmatmul.mubr.f32.gmra.mrb[0].mxu0 %v1426
    %v1497 = vpop.f32.mrb[0].mxu0
    %v1498 = vadd.f32 0.0, %v1497
    %v1499 = vpop.f32.mrb[0].mxu0
    %1500 = vdwg.mxu0
    %v1502 = vsel %vm1424, %v1313, 0
    %v1505 = vsel %vm1424, %v1417, 0
    %1507 = vmatprep.subr.mxu0 0.0
    %1508 = vmatpush1.xpose.msra.mxu0 %v1505
    %1509 = vmatprep.subr.mxu0 0.0
    %1510 = vmatpush1.xpose.msra.mxu0 0.0
    %1511 = vmatprep.subr.mxu0 0.0
    %1512 = vmatpush1.xpose.msra.mxu0 0.0
    %1513 = vmatprep.subr.mxu0 0.0
    %1514 = vmatpush1.xpose.msra.mxu0 0.0
    %1515 = vmatprep.subr.mxu0 0.0
    %1516 = vmatpush1.xpose.msra.mxu0 0.0
    %1517 = vmatprep.subr.mxu0 0.0
    %1518 = vmatpush1.xpose.msra.mxu0 0.0
    %1519 = vmatprep.subr.mxu0 0.0
    %1520 = vmatpush1.xpose.msra.mxu0 0.0
    %1521 = vmatprep.subr.mxu0 0.0
    %1522 = vmatpush1.xpose.msra.mxu0 0.0
    %1523 = vmatprep.subr.mxu0 0.0
    %1524 = vmatpush1.xpose.msra.mxu0 0.0
    %1525 = vmatprep.subr.mxu0 0.0
    %1526 = vmatpush1.xpose.msra.mxu0 0.0
    %1527 = vmatprep.subr.mxu0 0.0
    %1528 = vmatpush1.xpose.msra.mxu0 0.0
    %1529 = vmatprep.subr.mxu0 0.0
    %1530 = vmatpush1.xpose.msra.mxu0 0.0
    %1531 = vmatprep.subr.mxu0 0.0
    %1532 = vmatpush1.xpose.msra.mxu0 0.0
    %1533 = vmatprep.subr.mxu0 0.0
    %1534 = vmatpush1.xpose.msra.mxu0 0.0
    %1535 = vmatprep.subr.mxu0 0.0
    %1536 = vmatpush1.xpose.msra.mxu0 0.0
    %1537 = vmatprep.subr.mxu0 0.0
    %1538 = vmatpush1.xpose.msra.mxu0 0.0
    %1539 = vmatprep.subr.mxu0 0.0
    %1540 = vmatpush1.xpose.msra.mxu0 0.0
    %1541 = vmatprep.subr.mxu0 0.0
    %1542 = vmatpush1.xpose.msra.mxu0 0.0
    %1543 = vmatprep.subr.mxu0 0.0
    %1544 = vmatpush1.xpose.msra.mxu0 0.0
    %1545 = vmatprep.subr.mxu0 0.0
    %1546 = vmatpush1.xpose.msra.mxu0 0.0
    %1547 = vmatprep.subr.mxu0 0.0
    %1548 = vmatpush1.xpose.msra.mxu0 0.0
    %1549 = vmatprep.subr.mxu0 0.0
    %1550 = vmatpush1.xpose.msra.mxu0 0.0
    %1551 = vmatprep.subr.mxu0 0.0
    %1552 = vmatpush1.xpose.msra.mxu0 0.0
    %1553 = vmatprep.subr.mxu0 0.0
    %1554 = vmatpush1.xpose.msra.mxu0 0.0
    %1555 = vmatprep.subr.mxu0 0.0
    %1556 = vmatpush1.xpose.msra.mxu0 0.0
    %1557 = vmatprep.subr.mxu0 0.0
    %1558 = vmatpush1.xpose.msra.mxu0 0.0
    %1559 = vmatprep.subr.mxu0 0.0
    %1560 = vmatpush1.xpose.msra.mxu0 0.0
    %1561 = vmatprep.subr.mxu0 0.0
    %1562 = vmatpush1.xpose.msra.mxu0 0.0
    %1563 = vmatprep.subr.mxu0 0.0
    %1564 = vmatpush1.xpose.msra.mxu0 0.0
    %1565 = vmatprep.subr.mxu0 0.0
    %1566 = vmatpush1.xpose.msra.mxu0 0.0
    %1567 = vmatprep.subr.mxu0 0.0
    %1568 = vmatpush1.xpose.msra.mxu0 0.0
    %1569 = vmatprep.subr.mxu0 0.0
    %1570 = vmatpush1.xpose.msra.mxu0 0.0
    %1571 = vmatprep.mubr.f32.mxu0 0.0
    %1572 = vmatmul.mubr.f32.gmra.mrb[0].mxu0 %v1502
    %v1573 = vpop.f32.mrb[0].mxu0
    %v1574 = vadd.f32 0.0, %v1573
    %v1575 = vpop.f32.mrb[0].mxu0
    %1576 = vdwg.mxu0
    %v1578 = vsel %vm1424, %v1314, 0
    %v1581 = vsel %vm1424, %v1418, 0
    %1583 = vmatprep.subr.mxu0 0.0
    %1584 = vmatpush1.xpose.msra.mxu0 %v1581
    %1585 = vmatprep.subr.mxu0 0.0
    %1586 = vmatpush1.xpose.msra.mxu0 0.0
    %1587 = vmatprep.subr.mxu0 0.0
    %1588 = vmatpush1.xpose.msra.mxu0 0.0
    %1589 = vmatprep.subr.mxu0 0.0
    %1590 = vmatpush1.xpose.msra.mxu0 0.0
    %1591 = vmatprep.subr.mxu0 0.0
    %1592 = vmatpush1.xpose.msra.mxu0 0.0
    %1593 = vmatprep.subr.mxu0 0.0
    %1594 = vmatpush1.xpose.msra.mxu0 0.0
    %1595 = vmatprep.subr.mxu0 0.0
    %1596 = vmatpush1.xpose.msra.mxu0 0.0
    %1597 = vmatprep.subr.mxu0 0.0
    %1598 = vmatpush1.xpose.msra.mxu0 0.0
    %1599 = vmatprep.subr.mxu0 0.0
    %1600 = vmatpush1.xpose.msra.mxu0 0.0
    %1601 = vmatprep.subr.mxu0 0.0
    %1602 = vmatpush1.xpose.msra.mxu0 0.0
    %1603 = vmatprep.subr.mxu0 0.0
    %1604 = vmatpush1.xpose.msra.mxu0 0.0
    %1605 = vmatprep.subr.mxu0 0.0
    %1606 = vmatpush1.xpose.msra.mxu0 0.0
    %1607 = vmatprep.subr.mxu0 0.0
    %1608 = vmatpush1.xpose.msra.mxu0 0.0
    %1609 = vmatprep.subr.mxu0 0.0
    %1610 = vmatpush1.xpose.msra.mxu0 0.0
    %1611 = vmatprep.subr.mxu0 0.0
    %1612 = vmatpush1.xpose.msra.mxu0 0.0
    %1613 = vmatprep.subr.mxu0 0.0
    %1614 = vmatpush1.xpose.msra.mxu0 0.0
    %1615 = vmatprep.subr.mxu0 0.0
    %1616 = vmatpush1.xpose.msra.mxu0 0.0
    %1617 = vmatprep.subr.mxu0 0.0
    %1618 = vmatpush1.xpose.msra.mxu0 0.0
    %1619 = vmatprep.subr.mxu0 0.0
    %1620 = vmatpush1.xpose.msra.mxu0 0.0
    %1621 = vmatprep.subr.mxu0 0.0
    %1622 = vmatpush1.xpose.msra.mxu0 0.0
    %1623 = vmatprep.subr.mxu0 0.0
    %1624 = vmatpush1.xpose.msra.mxu0 0.0
    %1625 = vmatprep.subr.mxu0 0.0
    %1626 = vmatpush1.xpose.msra.mxu0 0.0
    %1627 = vmatprep.subr.mxu0 0.0
    %1628 = vmatpush1.xpose.msra.mxu0 0.0
    %1629 = vmatprep.subr.mxu0 0.0
    %1630 = vmatpush1.xpose.msra.mxu0 0.0
    %1631 = vmatprep.subr.mxu0 0.0
    %1632 = vmatpush1.xpose.msra.mxu0 0.0
    %1633 = vmatprep.subr.mxu0 0.0
    %1634 = vmatpush1.xpose.msra.mxu0 0.0
    %1635 = vmatprep.subr.mxu0 0.0
    %1636 = vmatpush1.xpose.msra.mxu0 0.0
    %1637 = vmatprep.subr.mxu0 0.0
    %1638 = vmatpush1.xpose.msra.mxu0 0.0
    %1639 = vmatprep.subr.mxu0 0.0
    %1640 = vmatpush1.xpose.msra.mxu0 0.0
    %1641 = vmatprep.subr.mxu0 0.0
    %1642 = vmatpush1.xpose.msra.mxu0 0.0
    %1643 = vmatprep.subr.mxu0 0.0
    %1644 = vmatpush1.xpose.msra.mxu0 0.0
    %1645 = vmatprep.subr.mxu0 0.0
    %1646 = vmatpush1.xpose.msra.mxu0 0.0
    %1647 = vmatprep.mubr.f32.mxu0 0.0
    %1648 = vmatmul.mubr.f32.gmra.mrb[0].mxu0 %v1578
    %v1649 = vpop.f32.mrb[0].mxu0
    %v1650 = vadd.f32 0.0, %v1649
    %v1651 = vpop.f32.mrb[0].mxu0
    %1652 = vdwg.mxu0
    %v1654 = vsel %vm1424, %v1315, 0
    %v1657 = vsel %vm1424, %v1419, 0
    %1659 = vmatprep.subr.mxu0 0.0
    %1660 = vmatpush1.xpose.msra.mxu0 %v1657
    %1661 = vmatprep.subr.mxu0 0.0
    %1662 = vmatpush1.xpose.msra.mxu0 0.0
    %1663 = vmatprep.subr.mxu0 0.0
    %1664 = vmatpush1.xpose.msra.mxu0 0.0
    %1665 = vmatprep.subr.mxu0 0.0
    %1666 = vmatpush1.xpose.msra.mxu0 0.0
    %1667 = vmatprep.subr.mxu0 0.0
    %1668 = vmatpush1.xpose.msra.mxu0 0.0
    %1669 = vmatprep.subr.mxu0 0.0
    %1670 = vmatpush1.xpose.msra.mxu0 0.0
    %1671 = vmatprep.subr.mxu0 0.0
    %1672 = vmatpush1.xpose.msra.mxu0 0.0
    %1673 = vmatprep.subr.mxu0 0.0
    %1674 = vmatpush1.xpose.msra.mxu0 0.0
    %1675 = vmatprep.subr.mxu0 0.0
    %1676 = vmatpush1.xpose.msra.mxu0 0.0
    %1677 = vmatprep.subr.mxu0 0.0
    %1678 = vmatpush1.xpose.msra.mxu0 0.0
    %1679 = vmatprep.subr.mxu0 0.0
    %1680 = vmatpush1.xpose.msra.mxu0 0.0
    %1681 = vmatprep.subr.mxu0 0.0
    %1682 = vmatpush1.xpose.msra.mxu0 0.0
    %1683 = vmatprep.subr.mxu0 0.0
    %1684 = vmatpush1.xpose.msra.mxu0 0.0
    %1685 = vmatprep.subr.mxu0 0.0
    %1686 = vmatpush1.xpose.msra.mxu0 0.0
    %1687 = vmatprep.subr.mxu0 0.0
    %1688 = vmatpush1.xpose.msra.mxu0 0.0
    %1689 = vmatprep.subr.mxu0 0.0
    %1690 = vmatpush1.xpose.msra.mxu0 0.0
    %1691 = vmatprep.subr.mxu0 0.0
    %1692 = vmatpush1.xpose.msra.mxu0 0.0
    %1693 = vmatprep.subr.mxu0 0.0
    %1694 = vmatpush1.xpose.msra.mxu0 0.0
    %1695 = vmatprep.subr.mxu0 0.0
    %1696 = vmatpush1.xpose.msra.mxu0 0.0
    %1697 = vmatprep.subr.mxu0 0.0
    %1698 = vmatpush1.xpose.msra.mxu0 0.0
    %1699 = vmatprep.subr.mxu0 0.0
    %1700 = vmatpush1.xpose.msra.mxu0 0.0
    %1701 = vmatprep.subr.mxu0 0.0
    %1702 = vmatpush1.xpose.msra.mxu0 0.0
    %1703 = vmatprep.subr.mxu0 0.0
    %1704 = vmatpush1.xpose.msra.mxu0 0.0
    %1705 = vmatprep.subr.mxu0 0.0
    %1706 = vmatpush1.xpose.msra.mxu0 0.0
    %1707 = vmatprep.subr.mxu0 0.0
    %1708 = vmatpush1.xpose.msra.mxu0 0.0
    %1709 = vmatprep.subr.mxu0 0.0
    %1710 = vmatpush1.xpose.msra.mxu0 0.0
    %1711 = vmatprep.subr.mxu0 0.0
    %1712 = vmatpush1.xpose.msra.mxu0 0.0
    %1713 = vmatprep.subr.mxu0 0.0
    %1714 = vmatpush1.xpose.msra.mxu0 0.0
    %1715 = vmatprep.subr.mxu0 0.0
    %1716 = vmatpush1.xpose.msra.mxu0 0.0
    %1717 = vmatprep.subr.mxu0 0.0
    %1718 = vmatpush1.xpose.msra.mxu0 0.0
    %1719 = vmatprep.subr.mxu0 0.0
    %1720 = vmatpush1.xpose.msra.mxu0 0.0
    %1721 = vmatprep.subr.mxu0 0.0
    %1722 = vmatpush1.xpose.msra.mxu0 0.0
    %1723 = vmatprep.mubr.f32.mxu0 0.0
    %1724 = vmatmul.mubr.f32.gmra.mrb[0].mxu0 %v1654
    %v1725 = vpop.f32.mrb[0].mxu0
    %v1726 = vadd.f32 0.0, %v1725
    %v1727 = vpop.f32.mrb[0].mxu0
    %1728 = vdwg.mxu0
    %v1730 = vsel %vm1424, %v1316, 0
    %v1733 = vsel %vm1424, %v1420, 0
    %1735 = vmatprep.subr.mxu0 0.0
    %1736 = vmatpush1.xpose.msra.mxu0 %v1733
    %1737 = vmatprep.subr.mxu0 0.0
    %1738 = vmatpush1.xpose.msra.mxu0 0.0
    %1739 = vmatprep.subr.mxu0 0.0
    %1740 = vmatpush1.xpose.msra.mxu0 0.0
    %1741 = vmatprep.subr.mxu0 0.0
    %1742 = vmatpush1.xpose.msra.mxu0 0.0
    %1743 = vmatprep.subr.mxu0 0.0
    %1744 = vmatpush1.xpose.msra.mxu0 0.0
    %1745 = vmatprep.subr.mxu0 0.0
    %1746 = vmatpush1.xpose.msra.mxu0 0.0
    %1747 = vmatprep.subr.mxu0 0.0
    %1748 = vmatpush1.xpose.msra.mxu0 0.0
    %1749 = vmatprep.subr.mxu0 0.0
    %1750 = vmatpush1.xpose.msra.mxu0 0.0
    %1751 = vmatprep.subr.mxu0 0.0
    %1752 = vmatpush1.xpose.msra.mxu0 0.0
    %1753 = vmatprep.subr.mxu0 0.0
    %1754 = vmatpush1.xpose.msra.mxu0 0.0
    %1755 = vmatprep.subr.mxu0 0.0
    %1756 = vmatpush1.xpose.msra.mxu0 0.0
    %1757 = vmatprep.subr.mxu0 0.0
    %1758 = vmatpush1.xpose.msra.mxu0 0.0
    %1759 = vmatprep.subr.mxu0 0.0
    %1760 = vmatpush1.xpose.msra.mxu0 0.0
    %1761 = vmatprep.subr.mxu0 0.0
    %1762 = vmatpush1.xpose.msra.mxu0 0.0
    %1763 = vmatprep.subr.mxu0 0.0
    %1764 = vmatpush1.xpose.msra.mxu0 0.0
    %1765 = vmatprep.subr.mxu0 0.0
    %1766 = vmatpush1.xpose.msra.mxu0 0.0
    %1767 = vmatprep.subr.mxu0 0.0
    %1768 = vmatpush1.xpose.msra.mxu0 0.0
    %1769 = vmatprep.subr.mxu0 0.0
    %1770 = vmatpush1.xpose.msra.mxu0 0.0
    %1771 = vmatprep.subr.mxu0 0.0
    %1772 = vmatpush1.xpose.msra.mxu0 0.0
    %1773 = vmatprep.subr.mxu0 0.0
    %1774 = vmatpush1.xpose.msra.mxu0 0.0
    %1775 = vmatprep.subr.mxu0 0.0
    %1776 = vmatpush1.xpose.msra.mxu0 0.0
    %1777 = vmatprep.subr.mxu0 0.0
    %1778 = vmatpush1.xpose.msra.mxu0 0.0
    %1779 = vmatprep.subr.mxu0 0.0
    %1780 = vmatpush1.xpose.msra.mxu0 0.0
    %1781 = vmatprep.subr.mxu0 0.0
    %1782 = vmatpush1.xpose.msra.mxu0 0.0
    %1783 = vmatprep.subr.mxu0 0.0
    %1784 = vmatpush1.xpose.msra.mxu0 0.0
    %1785 = vmatprep.subr.mxu0 0.0
    %1786 = vmatpush1.xpose.msra.mxu0 0.0
    %1787 = vmatprep.subr.mxu0 0.0
    %1788 = vmatpush1.xpose.msra.mxu0 0.0
    %1789 = vmatprep.subr.mxu0 0.0
    %1790 = vmatpush1.xpose.msra.mxu0 0.0
    %1791 = vmatprep.subr.mxu0 0.0
    %1792 = vmatpush1.xpose.msra.mxu0 0.0
    %1793 = vmatprep.subr.mxu0 0.0
    %1794 = vmatpush1.xpose.msra.mxu0 0.0
    %1795 = vmatprep.subr.mxu0 0.0
    %1796 = vmatpush1.xpose.msra.mxu0 0.0
    %1797 = vmatprep.subr.mxu0 0.0
    %1798 = vmatpush1.xpose.msra.mxu0 0.0
    %1799 = vmatprep.mubr.f32.mxu0 0.0
    %1800 = vmatmul.mubr.f32.gmra.mrb[0].mxu0 %v1730
    %v1801 = vpop.f32.mrb[0].mxu0
    %v1802 = vadd.f32 0.0, %v1801
    %v1803 = vpop.f32.mrb[0].mxu0
    %1804 = vdwg.mxu0
    %v1806 = vsel %vm1424, %v1317, 0
    %v1809 = vsel %vm1424, %v1421, 0
    %1811 = vmatprep.subr.mxu0 0.0
    %1812 = vmatpush1.xpose.msra.mxu0 %v1809
    %1813 = vmatprep.subr.mxu0 0.0
    %1814 = vmatpush1.xpose.msra.mxu0 0.0
    %1815 = vmatprep.subr.mxu0 0.0
    %1816 = vmatpush1.xpose.msra.mxu0 0.0
    %1817 = vmatprep.subr.mxu0 0.0
    %1818 = vmatpush1.xpose.msra.mxu0 0.0
    %1819 = vmatprep.subr.mxu0 0.0
    %1820 = vmatpush1.xpose.msra.mxu0 0.0
    %1821 = vmatprep.subr.mxu0 0.0
    %1822 = vmatpush1.xpose.msra.mxu0 0.0
    %1823 = vmatprep.subr.mxu0 0.0
    %1824 = vmatpush1.xpose.msra.mxu0 0.0
    %1825 = vmatprep.subr.mxu0 0.0
    %1826 = vmatpush1.xpose.msra.mxu0 0.0
    %1827 = vmatprep.subr.mxu0 0.0
    %1828 = vmatpush1.xpose.msra.mxu0 0.0
    %1829 = vmatprep.subr.mxu0 0.0
    %1830 = vmatpush1.xpose.msra.mxu0 0.0
    %1831 = vmatprep.subr.mxu0 0.0
    %1832 = vmatpush1.xpose.msra.mxu0 0.0
    %1833 = vmatprep.subr.mxu0 0.0
    %1834 = vmatpush1.xpose.msra.mxu0 0.0
    %1835 = vmatprep.subr.mxu0 0.0
    %1836 = vmatpush1.xpose.msra.mxu0 0.0
    %1837 = vmatprep.subr.mxu0 0.0
    %1838 = vmatpush1.xpose.msra.mxu0 0.0
    %1839 = vmatprep.subr.mxu0 0.0
    %1840 = vmatpush1.xpose.msra.mxu0 0.0
    %1841 = vmatprep.subr.mxu0 0.0
    %1842 = vmatpush1.xpose.msra.mxu0 0.0
    %1843 = vmatprep.subr.mxu0 0.0
    %1844 = vmatpush1.xpose.msra.mxu0 0.0
    %1845 = vmatprep.subr.mxu0 0.0
    %1846 = vmatpush1.xpose.msra.mxu0 0.0
    %1847 = vmatprep.subr.mxu0 0.0
    %1848 = vmatpush1.xpose.msra.mxu0 0.0
    %1849 = vmatprep.subr.mxu0 0.0
    %1850 = vmatpush1.xpose.msra.mxu0 0.0
    %1851 = vmatprep.subr.mxu0 0.0
    %1852 = vmatpush1.xpose.msra.mxu0 0.0
    %1853 = vmatprep.subr.mxu0 0.0
    %1854 = vmatpush1.xpose.msra.mxu0 0.0
    %1855 = vmatprep.subr.mxu0 0.0
    %1856 = vmatpush1.xpose.msra.mxu0 0.0
    %1857 = vmatprep.subr.mxu0 0.0
    %1858 = vmatpush1.xpose.msra.mxu0 0.0
    %1859 = vmatprep.subr.mxu0 0.0
    %1860 = vmatpush1.xpose.msra.mxu0 0.0
    %1861 = vmatprep.subr.mxu0 0.0
    %1862 = vmatpush1.xpose.msra.mxu0 0.0
    %1863 = vmatprep.subr.mxu0 0.0
    %1864 = vmatpush1.xpose.msra.mxu0 0.0
    %1865 = vmatprep.subr.mxu0 0.0
    %1866 = vmatpush1.xpose.msra.mxu0 0.0
    %1867 = vmatprep.subr.mxu0 0.0
    %1868 = vmatpush1.xpose.msra.mxu0 0.0
    %1869 = vmatprep.subr.mxu0 0.0
    %1870 = vmatpush1.xpose.msra.mxu0 0.0
    %1871 = vmatprep.subr.mxu0 0.0
    %1872 = vmatpush1.xpose.msra.mxu0 0.0
    %1873 = vmatprep.subr.mxu0 0.0
    %1874 = vmatpush1.xpose.msra.mxu0 0.0
    %1875 = vmatprep.mubr.f32.mxu0 0.0
    %1876 = vmatmul.mubr.f32.gmra.mrb[0].mxu0 %v1806
    %v1877 = vpop.f32.mrb[0].mxu0
    %v1878 = vadd.f32 0.0, %v1877
    %v1879 = vpop.f32.mrb[0].mxu0
    %1880 = vdwg.mxu0
    %v1882 = vsel %vm1424, %v1318, 0
    %v1885 = vsel %vm1424, %v1422, 0
    %1887 = vmatprep.subr.mxu0 0.0
    %1888 = vmatpush1.xpose.msra.mxu0 %v1885
    %1889 = vmatprep.subr.mxu0 0.0
    %1890 = vmatpush1.xpose.msra.mxu0 0.0
    %1891 = vmatprep.subr.mxu0 0.0
    %1892 = vmatpush1.xpose.msra.mxu0 0.0
    %1893 = vmatprep.subr.mxu0 0.0
    %1894 = vmatpush1.xpose.msra.mxu0 0.0
    %1895 = vmatprep.subr.mxu0 0.0
    %1896 = vmatpush1.xpose.msra.mxu0 0.0
    %1897 = vmatprep.subr.mxu0 0.0
    %1898 = vmatpush1.xpose.msra.mxu0 0.0
    %1899 = vmatprep.subr.mxu0 0.0
    %1900 = vmatpush1.xpose.msra.mxu0 0.0
    %1901 = vmatprep.subr.mxu0 0.0
    %1902 = vmatpush1.xpose.msra.mxu0 0.0
    %1903 = vmatprep.subr.mxu0 0.0
    %1904 = vmatpush1.xpose.msra.mxu0 0.0
    %1905 = vmatprep.subr.mxu0 0.0
    %1906 = vmatpush1.xpose.msra.mxu0 0.0
    %1907 = vmatprep.subr.mxu0 0.0
    %1908 = vmatpush1.xpose.msra.mxu0 0.0
    %1909 = vmatprep.subr.mxu0 0.0
    %1910 = vmatpush1.xpose.msra.mxu0 0.0
    %1911 = vmatprep.subr.mxu0 0.0
    %1912 = vmatpush1.xpose.msra.mxu0 0.0
    %1913 = vmatprep.subr.mxu0 0.0
    %1914 = vmatpush1.xpose.msra.mxu0 0.0
    %1915 = vmatprep.subr.mxu0 0.0
    %1916 = vmatpush1.xpose.msra.mxu0 0.0
    %1917 = vmatprep.subr.mxu0 0.0
    %1918 = vmatpush1.xpose.msra.mxu0 0.0
    %1919 = vmatprep.subr.mxu0 0.0
    %1920 = vmatpush1.xpose.msra.mxu0 0.0
    %1921 = vmatprep.subr.mxu0 0.0
    %1922 = vmatpush1.xpose.msra.mxu0 0.0
    %1923 = vmatprep.subr.mxu0 0.0
    %1924 = vmatpush1.xpose.msra.mxu0 0.0
    %1925 = vmatprep.subr.mxu0 0.0
    %1926 = vmatpush1.xpose.msra.mxu0 0.0
    %1927 = vmatprep.subr.mxu0 0.0
    %1928 = vmatpush1.xpose.msra.mxu0 0.0
    %1929 = vmatprep.subr.mxu0 0.0
    %1930 = vmatpush1.xpose.msra.mxu0 0.0
    %1931 = vmatprep.subr.mxu0 0.0
    %1932 = vmatpush1.xpose.msra.mxu0 0.0
    %1933 = vmatprep.subr.mxu0 0.0
    %1934 = vmatpush1.xpose.msra.mxu0 0.0
    %1935 = vmatprep.subr.mxu0 0.0
    %1936 = vmatpush1.xpose.msra.mxu0 0.0
    %1937 = vmatprep.subr.mxu0 0.0
    %1938 = vmatpush1.xpose.msra.mxu0 0.0
    %1939 = vmatprep.subr.mxu0 0.0
    %1940 = vmatpush1.xpose.msra.mxu0 0.0
    %1941 = vmatprep.subr.mxu0 0.0
    %1942 = vmatpush1.xpose.msra.mxu0 0.0
    %1943 = vmatprep.subr.mxu0 0.0
    %1944 = vmatpush1.xpose.msra.mxu0 0.0
    %1945 = vmatprep.subr.mxu0 0.0
    %1946 = vmatpush1.xpose.msra.mxu0 0.0
    %1947 = vmatprep.subr.mxu0 0.0
    %1948 = vmatpush1.xpose.msra.mxu0 0.0
    %1949 = vmatprep.subr.mxu0 0.0
    %1950 = vmatpush1.xpose.msra.mxu0 0.0
    %1951 = vmatprep.mubr.f32.mxu0 0.0
    %1952 = vmatmul.mubr.f32.gmra.mrb[0].mxu0 %v1882
    %v1953 = vpop.f32.mrb[0].mxu0
    %v1954 = vadd.f32 0.0, %v1953
    %v1955 = vpop.f32.mrb[0].mxu0
    %1956 = vdwg.mxu0
    %v1958 = vsel %vm1424, %v1319, 0
    %v1961 = vsel %vm1424, %v1423, 0
    %1963 = vmatprep.subr.mxu0 0.0
    %1964 = vmatpush1.xpose.msra.mxu0 %v1961
    %1965 = vmatprep.subr.mxu0 0.0
    %1966 = vmatpush1.xpose.msra.mxu0 0.0
    %1967 = vmatprep.subr.mxu0 0.0
    %1968 = vmatpush1.xpose.msra.mxu0 0.0
    %1969 = vmatprep.subr.mxu0 0.0
    %1970 = vmatpush1.xpose.msra.mxu0 0.0
    %1971 = vmatprep.subr.mxu0 0.0
    %1972 = vmatpush1.xpose.msra.mxu0 0.0
    %1973 = vmatprep.subr.mxu0 0.0
    %1974 = vmatpush1.xpose.msra.mxu0 0.0
    %1975 = vmatprep.subr.mxu0 0.0
    %1976 = vmatpush1.xpose.msra.mxu0 0.0
    %1977 = vmatprep.subr.mxu0 0.0
    %1978 = vmatpush1.xpose.msra.mxu0 0.0
    %1979 = vmatprep.subr.mxu0 0.0
    %1980 = vmatpush1.xpose.msra.mxu0 0.0
    %1981 = vmatprep.subr.mxu0 0.0
    %1982 = vmatpush1.xpose.msra.mxu0 0.0
    %1983 = vmatprep.subr.mxu0 0.0
    %1984 = vmatpush1.xpose.msra.mxu0 0.0
    %1985 = vmatprep.subr.mxu0 0.0
    %1986 = vmatpush1.xpose.msra.mxu0 0.0
    %1987 = vmatprep.subr.mxu0 0.0
    %1988 = vmatpush1.xpose.msra.mxu0 0.0
    %1989 = vmatprep.subr.mxu0 0.0
    %1990 = vmatpush1.xpose.msra.mxu0 0.0
    %1991 = vmatprep.subr.mxu0 0.0
    %1992 = vmatpush1.xpose.msra.mxu0 0.0
    %1993 = vmatprep.subr.mxu0 0.0
    %1994 = vmatpush1.xpose.msra.mxu0 0.0
    %1995 = vmatprep.subr.mxu0 0.0
    %1996 = vmatpush1.xpose.msra.mxu0 0.0
    %1997 = vmatprep.subr.mxu0 0.0
    %1998 = vmatpush1.xpose.msra.mxu0 0.0
    %1999 = vmatprep.subr.mxu0 0.0
    %2000 = vmatpush1.xpose.msra.mxu0 0.0
    %2001 = vmatprep.subr.mxu0 0.0
    %2002 = vmatpush1.xpose.msra.mxu0 0.0
    %2003 = vmatprep.subr.mxu0 0.0
    %2004 = vmatpush1.xpose.msra.mxu0 0.0
    %2005 = vmatprep.subr.mxu0 0.0
    %2006 = vmatpush1.xpose.msra.mxu0 0.0
    %2007 = vmatprep.subr.mxu0 0.0
    %2008 = vmatpush1.xpose.msra.mxu0 0.0
    %2009 = vmatprep.subr.mxu0 0.0
    %2010 = vmatpush1.xpose.msra.mxu0 0.0
    %2011 = vmatprep.subr.mxu0 0.0
    %2012 = vmatpush1.xpose.msra.mxu0 0.0
    %2013 = vmatprep.subr.mxu0 0.0
    %2014 = vmatpush1.xpose.msra.mxu0 0.0
    %2015 = vmatprep.subr.mxu0 0.0
    %2016 = vmatpush1.xpose.msra.mxu0 0.0
    %2017 = vmatprep.subr.mxu0 0.0
    %2018 = vmatpush1.xpose.msra.mxu0 0.0
    %2019 = vmatprep.subr.mxu0 0.0
    %2020 = vmatpush1.xpose.msra.mxu0 0.0
    %2021 = vmatprep.subr.mxu0 0.0
    %2022 = vmatpush1.xpose.msra.mxu0 0.0
    %2023 = vmatprep.subr.mxu0 0.0
    %2024 = vmatpush1.xpose.msra.mxu0 0.0
    %2025 = vmatprep.subr.mxu0 0.0
    %2026 = vmatpush1.xpose.msra.mxu0 0.0
    %2027 = vmatprep.mubr.f32.mxu0 0.0
    %2028 = vmatmul.mubr.f32.gmra.mrb[0].mxu0 %v1958
    %v2029 = vpop.f32.mrb[0].mxu0
    %v2030 = vadd.f32 0.0, %v2029
    %v2031 = vpop.f32.mrb[0].mxu0
    %2032 = vdwg.mxu0
    %v2033 = vlaneseq
    %v2034 = vshrl.u32 %v2033, 7
    %v2035 = vlaneseq
    %v2036 = vand.u32 %v2035, 127
    %vm2037 = vcmp.le.s32.totalorder %v2036, %v2034
    %v2038 = vsel %vm2037, 1, 0
    %vm2039 = vcmp.eq.s32.totalorder %v2038, 1
    %v2040 = vsel %vm2039, %v1498, -1e+30
    %v2041 = vsel %vm2039, %v1574, -1e+30
    %v2042 = vsel %vm2039, %v1650, -1e+30
    %v2043 = vsel %vm2039, %v1726, -1e+30
    %v2044 = vsel %vm2039, %v1802, -1e+30
    %v2045 = vsel %vm2039, %v1878, -1e+30
    %v2046 = vsel %vm2039, %v1954, -1e+30
    %v2047 = vsel %vm2039, %v2030, -1e+30
    %v2048 = vsel %vm1279, %v2040, -inf
    %2049 = vmax.xlane.f32.xlu0 %v2048
    %v2050 = vpop.xlane.xlu0 %2049
    %v2051 = vsel %vm1279, %v2041, -inf
    %2052 = vmax.xlane.f32.xlu0 %v2051
    %v2053 = vpop.xlane.xlu0 %2052
    %v2054 = vsel %vm1279, %v2042, -inf
    %2055 = vmax.xlane.f32.xlu0 %v2054
    %v2056 = vpop.xlane.xlu0 %2055
    %v2057 = vsel %vm1279, %v2043, -inf
    %2058 = vmax.xlane.f32.xlu0 %v2057
    %v2059 = vpop.xlane.xlu0 %2058
    %v2060 = vsel %vm1279, %v2044, -inf
    %2061 = vmax.xlane.f32.xlu0 %v2060
    %v2062 = vpop.xlane.xlu0 %2061
    %v2063 = vsel %vm1279, %v2045, -inf
    %2064 = vmax.xlane.f32.xlu0 %v2063
    %v2065 = vpop.xlane.xlu0 %2064
    %v2066 = vsel %vm1279, %v2046, -inf
    %2067 = vmax.xlane.f32.xlu0 %v2066
    %v2068 = vpop.xlane.xlu0 %2067
    %v2069 = vsel %vm1279, %v2047, -inf
    %2070 = vmax.xlane.f32.xlu0 %v2069
    %v2071 = vpop.xlane.xlu0 %2070
    %v2072 = vsub.f32 -inf, %v2050
    %v2073 = vsub.f32 -inf, %v2053
    %v2074 = vsub.f32 -inf, %v2056
    %v2075 = vsub.f32 -inf, %v2059
    %v2076 = vsub.f32 -inf, %v2062
    %v2077 = vsub.f32 -inf, %v2065
    %v2078 = vsub.f32 -inf, %v2068
    %v2079 = vsub.f32 -inf, %v2071
    %v2080 = vmul.f32 %v2072, 1.442695
    %v2081 = vpow.pop %v2080
    %v2082 = vmul.f32 %v2073, 1.442695
    %v2083 = vpow.pop %v2082
    %v2084 = vmul.f32 %v2074, 1.442695
    %v2085 = vpow.pop %v2084
    %v2086 = vmul.f32 %v2075, 1.442695
    %v2087 = vpow.pop %v2086
    %v2088 = vmul.f32 %v2076, 1.442695
    %v2089 = vpow.pop %v2088
    %v2090 = vmul.f32 %v2077, 1.442695
    %v2091 = vpow.pop %v2090
    %v2092 = vmul.f32 %v2078, 1.442695
    %v2093 = vpow.pop %v2092
    %v2094 = vmul.f32 %v2079, 1.442695
    %v2095 = vpow.pop %v2094
    %v2096 = vsub.f32 %v2040, %v2050
    %v2097 = vsub.f32 %v2041, %v2053
    %v2098 = vsub.f32 %v2042, %v2056
    %v2099 = vsub.f32 %v2043, %v2059
    %v2100 = vsub.f32 %v2044, %v2062
    %v2101 = vsub.f32 %v2045, %v2065
    %v2102 = vsub.f32 %v2046, %v2068
    %v2103 = vsub.f32 %v2047, %v2071
    %v2104 = vmul.f32 %v2096, 1.442695
    %v2105 = vpow.pop %v2104
    %v2106 = vmul.f32 %v2097, 1.442695
    %v2107 = vpow.pop %v2106
    %v2108 = vmul.f32 %v2098, 1.442695
    %v2109 = vpow.pop %v2108
    %v2110 = vmul.f32 %v2099, 1.442695
    %v2111 = vpow.pop %v2110
    %v2112 = vmul.f32 %v2100, 1.442695
    %v2113 = vpow.pop %v2112
    %v2114 = vmul.f32 %v2101, 1.442695
    %v2115 = vpow.pop %v2114
    %v2116 = vmul.f32 %v2102, 1.442695
    %v2117 = vpow.pop %v2116
    %v2118 = vmul.f32 %v2103, 1.442695
    %v2119 = vpow.pop %v2118
    %v2120 = vmul.f32 %v2081, 0.0
    %v2121 = vmul.f32 %v2083, 0.0
    %v2122 = vmul.f32 %v2085, 0.0
    %v2123 = vmul.f32 %v2087, 0.0
    %v2124 = vmul.f32 %v2089, 0.0
    %v2125 = vmul.f32 %v2091, 0.0
    %v2126 = vmul.f32 %v2093, 0.0
    %v2127 = vmul.f32 %v2095, 0.0
    %v2128 = vsel %vm1279, %v2105, 0.0
    %2129 = vadd.xlane.f32.xlu0 %v2128
    %v2130 = vpop.xlane.xlu0 %2129
    %v2131 = vsel %vm1279, %v2107, 0.0
    %2132 = vadd.xlane.f32.xlu0 %v2131
    %v2133 = vpop.xlane.xlu0 %2132
    %v2134 = vsel %vm1279, %v2109, 0.0
    %2135 = vadd.xlane.f32.xlu0 %v2134
    %v2136 = vpop.xlane.xlu0 %2135
    %v2137 = vsel %vm1279, %v2111, 0.0
    %2138 = vadd.xlane.f32.xlu0 %v2137
    %v2139 = vpop.xlane.xlu0 %2138
    %v2140 = vsel %vm1279, %v2113, 0.0
    %2141 = vadd.xlane.f32.xlu0 %v2140
    %v2142 = vpop.xlane.xlu0 %2141
    %v2143 = vsel %vm1279, %v2115, 0.0
    %2144 = vadd.xlane.f32.xlu0 %v2143
    %v2145 = vpop.xlane.xlu0 %2144
    %v2146 = vsel %vm1279, %v2117, 0.0
    %2147 = vadd.xlane.f32.xlu0 %v2146
    %v2148 = vpop.xlane.xlu0 %2147
    %v2149 = vsel %vm1279, %v2119, 0.0
    %2150 = vadd.xlane.f32.xlu0 %v2149
    %v2151 = vpop.xlane.xlu0 %2150
    %v2152 = vadd.f32 %v2120, %v2130
    %v2153 = vadd.f32 %v2121, %v2133
    %v2154 = vadd.f32 %v2122, %v2136
    %v2155 = vadd.f32 %v2123, %v2139
    %v2156 = vadd.f32 %v2124, %v2142
    %v2157 = vadd.f32 %v2125, %v2145
    %v2158 = vadd.f32 %v2126, %v2148
    %v2159 = vadd.f32 %v2127, %v2151
    %v2161 = vsel %vm1279, %v2105, 0
    %2163 = vmatprep.subr.mxu0 0.0
    %2164 = vmatpush1.msra.mxu0 %v1133
    %2165 = vmatprep.subr.mxu0 0.0
    %2166 = vmatpush1.msra.mxu0 0.0
    %2167 = vmatprep.subr.mxu0 0.0
    %2168 = vmatpush1.msra.mxu0 0.0
    %2169 = vmatprep.subr.mxu0 0.0
    %2170 = vmatpush1.msra.mxu0 0.0
    %2171 = vmatprep.subr.mxu0 0.0
    %2172 = vmatpush1.msra.mxu0 0.0
    %2173 = vmatprep.subr.mxu0 0.0
    %2174 = vmatpush1.msra.mxu0 0.0
    %2175 = vmatprep.subr.mxu0 0.0
    %2176 = vmatpush1.msra.mxu0 0.0
    %2177 = vmatprep.subr.mxu0 0.0
    %2178 = vmatpush1.msra.mxu0 0.0
    %2179 = vmatprep.subr.mxu0 0.0
    %2180 = vmatpush1.msra.mxu0 0.0
    %2181 = vmatprep.subr.mxu0 0.0
    %2182 = vmatpush1.msra.mxu0 0.0
    %2183 = vmatprep.subr.mxu0 0.0
    %2184 = vmatpush1.msra.mxu0 0.0
    %2185 = vmatprep.subr.mxu0 0.0
    %2186 = vmatpush1.msra.mxu0 0.0
    %2187 = vmatprep.subr.mxu0 0.0
    %2188 = vmatpush1.msra.mxu0 0.0
    %2189 = vmatprep.subr.mxu0 0.0
    %2190 = vmatpush1.msra.mxu0 0.0
    %2191 = vmatprep.subr.mxu0 0.0
    %2192 = vmatpush1.msra.mxu0 0.0
    %2193 = vmatprep.subr.mxu0 0.0
    %2194 = vmatpush1.msra.mxu0 0.0
    %2195 = vmatprep.subr.mxu0 0.0
    %2196 = vmatpush1.msra.mxu0 0.0
    %2197 = vmatprep.subr.mxu0 0.0
    %2198 = vmatpush1.msra.mxu0 0.0
    %2199 = vmatprep.subr.mxu0 0.0
    %2200 = vmatpush1.msra.mxu0 0.0
    %2201 = vmatprep.subr.mxu0 0.0
    %2202 = vmatpush1.msra.mxu0 0.0
    %2203 = vmatprep.subr.mxu0 0.0
    %2204 = vmatpush1.msra.mxu0 0.0
    %2205 = vmatprep.subr.mxu0 0.0
    %2206 = vmatpush1.msra.mxu0 0.0
    %2207 = vmatprep.subr.mxu0 0.0
    %2208 = vmatpush1.msra.mxu0 0.0
    %2209 = vmatprep.subr.mxu0 0.0
    %2210 = vmatpush1.msra.mxu0 0.0
    %2211 = vmatprep.subr.mxu0 0.0
    %2212 = vmatpush1.msra.mxu0 0.0
    %2213 = vmatprep.subr.mxu0 0.0
    %2214 = vmatpush1.msra.mxu0 0.0
    %2215 = vmatprep.subr.mxu0 0.0
    %2216 = vmatpush1.msra.mxu0 0.0
    %2217 = vmatprep.subr.mxu0 0.0
    %2218 = vmatpush1.msra.mxu0 0.0
    %2219 = vmatprep.subr.mxu0 0.0
    %2220 = vmatpush1.msra.mxu0 0.0
    %2221 = vmatprep.subr.mxu0 0.0
    %2222 = vmatpush1.msra.mxu0 0.0
    %2223 = vmatprep.subr.mxu0 0.0
    %2224 = vmatpush1.msra.mxu0 0.0
    %2225 = vmatprep.subr.mxu0 0.0
    %2226 = vmatpush1.msra.mxu0 0.0
    %2227 = vmatprep.mubr.f32.mxu0 0.0
    %2228 = vmatmul.mubr.f32.gmra.mrb[0].mxu0 %v2161
    %v2229 = vpop.f32.mrb[0].mxu0
    %v2230 = vadd.f32 0.0, %v2229
    %v2231 = vpop.f32.mrb[0].mxu0
    %2232 = vdwg.mxu0
    %v2234 = vsel %vm1279, %v2107, 0
    %2236 = vmatprep.subr.mxu0 0.0
    %2237 = vmatpush1.msra.mxu0 %v1134
    %2238 = vmatprep.subr.mxu0 0.0
    %2239 = vmatpush1.msra.mxu0 0.0
    %2240 = vmatprep.subr.mxu0 0.0
    %2241 = vmatpush1.msra.mxu0 0.0
    %2242 = vmatprep.subr.mxu0 0.0
    %2243 = vmatpush1.msra.mxu0 0.0
    %2244 = vmatprep.subr.mxu0 0.0
    %2245 = vmatpush1.msra.mxu0 0.0
    %2246 = vmatprep.subr.mxu0 0.0
    %2247 = vmatpush1.msra.mxu0 0.0
    %2248 = vmatprep.subr.mxu0 0.0
    %2249 = vmatpush1.msra.mxu0 0.0
    %2250 = vmatprep.subr.mxu0 0.0
    %2251 = vmatpush1.msra.mxu0 0.0
    %2252 = vmatprep.subr.mxu0 0.0
    %2253 = vmatpush1.msra.mxu0 0.0
    %2254 = vmatprep.subr.mxu0 0.0
    %2255 = vmatpush1.msra.mxu0 0.0
    %2256 = vmatprep.subr.mxu0 0.0
    %2257 = vmatpush1.msra.mxu0 0.0
    %2258 = vmatprep.subr.mxu0 0.0
    %2259 = vmatpush1.msra.mxu0 0.0
    %2260 = vmatprep.subr.mxu0 0.0
    %2261 = vmatpush1.msra.mxu0 0.0
    %2262 = vmatprep.subr.mxu0 0.0
    %2263 = vmatpush1.msra.mxu0 0.0
    %2264 = vmatprep.subr.mxu0 0.0
    %2265 = vmatpush1.msra.mxu0 0.0
    %2266 = vmatprep.subr.mxu0 0.0
    %2267 = vmatpush1.msra.mxu0 0.0
    %2268 = vmatprep.subr.mxu0 0.0
    %2269 = vmatpush1.msra.mxu0 0.0
    %2270 = vmatprep.subr.mxu0 0.0
    %2271 = vmatpush1.msra.mxu0 0.0
    %2272 = vmatprep.subr.mxu0 0.0
    %2273 = vmatpush1.msra.mxu0 0.0
    %2274 = vmatprep.subr.mxu0 0.0
    %2275 = vmatpush1.msra.mxu0 0.0
    %2276 = vmatprep.subr.mxu0 0.0
    %2277 = vmatpush1.msra.mxu0 0.0
    %2278 = vmatprep.subr.mxu0 0.0
    %2279 = vmatpush1.msra.mxu0 0.0
    %2280 = vmatprep.subr.mxu0 0.0
    %2281 = vmatpush1.msra.mxu0 0.0
    %2282 = vmatprep.subr.mxu0 0.0
    %2283 = vmatpush1.msra.mxu0 0.0
    %2284 = vmatprep.subr.mxu0 0.0
    %2285 = vmatpush1.msra.mxu0 0.0
    %2286 = vmatprep.subr.mxu0 0.0
    %2287 = vmatpush1.msra.mxu0 0.0
    %2288 = vmatprep.subr.mxu0 0.0
    %2289 = vmatpush1.msra.mxu0 0.0
    %2290 = vmatprep.subr.mxu0 0.0
    %2291 = vmatpush1.msra.mxu0 0.0
    %2292 = vmatprep.subr.mxu0 0.0
    %2293 = vmatpush1.msra.mxu0 0.0
    %2294 = vmatprep.subr.mxu0 0.0
    %2295 = vmatpush1.msra.mxu0 0.0
    %2296 = vmatprep.subr.mxu0 0.0
    %2297 = vmatpush1.msra.mxu0 0.0
    %2298 = vmatprep.subr.mxu0 0.0
    %2299 = vmatpush1.msra.mxu0 0.0
    %2300 = vmatprep.mubr.f32.mxu0 0.0
    %2301 = vmatmul.mubr.f32.gmra.mrb[0].mxu0 %v2234
    %v2302 = vpop.f32.mrb[0].mxu0
    %v2303 = vadd.f32 0.0, %v2302
    %v2304 = vpop.f32.mrb[0].mxu0
    %2305 = vdwg.mxu0
    %v2307 = vsel %vm1279, %v2109, 0
    %2309 = vmatprep.subr.mxu0 0.0
    %2310 = vmatpush1.msra.mxu0 %v1135
    %2311 = vmatprep.subr.mxu0 0.0
    %2312 = vmatpush1.msra.mxu0 0.0
    %2313 = vmatprep.subr.mxu0 0.0
    %2314 = vmatpush1.msra.mxu0 0.0
    %2315 = vmatprep.subr.mxu0 0.0
    %2316 = vmatpush1.msra.mxu0 0.0
    %2317 = vmatprep.subr.mxu0 0.0
    %2318 = vmatpush1.msra.mxu0 0.0
    %2319 = vmatprep.subr.mxu0 0.0
    %2320 = vmatpush1.msra.mxu0 0.0
    %2321 = vmatprep.subr.mxu0 0.0
    %2322 = vmatpush1.msra.mxu0 0.0
    %2323 = vmatprep.subr.mxu0 0.0
    %2324 = vmatpush1.msra.mxu0 0.0
    %2325 = vmatprep.subr.mxu0 0.0
    %2326 = vmatpush1.msra.mxu0 0.0
    %2327 = vmatprep.subr.mxu0 0.0
    %2328 = vmatpush1.msra.mxu0 0.0
    %2329 = vmatprep.subr.mxu0 0.0
    %2330 = vmatpush1.msra.mxu0 0.0
    %2331 = vmatprep.subr.mxu0 0.0
    %2332 = vmatpush1.msra.mxu0 0.0
    %2333 = vmatprep.subr.mxu0 0.0
    %2334 = vmatpush1.msra.mxu0 0.0
    %2335 = vmatprep.subr.mxu0 0.0
    %2336 = vmatpush1.msra.mxu0 0.0
    %2337 = vmatprep.subr.mxu0 0.0
    %2338 = vmatpush1.msra.mxu0 0.0
    %2339 = vmatprep.subr.mxu0 0.0
    %2340 = vmatpush1.msra.mxu0 0.0
    %2341 = vmatprep.subr.mxu0 0.0
    %2342 = vmatpush1.msra.mxu0 0.0
    %2343 = vmatprep.subr.mxu0 0.0
    %2344 = vmatpush1.msra.mxu0 0.0
    %2345 = vmatprep.subr.mxu0 0.0
    %2346 = vmatpush1.msra.mxu0 0.0
    %2347 = vmatprep.subr.mxu0 0.0
    %2348 = vmatpush1.msra.mxu0 0.0
    %2349 = vmatprep.subr.mxu0 0.0
    %2350 = vmatpush1.msra.mxu0 0.0
    %2351 = vmatprep.subr.mxu0 0.0
    %2352 = vmatpush1.msra.mxu0 0.0
    %2353 = vmatprep.subr.mxu0 0.0
    %2354 = vmatpush1.msra.mxu0 0.0
    %2355 = vmatprep.subr.mxu0 0.0
    %2356 = vmatpush1.msra.mxu0 0.0
    %2357 = vmatprep.subr.mxu0 0.0
    %2358 = vmatpush1.msra.mxu0 0.0
    %2359 = vmatprep.subr.mxu0 0.0
    %2360 = vmatpush1.msra.mxu0 0.0
    %2361 = vmatprep.subr.mxu0 0.0
    %2362 = vmatpush1.msra.mxu0 0.0
    %2363 = vmatprep.subr.mxu0 0.0
    %2364 = vmatpush1.msra.mxu0 0.0
    %2365 = vmatprep.subr.mxu0 0.0
    %2366 = vmatpush1.msra.mxu0 0.0
    %2367 = vmatprep.subr.mxu0 0.0
    %2368 = vmatpush1.msra.mxu0 0.0
    %2369 = vmatprep.subr.mxu0 0.0
    %2370 = vmatpush1.msra.mxu0 0.0
    %2371 = vmatprep.subr.mxu0 0.0
    %2372 = vmatpush1.msra.mxu0 0.0
    %2373 = vmatprep.mubr.f32.mxu0 0.0
    %2374 = vmatmul.mubr.f32.gmra.mrb[0].mxu0 %v2307
    %v2375 = vpop.f32.mrb[0].mxu0
    %v2376 = vadd.f32 0.0, %v2375
    %v2377 = vpop.f32.mrb[0].mxu0
    %2378 = vdwg.mxu0
    %v2380 = vsel %vm1279, %v2111, 0
    %2382 = vmatprep.subr.mxu0 0.0
    %2383 = vmatpush1.msra.mxu0 %v1136
    %2384 = vmatprep.subr.mxu0 0.0
    %2385 = vmatpush1.msra.mxu0 0.0
    %2386 = vmatprep.subr.mxu0 0.0
    %2387 = vmatpush1.msra.mxu0 0.0
    %2388 = vmatprep.subr.mxu0 0.0
    %2389 = vmatpush1.msra.mxu0 0.0
    %2390 = vmatprep.subr.mxu0 0.0
    %2391 = vmatpush1.msra.mxu0 0.0
    %2392 = vmatprep.subr.mxu0 0.0
    %2393 = vmatpush1.msra.mxu0 0.0
    %2394 = vmatprep.subr.mxu0 0.0
    %2395 = vmatpush1.msra.mxu0 0.0
    %2396 = vmatprep.subr.mxu0 0.0
    %2397 = vmatpush1.msra.mxu0 0.0
    %2398 = vmatprep.subr.mxu0 0.0
    %2399 = vmatpush1.msra.mxu0 0.0
    %2400 = vmatprep.subr.mxu0 0.0
    %2401 = vmatpush1.msra.mxu0 0.0
    %2402 = vmatprep.subr.mxu0 0.0
    %2403 = vmatpush1.msra.mxu0 0.0
    %2404 = vmatprep.subr.mxu0 0.0
    %2405 = vmatpush1.msra.mxu0 0.0
    %2406 = vmatprep.subr.mxu0 0.0
    %2407 = vmatpush1.msra.mxu0 0.0
    %2408 = vmatprep.subr.mxu0 0.0
    %2409 = vmatpush1.msra.mxu0 0.0
    %2410 = vmatprep.subr.mxu0 0.0
    %2411 = vmatpush1.msra.mxu0 0.0
    %2412 = vmatprep.subr.mxu0 0.0
    %2413 = vmatpush1.msra.mxu0 0.0
    %2414 = vmatprep.subr.mxu0 0.0
    %2415 = vmatpush1.msra.mxu0 0.0
    %2416 = vmatprep.subr.mxu0 0.0
    %2417 = vmatpush1.msra.mxu0 0.0
    %2418 = vmatprep.subr.mxu0 0.0
    %2419 = vmatpush1.msra.mxu0 0.0
    %2420 = vmatprep.subr.mxu0 0.0
    %2421 = vmatpush1.msra.mxu0 0.0
    %2422 = vmatprep.subr.mxu0 0.0
    %2423 = vmatpush1.msra.mxu0 0.0
    %2424 = vmatprep.subr.mxu0 0.0
    %2425 = vmatpush1.msra.mxu0 0.0
    %2426 = vmatprep.subr.mxu0 0.0
    %2427 = vmatpush1.msra.mxu0 0.0
    %2428 = vmatprep.subr.mxu0 0.0
    %2429 = vmatpush1.msra.mxu0 0.0
    %2430 = vmatprep.subr.mxu0 0.0
    %2431 = vmatpush1.msra.mxu0 0.0
    %2432 = vmatprep.subr.mxu0 0.0
    %2433 = vmatpush1.msra.mxu0 0.0
    %2434 = vmatprep.subr.mxu0 0.0
    %2435 = vmatpush1.msra.mxu0 0.0
    %2436 = vmatprep.subr.mxu0 0.0
    %2437 = vmatpush1.msra.mxu0 0.0
    %2438 = vmatprep.subr.mxu0 0.0
    %2439 = vmatpush1.msra.mxu0 0.0
    %2440 = vmatprep.subr.mxu0 0.0
    %2441 = vmatpush1.msra.mxu0 0.0
    %2442 = vmatprep.subr.mxu0 0.0
    %2443 = vmatpush1.msra.mxu0 0.0
    %2444 = vmatprep.subr.mxu0 0.0
    %2445 = vmatpush1.msra.mxu0 0.0
    %2446 = vmatprep.mubr.f32.mxu0 0.0
    %2447 = vmatmul.mubr.f32.gmra.mrb[0].mxu0 %v2380
    %v2448 = vpop.f32.mrb[0].mxu0
    %v2449 = vadd.f32 0.0, %v2448
    %v2450 = vpop.f32.mrb[0].mxu0
    %2451 = vdwg.mxu0
    %v2453 = vsel %vm1279, %v2113, 0
    %2455 = vmatprep.subr.mxu0 0.0
    %2456 = vmatpush1.msra.mxu0 %v1201
    %2457 = vmatprep.subr.mxu0 0.0
    %2458 = vmatpush1.msra.mxu0 0.0
    %2459 = vmatprep.subr.mxu0 0.0
    %2460 = vmatpush1.msra.mxu0 0.0
    %2461 = vmatprep.subr.mxu0 0.0
    %2462 = vmatpush1.msra.mxu0 0.0
    %2463 = vmatprep.subr.mxu0 0.0
    %2464 = vmatpush1.msra.mxu0 0.0
    %2465 = vmatprep.subr.mxu0 0.0
    %2466 = vmatpush1.msra.mxu0 0.0
    %2467 = vmatprep.subr.mxu0 0.0
    %2468 = vmatpush1.msra.mxu0 0.0
    %2469 = vmatprep.subr.mxu0 0.0
    %2470 = vmatpush1.msra.mxu0 0.0
    %2471 = vmatprep.subr.mxu0 0.0
    %2472 = vmatpush1.msra.mxu0 0.0
    %2473 = vmatprep.subr.mxu0 0.0
    %2474 = vmatpush1.msra.mxu0 0.0
    %2475 = vmatprep.subr.mxu0 0.0
    %2476 = vmatpush1.msra.mxu0 0.0
    %2477 = vmatprep.subr.mxu0 0.0
    %2478 = vmatpush1.msra.mxu0 0.0
    %2479 = vmatprep.subr.mxu0 0.0
    %2480 = vmatpush1.msra.mxu0 0.0
    %2481 = vmatprep.subr.mxu0 0.0
    %2482 = vmatpush1.msra.mxu0 0.0
    %2483 = vmatprep.subr.mxu0 0.0
    %2484 = vmatpush1.msra.mxu0 0.0
    %2485 = vmatprep.subr.mxu0 0.0
    %2486 = vmatpush1.msra.mxu0 0.0
    %2487 = vmatprep.subr.mxu0 0.0
    %2488 = vmatpush1.msra.mxu0 0.0
    %2489 = vmatprep.subr.mxu0 0.0
    %2490 = vmatpush1.msra.mxu0 0.0
    %2491 = vmatprep.subr.mxu0 0.0
    %2492 = vmatpush1.msra.mxu0 0.0
    %2493 = vmatprep.subr.mxu0 0.0
    %2494 = vmatpush1.msra.mxu0 0.0
    %2495 = vmatprep.subr.mxu0 0.0
    %2496 = vmatpush1.msra.mxu0 0.0
    %2497 = vmatprep.subr.mxu0 0.0
    %2498 = vmatpush1.msra.mxu0 0.0
    %2499 = vmatprep.subr.mxu0 0.0
    %2500 = vmatpush1.msra.mxu0 0.0
    %2501 = vmatprep.subr.mxu0 0.0
    %2502 = vmatpush1.msra.mxu0 0.0
    %2503 = vmatprep.subr.mxu0 0.0
    %2504 = vmatpush1.msra.mxu0 0.0
    %2505 = vmatprep.subr.mxu0 0.0
    %2506 = vmatpush1.msra.mxu0 0.0
    %2507 = vmatprep.subr.mxu0 0.0
    %2508 = vmatpush1.msra.mxu0 0.0
    %2509 = vmatprep.subr.mxu0 0.0
    %2510 = vmatpush1.msra.mxu0 0.0
    %2511 = vmatprep.subr.mxu0 0.0
    %2512 = vmatpush1.msra.mxu0 0.0
    %2513 = vmatprep.subr.mxu0 0.0
    %2514 = vmatpush1.msra.mxu0 0.0
    %2515 = vmatprep.subr.mxu0 0.0
    %2516 = vmatpush1.msra.mxu0 0.0
    %2517 = vmatprep.subr.mxu0 0.0
    %2518 = vmatpush1.msra.mxu0 0.0
    %2519 = vmatprep.mubr.f32.mxu0 0.0
    %2520 = vmatmul.mubr.f32.gmra.mrb[0].mxu0 %v2453
    %v2521 = vpop.f32.mrb[0].mxu0
    %v2522 = vadd.f32 0.0, %v2521
    %v2523 = vpop.f32.mrb[0].mxu0
    %2524 = vdwg.mxu0
    %v2526 = vsel %vm1279, %v2115, 0
    %2528 = vmatprep.subr.mxu0 0.0
    %2529 = vmatpush1.msra.mxu0 %v1202
    %2530 = vmatprep.subr.mxu0 0.0
    %2531 = vmatpush1.msra.mxu0 0.0
    %2532 = vmatprep.subr.mxu0 0.0
    %2533 = vmatpush1.msra.mxu0 0.0
    %2534 = vmatprep.subr.mxu0 0.0
    %2535 = vmatpush1.msra.mxu0 0.0
    %2536 = vmatprep.subr.mxu0 0.0
    %2537 = vmatpush1.msra.mxu0 0.0
    %2538 = vmatprep.subr.mxu0 0.0
    %2539 = vmatpush1.msra.mxu0 0.0
    %2540 = vmatprep.subr.mxu0 0.0
    %2541 = vmatpush1.msra.mxu0 0.0
    %2542 = vmatprep.subr.mxu0 0.0
    %2543 = vmatpush1.msra.mxu0 0.0
    %2544 = vmatprep.subr.mxu0 0.0
    %2545 = vmatpush1.msra.mxu0 0.0
    %2546 = vmatprep.subr.mxu0 0.0
    %2547 = vmatpush1.msra.mxu0 0.0
    %2548 = vmatprep.subr.mxu0 0.0
    %2549 = vmatpush1.msra.mxu0 0.0
    %2550 = vmatprep.subr.mxu0 0.0
    %2551 = vmatpush1.msra.mxu0 0.0
    %2552 = vmatprep.subr.mxu0 0.0
    %2553 = vmatpush1.msra.mxu0 0.0
    %2554 = vmatprep.subr.mxu0 0.0
    %2555 = vmatpush1.msra.mxu0 0.0
    %2556 = vmatprep.subr.mxu0 0.0
    %2557 = vmatpush1.msra.mxu0 0.0
    %2558 = vmatprep.subr.mxu0 0.0
    %2559 = vmatpush1.msra.mxu0 0.0
    %2560 = vmatprep.subr.mxu0 0.0
    %2561 = vmatpush1.msra.mxu0 0.0
    %2562 = vmatprep.subr.mxu0 0.0
    %2563 = vmatpush1.msra.mxu0 0.0
    %2564 = vmatprep.subr.mxu0 0.0
    %2565 = vmatpush1.msra.mxu0 0.0
    %2566 = vmatprep.subr.mxu0 0.0
    %2567 = vmatpush1.msra.mxu0 0.0
    %2568 = vmatprep.subr.mxu0 0.0
    %2569 = vmatpush1.msra.mxu0 0.0
    %2570 = vmatprep.subr.mxu0 0.0
    %2571 = vmatpush1.msra.mxu0 0.0
    %2572 = vmatprep.subr.mxu0 0.0
    %2573 = vmatpush1.msra.mxu0 0.0
    %2574 = vmatprep.subr.mxu0 0.0
    %2575 = vmatpush1.msra.mxu0 0.0
    %2576 = vmatprep.subr.mxu0 0.0
    %2577 = vmatpush1.msra.mxu0 0.0
    %2578 = vmatprep.subr.mxu0 0.0
    %2579 = vmatpush1.msra.mxu0 0.0
    %2580 = vmatprep.subr.mxu0 0.0
    %2581 = vmatpush1.msra.mxu0 0.0
    %2582 = vmatprep.subr.mxu0 0.0
    %2583 = vmatpush1.msra.mxu0 0.0
    %2584 = vmatprep.subr.mxu0 0.0
    %2585 = vmatpush1.msra.mxu0 0.0
    %2586 = vmatprep.subr.mxu0 0.0
    %2587 = vmatpush1.msra.mxu0 0.0
    %2588 = vmatprep.subr.mxu0 0.0
    %2589 = vmatpush1.msra.mxu0 0.0
    %2590 = vmatprep.subr.mxu0 0.0
    %2591 = vmatpush1.msra.mxu0 0.0
    %2592 = vmatprep.mubr.f32.mxu0 0.0
    %2593 = vmatmul.mubr.f32.gmra.mrb[0].mxu0 %v2526
    %v2594 = vpop.f32.mrb[0].mxu0
    %v2595 = vadd.f32 0.0, %v2594
    %v2596 = vpop.f32.mrb[0].mxu0
    %2597 = vdwg.mxu0
    %v2599 = vsel %vm1279, %v2117, 0
    %2601 = vmatprep.subr.mxu0 0.0
    %2602 = vmatpush1.msra.mxu0 %v1203
    %2603 = vmatprep.subr.mxu0 0.0
    %2604 = vmatpush1.msra.mxu0 0.0
    %2605 = vmatprep.subr.mxu0 0.0
    %2606 = vmatpush1.msra.mxu0 0.0
    %2607 = vmatprep.subr.mxu0 0.0
    %2608 = vmatpush1.msra.mxu0 0.0
    %2609 = vmatprep.subr.mxu0 0.0
    %2610 = vmatpush1.msra.mxu0 0.0
    %2611 = vmatprep.subr.mxu0 0.0
    %2612 = vmatpush1.msra.mxu0 0.0
    %2613 = vmatprep.subr.mxu0 0.0
    %2614 = vmatpush1.msra.mxu0 0.0
    %2615 = vmatprep.subr.mxu0 0.0
    %2616 = vmatpush1.msra.mxu0 0.0
    %2617 = vmatprep.subr.mxu0 0.0
    %2618 = vmatpush1.msra.mxu0 0.0
    %2619 = vmatprep.subr.mxu0 0.0
    %2620 = vmatpush1.msra.mxu0 0.0
    %2621 = vmatprep.subr.mxu0 0.0
    %2622 = vmatpush1.msra.mxu0 0.0
    %2623 = vmatprep.subr.mxu0 0.0
    %2624 = vmatpush1.msra.mxu0 0.0
    %2625 = vmatprep.subr.mxu0 0.0
    %2626 = vmatpush1.msra.mxu0 0.0
    %2627 = vmatprep.subr.mxu0 0.0
    %2628 = vmatpush1.msra.mxu0 0.0
    %2629 = vmatprep.subr.mxu0 0.0
    %2630 = vmatpush1.msra.mxu0 0.0
    %2631 = vmatprep.subr.mxu0 0.0
    %2632 = vmatpush1.msra.mxu0 0.0
    %2633 = vmatprep.subr.mxu0 0.0
    %2634 = vmatpush1.msra.mxu0 0.0
    %2635 = vmatprep.subr.mxu0 0.0
    %2636 = vmatpush1.msra.mxu0 0.0
    %2637 = vmatprep.subr.mxu0 0.0
    %2638 = vmatpush1.msra.mxu0 0.0
    %2639 = vmatprep.subr.mxu0 0.0
    %2640 = vmatpush1.msra.mxu0 0.0
    %2641 = vmatprep.subr.mxu0 0.0
    %2642 = vmatpush1.msra.mxu0 0.0
    %2643 = vmatprep.subr.mxu0 0.0
    %2644 = vmatpush1.msra.mxu0 0.0
    %2645 = vmatprep.subr.mxu0 0.0
    %2646 = vmatpush1.msra.mxu0 0.0
    %2647 = vmatprep.subr.mxu0 0.0
    %2648 = vmatpush1.msra.mxu0 0.0
    %2649 = vmatprep.subr.mxu0 0.0
    %2650 = vmatpush1.msra.mxu0 0.0
    %2651 = vmatprep.subr.mxu0 0.0
    %2652 = vmatpush1.msra.mxu0 0.0
    %2653 = vmatprep.subr.mxu0 0.0
    %2654 = vmatpush1.msra.mxu0 0.0
    %2655 = vmatprep.subr.mxu0 0.0
    %2656 = vmatpush1.msra.mxu0 0.0
    %2657 = vmatprep.subr.mxu0 0.0
    %2658 = vmatpush1.msra.mxu0 0.0
    %2659 = vmatprep.subr.mxu0 0.0
    %2660 = vmatpush1.msra.mxu0 0.0
    %2661 = vmatprep.subr.mxu0 0.0
    %2662 = vmatpush1.msra.mxu0 0.0
    %2663 = vmatprep.subr.mxu0 0.0
    %2664 = vmatpush1.msra.mxu0 0.0
    %2665 = vmatprep.mubr.f32.mxu0 0.0
    %2666 = vmatmul.mubr.f32.gmra.mrb[0].mxu0 %v2599
    %v2667 = vpop.f32.mrb[0].mxu0
    %v2668 = vadd.f32 0.0, %v2667
    %v2669 = vpop.f32.mrb[0].mxu0
    %2670 = vdwg.mxu0
    %v2672 = vsel %vm1279, %v2119, 0
    %2674 = vmatprep.subr.mxu0 0.0
    %2675 = vmatpush1.msra.mxu0 %v1204
    %2676 = vmatprep.subr.mxu0 0.0
    %2677 = vmatpush1.msra.mxu0 0.0
    %2678 = vmatprep.subr.mxu0 0.0
    %2679 = vmatpush1.msra.mxu0 0.0
    %2680 = vmatprep.subr.mxu0 0.0
    %2681 = vmatpush1.msra.mxu0 0.0
    %2682 = vmatprep.subr.mxu0 0.0
    %2683 = vmatpush1.msra.mxu0 0.0
    %2684 = vmatprep.subr.mxu0 0.0
    %2685 = vmatpush1.msra.mxu0 0.0
    %2686 = vmatprep.subr.mxu0 0.0
    %2687 = vmatpush1.msra.mxu0 0.0
    %2688 = vmatprep.subr.mxu0 0.0
    %2689 = vmatpush1.msra.mxu0 0.0
    %2690 = vmatprep.subr.mxu0 0.0
    %2691 = vmatpush1.msra.mxu0 0.0
    %2692 = vmatprep.subr.mxu0 0.0
    %2693 = vmatpush1.msra.mxu0 0.0
    %2694 = vmatprep.subr.mxu0 0.0
    %2695 = vmatpush1.msra.mxu0 0.0
    %2696 = vmatprep.subr.mxu0 0.0
    %2697 = vmatpush1.msra.mxu0 0.0
    %2698 = vmatprep.subr.mxu0 0.0
    %2699 = vmatpush1.msra.mxu0 0.0
    %2700 = vmatprep.subr.mxu0 0.0
    %2701 = vmatpush1.msra.mxu0 0.0
    %2702 = vmatprep.subr.mxu0 0.0
    %2703 = vmatpush1.msra.mxu0 0.0
    %2704 = vmatprep.subr.mxu0 0.0
    %2705 = vmatpush1.msra.mxu0 0.0
    %2706 = vmatprep.subr.mxu0 0.0
    %2707 = vmatpush1.msra.mxu0 0.0
    %2708 = vmatprep.subr.mxu0 0.0
    %2709 = vmatpush1.msra.mxu0 0.0
    %2710 = vmatprep.subr.mxu0 0.0
    %2711 = vmatpush1.msra.mxu0 0.0
    %2712 = vmatprep.subr.mxu0 0.0
    %2713 = vmatpush1.msra.mxu0 0.0
    %2714 = vmatprep.subr.mxu0 0.0
    %2715 = vmatpush1.msra.mxu0 0.0
    %2716 = vmatprep.subr.mxu0 0.0
    %2717 = vmatpush1.msra.mxu0 0.0
    %2718 = vmatprep.subr.mxu0 0.0
    %2719 = vmatpush1.msra.mxu0 0.0
    %2720 = vmatprep.subr.mxu0 0.0
    %2721 = vmatpush1.msra.mxu0 0.0
    %2722 = vmatprep.subr.mxu0 0.0
    %2723 = vmatpush1.msra.mxu0 0.0
    %2724 = vmatprep.subr.mxu0 0.0
    %2725 = vmatpush1.msra.mxu0 0.0
    %2726 = vmatprep.subr.mxu0 0.0
    %2727 = vmatpush1.msra.mxu0 0.0
    %2728 = vmatprep.subr.mxu0 0.0
    %2729 = vmatpush1.msra.mxu0 0.0
    %2730 = vmatprep.subr.mxu0 0.0
    %2731 = vmatpush1.msra.mxu0 0.0
    %2732 = vmatprep.subr.mxu0 0.0
    %2733 = vmatpush1.msra.mxu0 0.0
    %2734 = vmatprep.subr.mxu0 0.0
    %2735 = vmatpush1.msra.mxu0 0.0
    %2736 = vmatprep.subr.mxu0 0.0
    %2737 = vmatpush1.msra.mxu0 0.0
    %2738 = vmatprep.mubr.f32.mxu0 0.0
    %2739 = vmatmul.mubr.f32.gmra.mrb[0].mxu0 %v2672
    %v2740 = vpop.f32.mrb[0].mxu0
    %v2741 = vadd.f32 0.0, %v2740
    %v2742 = vpop.f32.mrb[0].mxu0
    %2743 = vdwg.mxu0
    %v2744 = vadd.f32 %v2120, %v2230
    %v2745 = vadd.f32 %v2121, %v2303
    %v2746 = vadd.f32 %v2122, %v2376
    %v2747 = vadd.f32 %v2123, %v2449
    %v2748 = vadd.f32 %v2124, %v2522
    %v2749 = vadd.f32 %v2125, %v2595
    %v2750 = vadd.f32 %v2126, %v2668
    %v2751 = vadd.f32 %v2127, %v2741
    %v2752 = vrcp.pop %v2152
    %v2753 = vrcp.pop %v2153
    %v2754 = vrcp.pop %v2154
    %v2755 = vrcp.pop %v2155
    %v2756 = vrcp.pop %v2156
    %v2757 = vrcp.pop %v2157
    %v2758 = vrcp.pop %v2158
    %v2759 = vrcp.pop %v2159
    %v2760 = vmul.f32 %v2744, %v2752
    %v2761 = vmul.f32 %v2745, %v2753
    %v2762 = vmul.f32 %v2746, %v2754
    %v2763 = vmul.f32 %v2747, %v2755
    %v2764 = vmul.f32 %v2748, %v2756
    %v2765 = vmul.f32 %v2749, %v2757
    %v2766 = vmul.f32 %v2750, %v2758
    %v2767 = vmul.f32 %v2751, %v2759
    %v2768 = vcombine.low %v2760, %v2762
    %v2769 = vcombine.high %v2760, %v2762
    %v2771 = vunpack.c.l.s4 1983009808
    %v2772 = vunpack.c.0.s8 %v2771
    %v2773 = vlaneseq
    %v2774 = vshrl.u32 %v2773, 7
    %v2775 = vsub.s32 %v2772, %v2774
    %v2776 = vrot.slane %v2768, %v2775
    %v2778 = vunpack.c.l.s4 1983009808
    %v2779 = vunpack.c.0.s8 %v2778
    %v2780 = vlaneseq
    %v2781 = vshrl.u32 %v2780, 7
    %v2782 = vsub.s32 %v2779, %v2781
    %v2783 = vrot.slane %v2769, %v2782
    %v2784 = vcombine.low %v2761, %v2763
    %v2785 = vcombine.high %v2761, %v2763
    %v2787 = vunpack.c.l.s4 1983009808
    %v2788 = vunpack.c.0.s8 %v2787
    %v2789 = vlaneseq
    %v2790 = vshrl.u32 %v2789, 7
    %v2791 = vsub.s32 %v2788, %v2790
    %v2792 = vrot.slane %v2784, %v2791
    %v2794 = vunpack.c.l.s4 1983009808
    %v2795 = vunpack.c.0.s8 %v2794
    %v2796 = vlaneseq
    %v2797 = vshrl.u32 %v2796, 7
    %v2798 = vsub.s32 %v2795, %v2797
    %v2799 = vrot.slane %v2785, %v2798
    %v2800 = vcombine.low %v2776, %v2792
    %v2801 = vcombine.high %v2776, %v2792
    %v2803 = vunpack.c.l.s4 1934713408
    %v2804 = vunpack.c.0.s8 %v2803
    %v2805 = vlaneseq
    %v2806 = vshrl.u32 %v2805, 7
    %v2807 = vsub.s32 %v2804, %v2806
    %v2808 = vrot.slane %v2800, %v2807
    %v2810 = vunpack.c.l.s4 1934713408
    %v2811 = vunpack.c.0.s8 %v2810
    %v2812 = vlaneseq
    %v2813 = vshrl.u32 %v2812, 7
    %v2814 = vsub.s32 %v2811, %v2813
    %v2815 = vrot.slane %v2801, %v2814
    %v2816 = vcombine.low %v2783, %v2799
    %v2817 = vcombine.high %v2783, %v2799
    %v2819 = vunpack.c.l.s4 1934713408
    %v2820 = vunpack.c.0.s8 %v2819
    %v2821 = vlaneseq
    %v2822 = vshrl.u32 %v2821, 7
    %v2823 = vsub.s32 %v2820, %v2822
    %v2824 = vrot.slane %v2816, %v2823
    %v2826 = vunpack.c.l.s4 1934713408
    %v2827 = vunpack.c.0.s8 %v2826
    %v2828 = vlaneseq
    %v2829 = vshrl.u32 %v2828, 7
    %v2830 = vsub.s32 %v2827, %v2829
    %v2831 = vrot.slane %v2817, %v2830
    %v2832 = vcombine.high %v2808, 0.0
    %v2833 = vcombine.high %v2815, 0.0
    %v2834 = vcombine.high %v2824, 0.0
    %v2835 = vcombine.high %v2831, 0.0
    %v2836 = vcombine.low %v2764, %v2766
    %v2837 = vcombine.high %v2764, %v2766
    %v2839 = vunpack.c.l.s4 1983009808
    %v2840 = vunpack.c.0.s8 %v2839
    %v2841 = vlaneseq
    %v2842 = vshrl.u32 %v2841, 7
    %v2843 = vsub.s32 %v2840, %v2842
    %v2844 = vrot.slane %v2836, %v2843
    %v2846 = vunpack.c.l.s4 1983009808
    %v2847 = vunpack.c.0.s8 %v2846
    %v2848 = vlaneseq
    %v2849 = vshrl.u32 %v2848, 7
    %v2850 = vsub.s32 %v2847, %v2849
    %v2851 = vrot.slane %v2837, %v2850
    %v2852 = vcombine.low %v2765, %v2767
    %v2853 = vcombine.high %v2765, %v2767
    %v2855 = vunpack.c.l.s4 1983009808
    %v2856 = vunpack.c.0.s8 %v2855
    %v2857 = vlaneseq
    %v2858 = vshrl.u32 %v2857, 7
    %v2859 = vsub.s32 %v2856, %v2858
    %v2860 = vrot.slane %v2852, %v2859
    %v2862 = vunpack.c.l.s4 1983009808
    %v2863 = vunpack.c.0.s8 %v2862
    %v2864 = vlaneseq
    %v2865 = vshrl.u32 %v2864, 7
    %v2866 = vsub.s32 %v2863, %v2865
    %v2867 = vrot.slane %v2853, %v2866
    %v2868 = vcombine.low %v2844, %v2860
    %v2869 = vcombine.high %v2844, %v2860
    %v2871 = vunpack.c.l.s4 1934713408
    %v2872 = vunpack.c.0.s8 %v2871
    %v2873 = vlaneseq
    %v2874 = vshrl.u32 %v2873, 7
    %v2875 = vsub.s32 %v2872, %v2874
    %v2876 = vrot.slane %v2868, %v2875
    %v2878 = vunpack.c.l.s4 1934713408
    %v2879 = vunpack.c.0.s8 %v2878
    %v2880 = vlaneseq
    %v2881 = vshrl.u32 %v2880, 7
    %v2882 = vsub.s32 %v2879, %v2881
    %v2883 = vrot.slane %v2869, %v2882
    %v2884 = vcombine.low %v2851, %v2867
    %v2885 = vcombine.high %v2851, %v2867
    %v2887 = vunpack.c.l.s4 1934713408
    %v2888 = vunpack.c.0.s8 %v2887
    %v2889 = vlaneseq
    %v2890 = vshrl.u32 %v2889, 7
    %v2891 = vsub.s32 %v2888, %v2890
    %v2892 = vrot.slane %v2884, %v2891
    %v2894 = vunpack.c.l.s4 1934713408
    %v2895 = vunpack.c.0.s8 %v2894
    %v2896 = vlaneseq
    %v2897 = vshrl.u32 %v2896, 7
    %v2898 = vsub.s32 %v2895, %v2897
    %v2899 = vrot.slane %v2885, %v2898
    %v2900 = vcombine.high %v2876, 0.0
    %v2901 = vcombine.high %v2883, 0.0
    %v2902 = vcombine.high %v2892, 0.0
    %v2903 = vcombine.high %v2899, 0.0
    %v2904 = vcombine.low %v2808, %v2815
    %v2906 = vunpack.c.l.s4 1983009808
    %v2907 = vunpack.c.0.s8 %v2906
    %v2908 = vlaneseq
    %v2909 = vshrl.u32 %v2908, 7
    %v2910 = vsub.s32 %v2907, %v2909
    %v2911 = vrot.slane %v2904, %v2910
    %v2912 = vcombine.low %v2832, %v2833
    %v2914 = vunpack.c.l.s4 1983009808
    %v2915 = vunpack.c.0.s8 %v2914
    %v2916 = vlaneseq
    %v2917 = vshrl.u32 %v2916, 7
    %v2918 = vsub.s32 %v2915, %v2917
    %v2919 = vrot.slane %v2912, %v2918
    %v2920 = vcombine.low %v2824, %v2831
    %v2922 = vunpack.c.l.s4 1983009808
    %v2923 = vunpack.c.0.s8 %v2922
    %v2924 = vlaneseq
    %v2925 = vshrl.u32 %v2924, 7
    %v2926 = vsub.s32 %v2923, %v2925
    %v2927 = vrot.slane %v2920, %v2926
    %v2928 = vcombine.low %v2834, %v2835
    %v2930 = vunpack.c.l.s4 1983009808
    %v2931 = vunpack.c.0.s8 %v2930
    %v2932 = vlaneseq
    %v2933 = vshrl.u32 %v2932, 7
    %v2934 = vsub.s32 %v2931, %v2933
    %v2935 = vrot.slane %v2928, %v2934
    %v2936 = vcombine.low %v2911, %v2919
    %v2937 = vcombine.high %v2911, %v2919
    %v2939 = vunpack.c.l.s4 1934713408
    %v2940 = vunpack.c.0.s8 %v2939
    %v2941 = vlaneseq
    %v2942 = vshrl.u32 %v2941, 7
    %v2943 = vsub.s32 %v2940, %v2942
    %v2944 = vrot.slane %v2936, %v2943
    %v2946 = vunpack.c.l.s4 1934713408
    %v2947 = vunpack.c.0.s8 %v2946
    %v2948 = vlaneseq
    %v2949 = vshrl.u32 %v2948, 7
    %v2950 = vsub.s32 %v2947, %v2949
    %v2951 = vrot.slane %v2937, %v2950
    %v2952 = vcombine.low %v2927, %v2935
    %v2953 = vcombine.high %v2927, %v2935
    %v2955 = vunpack.c.l.s4 1934713408
    %v2956 = vunpack.c.0.s8 %v2955
    %v2957 = vlaneseq
    %v2958 = vshrl.u32 %v2957, 7
    %v2959 = vsub.s32 %v2956, %v2958
    %v2960 = vrot.slane %v2952, %v2959
    %v2962 = vunpack.c.l.s4 1934713408
    %v2963 = vunpack.c.0.s8 %v2962
    %v2964 = vlaneseq
    %v2965 = vshrl.u32 %v2964, 7
    %v2966 = vsub.s32 %v2963, %v2965
    %v2967 = vrot.slane %v2953, %v2966
    %v2968 = vcombine.low %v2944, %v2960
    %v2969 = vcombine.high %v2944, %v2960
    %v2970 = vcombine.low %v2951, %v2967
    %v2971 = vcombine.high %v2951, %v2967
    %v2972 = vcombine.low %v2876, %v2883
    %v2974 = vunpack.c.l.s4 1983009808
    %v2975 = vunpack.c.0.s8 %v2974
    %v2976 = vlaneseq
    %v2977 = vshrl.u32 %v2976, 7
    %v2978 = vsub.s32 %v2975, %v2977
    %v2979 = vrot.slane %v2972, %v2978
    %v2980 = vcombine.low %v2900, %v2901
    %v2982 = vunpack.c.l.s4 1983009808
    %v2983 = vunpack.c.0.s8 %v2982
    %v2984 = vlaneseq
    %v2985 = vshrl.u32 %v2984, 7
    %v2986 = vsub.s32 %v2983, %v2985
    %v2987 = vrot.slane %v2980, %v2986
    %v2988 = vcombine.low %v2892, %v2899
    %v2990 = vunpack.c.l.s4 1983009808
    %v2991 = vunpack.c.0.s8 %v2990
    %v2992 = vlaneseq
    %v2993 = vshrl.u32 %v2992, 7
    %v2994 = vsub.s32 %v2991, %v2993
    %v2995 = vrot.slane %v2988, %v2994
    %v2996 = vcombine.low %v2902, %v2903
    %v2998 = vunpack.c.l.s4 1983009808
    %v2999 = vunpack.c.0.s8 %v2998
    %v3000 = vlaneseq
    %v3001 = vshrl.u32 %v3000, 7
    %v3002 = vsub.s32 %v2999, %v3001
    %v3003 = vrot.slane %v2996, %v3002
    %v3004 = vcombine.low %v2979, %v2987
    %v3005 = vcombine.high %v2979, %v2987
    %v3007 = vunpack.c.l.s4 1934713408
    %v3008 = vunpack.c.0.s8 %v3007
    %v3009 = vlaneseq
    %v3010 = vshrl.u32 %v3009, 7
    %v3011 = vsub.s32 %v3008, %v3010
    %v3012 = vrot.slane %v3004, %v3011
    %v3014 = vunpack.c.l.s4 1934713408
    %v3015 = vunpack.c.0.s8 %v3014
    %v3016 = vlaneseq
    %v3017 = vshrl.u32 %v3016, 7
    %v3018 = vsub.s32 %v3015, %v3017
    %v3019 = vrot.slane %v3005, %v3018
    %v3020 = vcombine.low %v2995, %v3003
    %v3021 = vcombine.high %v2995, %v3003
    %v3023 = vunpack.c.l.s4 1934713408
    %v3024 = vunpack.c.0.s8 %v3023
    %v3025 = vlaneseq
    %v3026 = vshrl.u32 %v3025, 7
    %v3027 = vsub.s32 %v3024, %v3026
    %v3028 = vrot.slane %v3020, %v3027
    %v3030 = vunpack.c.l.s4 1934713408
    %v3031 = vunpack.c.0.s8 %v3030
    %v3032 = vlaneseq
    %v3033 = vshrl.u32 %v3032, 7
    %v3034 = vsub.s32 %v3031, %v3033
    %v3035 = vrot.slane %v3021, %v3034
    %v3036 = vcombine.low %v3012, %v3028
    %v3037 = vcombine.high %v3012, %v3028
    %v3038 = vcombine.low %v3019, %v3035
    %v3039 = vcombine.high %v3019, %v3035
    %3042 = vrot.lane.b32.xlu0 %v2969, 16
    %v3043 = vpop.permute.xlu0 %3042
    %3044 = vrot.lane.b32.xlu0 %v3037, 16
    %v3045 = vpop.permute.xlu0 %3044
    %3050 = vrot.lane.b32.xlu0 %v2970, 32
    %v3051 = vpop.permute.xlu0 %3050
    %3052 = vrot.lane.b32.xlu0 %v3038, 32
    %v3053 = vpop.permute.xlu0 %3052
    %3058 = vrot.lane.b32.xlu0 %v2971, 48
    %v3059 = vpop.permute.xlu0 %3058
    %3060 = vrot.lane.b32.xlu0 %v3039, 48
    %v3061 = vpop.permute.xlu0 %3060
    %v3064 = vsel %vm1424, %v2968, %v3043
    %v3065 = vsel %vm1424, %v3036, %v3045
    %v3066 = vsel %vm48, %v3064, %v3051
    %v3067 = vsel %vm48, %v3065, %v3053
    %vm3068 = vcmask 392192
    %v3069 = vsel %vm3068, %v3066, %v3059
    %v3070 = vsel %vm3068, %v3067, %v3061
    %v3071 = vld [vmem:[%s5] sm:$0xff]
    %v3072 = vld [vmem:[%s5 + $0x8] sm:$0xff]
    %v3073 = vld [vmem:[%s5 + $0x10] sm:$0xff]
    %v3074 = vld [vmem:[%s5 + $0x18] sm:$0xff]
    %v3075 = vld [vmem:[%s5 + $0x20] sm:$0xff]
    %v3076 = vld [vmem:[%s5 + $0x28] sm:$0xff]
    %v3077 = vld [vmem:[%s5 + $0x30] sm:$0xff]
    %v3078 = vld [vmem:[%s5 + $0x38] sm:$0xff]
    %vm3079 = vcmask 523264
    %v3081 = vsel %vm3079, %v3069, 0
    %v3084 = vsel %vm3079, %v3070, 0
    %3086 = vmatprep.subr.mxu0 0.0
    %3087 = vmatpush1.msra.mxu0 %v3071
    %3088 = vmatprep.subr.mxu0 0.0
    %3089 = vmatpush1.msra.mxu0 %v3072
    %3090 = vmatprep.subr.mxu0 0.0
    %3091 = vmatpush1.msra.mxu0 %v3073
    %3092 = vmatprep.subr.mxu0 0.0
    %3093 = vmatpush1.msra.mxu0 %v3074
    %3094 = vmatprep.subr.mxu0 0.0
    %3095 = vmatpush1.msra.mxu0 %v3075
    %3096 = vmatprep.subr.mxu0 0.0
    %3097 = vmatpush1.msra.mxu0 %v3076
    %3098 = vmatprep.subr.mxu0 0.0
    %3099 = vmatpush1.msra.mxu0 %v3077
    %3100 = vmatprep.subr.mxu0 0.0
    %3101 = vmatpush1.msra.mxu0 %v3078
    %3102 = vmatprep.subr.mxu0 0.0
    %3103 = vmatpush1.msra.mxu0 0.0
    %3104 = vmatprep.subr.mxu0 0.0
    %3105 = vmatpush1.msra.mxu0 0.0
    %3106 = vmatprep.subr.mxu0 0.0
    %3107 = vmatpush1.msra.mxu0 0.0
    %3108 = vmatprep.subr.mxu0 0.0
    %3109 = vmatpush1.msra.mxu0 0.0
    %3110 = vmatprep.subr.mxu0 0.0
    %3111 = vmatpush1.msra.mxu0 0.0
    %3112 = vmatprep.subr.mxu0 0.0
    %3113 = vmatpush1.msra.mxu0 0.0
    %3114 = vmatprep.subr.mxu0 0.0
    %3115 = vmatpush1.msra.mxu0 0.0
    %3116 = vmatprep.subr.mxu0 0.0
    %3117 = vmatpush1.msra.mxu0 0.0
    %3118 = vmatprep.subr.mxu0 0.0
    %3119 = vmatpush1.msra.mxu0 0.0
    %3120 = vmatprep.subr.mxu0 0.0
    %3121 = vmatpush1.msra.mxu0 0.0
    %3122 = vmatprep.subr.mxu0 0.0
    %3123 = vmatpush1.msra.mxu0 0.0
    %3124 = vmatprep.subr.mxu0 0.0
    %3125 = vmatpush1.msra.mxu0 0.0
    %3126 = vmatprep.subr.mxu0 0.0
    %3127 = vmatpush1.msra.mxu0 0.0
    %3128 = vmatprep.subr.mxu0 0.0
    %3129 = vmatpush1.msra.mxu0 0.0
    %3130 = vmatprep.subr.mxu0 0.0
    %3131 = vmatpush1.msra.mxu0 0.0
    %3132 = vmatprep.subr.mxu0 0.0
    %3133 = vmatpush1.msra.mxu0 0.0
    %3134 = vmatprep.subr.mxu0 0.0
    %3135 = vmatpush1.msra.mxu0 0.0
    %3136 = vmatprep.subr.mxu0 0.0
    %3137 = vmatpush1.msra.mxu0 0.0
    %3138 = vmatprep.subr.mxu0 0.0
    %3139 = vmatpush1.msra.mxu0 0.0
    %3140 = vmatprep.subr.mxu0 0.0
    %3141 = vmatpush1.msra.mxu0 0.0
    %3142 = vmatprep.subr.mxu0 0.0
    %3143 = vmatpush1.msra.mxu0 0.0
    %3144 = vmatprep.subr.mxu0 0.0
    %3145 = vmatpush1.msra.mxu0 0.0
    %3146 = vmatprep.subr.mxu0 0.0
    %3147 = vmatpush1.msra.mxu0 0.0
    %3148 = vmatprep.subr.mxu0 0.0
    %3149 = vmatpush1.msra.mxu0 0.0
    %3150 = vmatprep.mubr.f32.mxu0 0.0
    %3151 = vmatmul.mubr.f32.gmra.mrb[0].mxu0 %v3081
    %v3152 = vpop.f32.mrb[0].mxu0
    %v3153 = vadd.f32 0.0, %v3152
    %v3154 = vpop.f32.mrb[0].mxu0
    %3155 = vmatprep.mubr.f32.mxu0 0.0
    %3156 = vmatmul.mubr.f32.gmra.mrb[0].mxu0 %v3084
    %v3157 = vpop.f32.mrb[0].mxu0
    %v3158 = vadd.f32 0.0, %v3157
    %v3159 = vpop.f32.mrb[0].mxu0
    %3160 = vdwg.mxu0
    %3161 = vst.msk [vmem:[#allocation5] sm:$0xff] %vm48, %v3153
    %3162 = vst.msk [vmem:[#allocation5 + $0x8] sm:$0xff] %vm48, %v3158
    // Predicated region
    $region38: #{tpu_custom_call.1} parent=1 // pred_check
      _
    $region39: #{tpu_custom_call.1} parent=1 // pred_check_branch
      %3164 = sbr.rel (0) target = $region41
    $region40: #{tpu_custom_call.1} parent=1 // pred_region
      %s3166 = ssub.s32 256, 256
      %3167 = vsyncadd [#allocation4], %s3166
      %s3168 = sshll.u32 [#allocation5], 4
      %s3169 = int_to_ptr.vmem [resolvable:$true] %s3168
      %3174 = dma.vmem_to_hbm [thread:$0]  %s3169, 256, %s8, [#allocation4], 128, 128, 8
    $region41: #{tpu_custom_call.1} parent=1 // pred_fallthru
      _
    // Predicated region
    $region42: #{tpu_custom_call.1} parent=1 // pred_check
      _
    $region43: #{tpu_custom_call.1} parent=1 // pred_check_branch
      %3176 = sbr.rel (0) target = $region45
    $region44: #{tpu_custom_call.1} parent=1 // pred_region
      %3177 = dma.done [#allocation4], 256
    $region45: #{tpu_custom_call.1} parent=1 // pred_fallthru
      _
    %3178 = vsyncpa [#allocation3], 1
    %3179 = vsyncpa [#allocation4], 1

</llo_original>
